<compile_context>
chip_gen: v7x
topology: tpu7x:2x2x1
jax: 0.10.0
libtpu: 0.0.40
codegen_flags: <defaults>
</compile_context>

<pallas_src>
import functools

import jax
import jax.numpy as jnp
from jax.experimental import pallas as pl
from jax.experimental.pallas import tpu as pltpu

EPS = 1e-5


def _round_up(x, m):
    return ((x + m - 1) // m) * m


def _pick_th(ho, wo, target_rows=512):
    """Largest divisor of `ho` such that th*wo <= ~512 rows per grid step."""
    best = 1
    for th in range(1, ho + 1):
        if ho % th == 0 and th * wo <= max(target_rows, wo):
            best = th
    return best


# ----------------------------- Pallas kernels -----------------------------

def _conv_kernel(src_ref, w_ref, b_ref, y_ref, st_ref, *, taps, th, wo):
    """Direct conv on one output row-tile: sum of per-tap MXU matmuls over
    shifted windows, bias add, and fused per-channel sum / sum-of-squares
    partials (consumed later for BatchNorm)."""
    r0 = pl.program_id(1) * th
    cin = src_ref.shape[-1]
    cout = y_ref.shape[-1]
    acc = jnp.zeros((th * wo, cout), jnp.float32)
    for t, (p, dr, dc) in enumerate(taps):
        win = src_ref[p, pl.ds(r0 + dr, th), pl.ds(dc, wo), :]
        acc = acc + jnp.dot(win.reshape(th * wo, cin), w_ref[t],
                            preferred_element_type=jnp.float32)
    y = acc + b_ref[...]
    st_ref[0:1, :] = jnp.sum(y, axis=0, keepdims=True)
    st_ref[1:2, :] = jnp.sum(y * y, axis=0, keepdims=True)
    y_ref[...] = y.reshape(th, wo, cout).astype(y_ref.dtype)


def _bn_kernel(y_ref, s_ref, t_ref, o_ref, *, relu):
    y = y_ref[...].astype(jnp.float32) * s_ref[...] + t_ref[...]
    if relu:
        y = jnp.maximum(y, 0.0)
    o_ref[...] = y.astype(o_ref.dtype)


def _bn_add_kernel(y_ref, s_ref, t_ref, sc_ref, o_ref):
    """relu( relu(bn2(y)) + shortcut ) -- identity shortcut."""
    y = jnp.maximum(y_ref[...].astype(jnp.float32) * s_ref[...] + t_ref[...], 0.0)
    o_ref[...] = jnp.maximum(y + sc_ref[...].astype(jnp.float32), 0.0)


def _bn_add_bnsc_kernel(y_ref, s_ref, t_ref, sc_ref, ss_ref, ts_ref, o_ref):
    """relu( relu(bn2(y)) + bn_sc(shortcut_conv) ) -- conv shortcut, BN fused."""
    y = jnp.maximum(y_ref[...].astype(jnp.float32) * s_ref[...] + t_ref[...], 0.0)
    sc = sc_ref[...].astype(jnp.float32) * ss_ref[...] + ts_ref[...]
    o_ref[...] = jnp.maximum(y + sc, 0.0)


# ------------------------------ wrappers -----------------------------------

def conv_bn_stats(src, p, w, b, taps, ho, wo):
    """src: [N*P, Hq, Wq, Cip] bf16 (P phases per image), w: [T, Cip, Cop] bf16,
    b: [1, Cop] f32. Returns conv output [N, Ho, Wo, Cop] (bf16) plus per-tile
    stats partials [N, RB, 2, Cop] (f32: row0 = sum, row1 = sum of squares)."""
    nphw, hq, wq, cip = src.shape
    n = nphw // p
    t, _, cop = w.shape
    th = _pick_th(ho, wo)
    rb = ho // th
    kernel = functools.partial(_conv_kernel, taps=tuple(taps), th=th, wo=wo)
    y, st = pl.pallas_call(
        kernel,
        out_shape=(jax.ShapeDtypeStruct((n, ho, wo, cop), jnp.bfloat16),
                   jax.ShapeDtypeStruct((n, rb, 2, cop), jnp.float32)),
        grid=(n, rb),
        in_specs=[pl.BlockSpec((p, hq, wq, cip), lambda i, r: (i, 0, 0, 0)),
                  pl.BlockSpec((t, cip, cop), lambda i, r: (0, 0, 0)),
                  pl.BlockSpec((1, cop), lambda i, r: (0, 0))],
        out_specs=(pl.BlockSpec((None, th, wo, cop), lambda i, r: (i, r, 0, 0)),
                   pl.BlockSpec((None, None, 2, cop), lambda i, r: (i, r, 0, 0))),
        compiler_params=pltpu.CompilerParams(
            dimension_semantics=("parallel", "parallel")),
    )(src, w, b)
    return y, st


def bn_apply(y, scale, shift, relu, out_dtype=jnp.bfloat16):
    n, ho, wo, cp = y.shape
    th = _pick_th(ho, wo)
    rb = ho // th
    alias = {0: 0} if jnp.dtype(out_dtype) == y.dtype else {}
    return pl.pallas_call(
        functools.partial(_bn_kernel, relu=relu),
        out_shape=jax.ShapeDtypeStruct((n, ho, wo, cp), out_dtype),
        grid=(n, rb),
        in_specs=[pl.BlockSpec((None, th, wo, cp), lambda i, r: (i, r, 0, 0)),
                  pl.BlockSpec((1, 1, cp), lambda i, r: (0, 0, 0)),
                  pl.BlockSpec((1, 1, cp), lambda i, r: (0, 0, 0))],
        out_specs=pl.BlockSpec((None, th, wo, cp), lambda i, r: (i, r, 0, 0)),
        input_output_aliases=alias,
        compiler_params=pltpu.CompilerParams(
            dimension_semantics=("parallel", "parallel")),
    )(y, scale, shift)


def bn_add(y, scale, shift, sc, sc_scale=None, sc_shift=None):
    """Fused epilogue: relu( relu(bn2(y)) + [bn_sc(]shortcut[)] )."""
    n, ho, wo, cp = y.shape
    th = _pick_th(ho, wo)
    rb = ho // th
    tile = pl.BlockSpec((None, th, wo, cp), lambda i, r: (i, r, 0, 0))
    vec = pl.BlockSpec((1, 1, cp), lambda i, r: (0, 0, 0))
    if sc_scale is None:
        kernel = _bn_add_kernel
        ins = (y, scale, shift, sc)
        specs = [tile, vec, vec, tile]
    else:
        kernel = _bn_add_bnsc_kernel
        ins = (y, scale, shift, sc, sc_scale, sc_shift)
        specs = [tile, vec, vec, tile, vec, vec]
    return pl.pallas_call(
        kernel,
        out_shape=jax.ShapeDtypeStruct((n, ho, wo, cp), jnp.float32),
        grid=(n, rb),
        in_specs=specs,
        out_specs=tile,
        compiler_params=pltpu.CompilerParams(
            dimension_semantics=("parallel", "parallel")),
    )(*ins)


# ------------------------------ JAX glue -----------------------------------

def _prep_weights(w_oihw, cip, cop):
    o, i, kh, kw = w_oihw.shape
    w = jnp.transpose(w_oihw, (2, 3, 1, 0)).reshape(kh * kw, i, o)
    w = jnp.pad(w, ((0, 0), (0, cip - i), (0, cop - o)))
    return w.astype(jnp.bfloat16)


def _prep_bias(b, cop):
    return jnp.pad(b.astype(jnp.float32), (0, cop - b.shape[0])).reshape(1, cop)


def _bn_scale_shift(st, count, gamma, beta, cp):
    sums = jnp.sum(st[:, :, 0, :], axis=(0, 1))
    sqs = jnp.sum(st[:, :, 1, :], axis=(0, 1))
    mean = sums / count
    var = jnp.maximum(sqs / count - mean * mean, 0.0)
    g = jnp.pad(gamma.astype(jnp.float32), (0, cp - gamma.shape[0]))
    b = jnp.pad(beta.astype(jnp.float32), (0, cp - beta.shape[0]))
    scale = g * jax.lax.rsqrt(var + EPS)
    shift = b - mean * scale
    return scale.reshape(1, 1, cp), shift.reshape(1, 1, cp)


def _stride1_src(x_c):
    """3x3 stride-1 pad-1: source is the spatially zero-padded image, taps are
    the 9 unit shifts. Returns (src [N, H+2, W+2, C], num_phases=1, taps)."""
    xp = jnp.pad(x_c, ((0, 0), (1, 1), (1, 1), (0, 0)))
    taps = [(0, ki, kj) for ki in range(3) for kj in range(3)]
    return xp, 1, taps


def _stride2_src(x_c, ho, wo):
    """3x3 stride-2 pad-1: split the padded input into 4 parity phases so the
    conv becomes 9 unit-stride shifted matmuls (bytes ~= input, no im2col)."""
    xp = jnp.pad(x_c, ((0, 0), (1, 1), (1, 1), (0, 0)))
    n, _, _, c = xp.shape
    phases = []
    for i in range(2):
        for j in range(2):
            ph = xp[:, i::2, j::2, :][:, :ho + 1, :wo + 1, :]
            ph = jnp.pad(ph, ((0, 0), (0, ho + 1 - ph.shape[1]),
                              (0, wo + 1 - ph.shape[2]), (0, 0)))
            phases.append(ph)
    src = jnp.stack(phases, axis=1).reshape(n * 4, ho + 1, wo + 1, c)
    taps = [((ki % 2) * 2 + (kj % 2), ki // 2, kj // 2)
            for ki in range(3) for kj in range(3)]
    return src, 4, taps


def resblock_forward(params, x_nchw, downsample):
    x = jnp.transpose(x_nchw, (0, 2, 3, 1))                 # NCHW -> NHWC
    n, h, w, cin = x.shape
    cout = params["conv1_w"].shape[0]
    cip = _round_up(cin, 128)                               # lane-dense channels
    cop = _round_up(cout, 128)
    x_c = jnp.pad(x, ((0, 0), (0, 0), (0, 0), (0, cip - cin))).astype(jnp.bfloat16)

    stride1 = 2 if downsample else 1
    ho = (h - 1) // stride1 + 1
    wo = (w - 1) // stride1 + 1
    count = float(n * ho * wo)

    # ---- conv1 -> bn1 -> relu ----
    if downsample:
        src1, p1, taps1 = _stride2_src(x_c, ho, wo)
    else:
        src1, p1, taps1 = _stride1_src(x_c)
    y1, st1 = conv_bn_stats(src1, p1, _prep_weights(params["conv1_w"], cip, cop),
                            _prep_bias(params["conv1_b"], cop), taps1, ho, wo)
    s1, t1 = _bn_scale_shift(st1, count, params["bn1_g"], params["bn1_b"], cop)
    a1 = bn_apply(y1, s1, t1, relu=True)                    # bf16, aliases y1

    # ---- conv2 (+ fused bn2 stats) ----
    src2, p2, taps2 = _stride1_src(a1)
    y2, st2 = conv_bn_stats(src2, p2, _prep_weights(params["conv2_w"], cop, cop),
                            _prep_bias(params["conv2_b"], cop), taps2, ho, wo)
    s2, t2 = _bn_scale_shift(st2, count, params["bn2_g"], params["bn2_b"], cop)

    # ---- shortcut + fused epilogue: relu(relu(bn2(y2)) + shortcut) ----
    if downsample:
        src_sc = x_c[:, ::2, ::2, :][:, :ho, :wo, :]        # 1x1 stride-2, pad 0
        y_sc, st_sc = conv_bn_stats(src_sc, 1,
                                    _prep_weights(params["sc_w"], cip, cop),
                                    _prep_bias(params["sc_b"], cop),
                                    [(0, 0, 0)], ho, wo)
        ss, ts = _bn_scale_shift(st_sc, count,
                                 params["sc_bn_g"], params["sc_bn_b"], cop)
        out = bn_add(y2, s2, t2, y_sc, ss, ts)              # shortcut BN fused
    else:
        out = bn_add(y2, s2, t2, x_c)                       # identity shortcut

    return jnp.transpose(out[..., :cout], (0, 3, 1, 2))     # NHWC -> NCHW, f32


def init_resblock_params(key, in_channels, out_channels, downsample):
    ks = jax.random.split(key, 12)
    p = {
        "conv1_w": 0.1 * jax.random.normal(ks[0], (out_channels, in_channels, 3, 3), jnp.float32),
        "conv1_b": 0.1 * jax.random.normal(ks[1], (out_channels,), jnp.float32),
        "conv2_w": 0.1 * jax.random.normal(ks[2], (out_channels, out_channels, 3, 3), jnp.float32),
        "conv2_b": 0.1 * jax.random.normal(ks[3], (out_channels,), jnp.float32),
        "bn1_g": 1.0 + 0.1 * jax.random.normal(ks[4], (out_channels,), jnp.float32),
        "bn1_b": 0.1 * jax.random.normal(ks[5], (out_channels,), jnp.float32),
        "bn2_g": 1.0 + 0.1 * jax.random.normal(ks[6], (out_channels,), jnp.float32),
        "bn2_b": 0.1 * jax.random.normal(ks[7], (out_channels,), jnp.float32),
    }
    if downsample:
        p["sc_w"] = 0.1 * jax.random.normal(ks[8], (out_channels, in_channels, 1, 1), jnp.float32)
        p["sc_b"] = 0.1 * jax.random.normal(ks[9], (out_channels,), jnp.float32)
        p["sc_bn_g"] = 1.0 + 0.1 * jax.random.normal(ks[10], (out_channels,), jnp.float32)
        p["sc_bn_b"] = 0.1 * jax.random.normal(ks[11], (out_channels,), jnp.float32)
    return p


# --------------------------- pure-JAX reference -----------------------------

def resblock_ref(params, x_nchw, downsample):
    def conv(x, w, b, stride, pad):
        y = jax.lax.conv_general_dilated(
            x, w, (stride, stride), [(pad, pad), (pad, pad)],
            dimension_numbers=("NCHW", "OIHW", "NCHW"))
        return y + b.reshape(1, -1, 1, 1)

    def bn(x, g, bt):
        mean = jnp.mean(x, axis=(0, 2, 3), keepdims=True)
        var = jnp.var(x, axis=(0, 2, 3), keepdims=True)   # biased, like BN train
        return (x - mean) / jnp.sqrt(var + EPS) * g.reshape(1, -1, 1, 1) + bt.reshape(1, -1, 1, 1)

    if downsample:
        sc = bn(conv(x_nchw, params["sc_w"], params["sc_b"], 2, 0),
                params["sc_bn_g"], params["sc_bn_b"])
        stride1 = 2
    else:
        sc = x_nchw
        stride1 = 1
    y = jax.nn.relu(bn(conv(x_nchw, params["conv1_w"], params["conv1_b"], stride1, 1),
                       params["bn1_g"], params["bn1_b"]))
    y = jax.nn.relu(bn(conv(y, params["conv2_w"], params["conv2_b"], 1, 1),
                       params["bn2_g"], params["bn2_b"]))
    return jax.nn.relu(y + sc)


if __name__ == "__main__":
    key = jax.random.PRNGKey(0)
    kx, kp = jax.random.split(key)

    N, Cin, H, W = 2, 4, 16, 16
    x = jax.random.normal(kx, (N, Cin, H, W), jnp.float32)

    fwd = jax.jit(resblock_forward, static_argnums=(2,))

    ok = True
    # downsample=True (conv shortcut), and downsample=False (identity shortcut)
    for downsample, cout in [(True, 8), (False, Cin)]:
        params = init_resblock_params(kp, Cin, cout, downsample)
        out = jax.block_until_ready(fwd(params, x, downsample))
        ref = resblock_ref(params, x, downsample)
        # tolerance accounts for bf16 matmul operands / bf16-stored activations
        good = (out.shape == ref.shape and
                bool(jnp.allclose(out, ref, atol=2e-2, rtol=2e-2)))
        ok = ok and good

    if ok:
        print("KERNEL_OK")
</pallas_src>

<mosaic_0001>
module attributes {stable_mosaic.version = 11 : i64} {
  func.func @_conv_kernel(%arg0: i32, %arg1: i32, %arg2: memref<4x9x9x128xbf16, #tpu.memory_space<vmem>>, %arg3: memref<9x128x128xbf16, #tpu.memory_space<vmem>>, %arg4: memref<1x128xf32, #tpu.memory_space<vmem>>, %arg5: memref<1x8x8x128xbf16, #tpu.memory_space<vmem>>, %arg6: memref<1x1x2x128xf32, #tpu.memory_space<vmem>>) attributes {dimension_semantics = [#tpu.dimension_semantics<parallel>, #tpu.dimension_semantics<parallel>], iteration_bounds = array<i64: 2, 1>, scalar_prefetch = 0 : i64, scratch_operands = 0 : i64, tpu.core_type = #tpu.core_type<tc>, window_params = [{transform_indices = @transform_0, window_bounds = array<i64: 4, 9, 9, 128>}, {pipeline_mode = #tpu.pipeline_mode<synchronous>, transform_indices = @transform_1, window_bounds = array<i64: 9, 128, 128>}, {pipeline_mode = #tpu.pipeline_mode<synchronous>, transform_indices = @transform_2, window_bounds = array<i64: 1, 128>}, {transform_indices = @transform_3, window_bounds = array<i64: 1, 8, 8, 128>}, {transform_indices = @transform_4, window_bounds = array<i64: 1, 1, 2, 128>}]} {
    %c8_i32 = arith.constant 8 : i32
    %0 = arith.muli %arg1, %c8_i32 : i32
    %cst = arith.constant 0.000000e+00 : f32
    %1 = vector.broadcast %cst : f32 to vector<64x128xf32>
    %c0_i32 = arith.constant 0 : i32
    %2 = arith.addi %0, %c0_i32 : i32
    %c0 = arith.constant 0 : index
    %3 = arith.index_cast %2 : i32 to index
    %c0_0 = arith.constant 0 : index
    %c0_1 = arith.constant 0 : index
    %4 = vector.load %arg2[%c0, %3, %c0_0, %c0_1] : memref<4x9x9x128xbf16, #tpu.memory_space<vmem>>, vector<1x8x8x128xbf16>
    %5 = vector.shape_cast %4 : vector<1x8x8x128xbf16> to vector<8x8x128xbf16>
    %6 = vector.shape_cast %5 : vector<8x8x128xbf16> to vector<64x128xbf16>
    %c0_2 = arith.constant 0 : index
    %c0_3 = arith.constant 0 : index
    %c0_4 = arith.constant 0 : index
    %7 = vector.load %arg3[%c0_2, %c0_3, %c0_4] : memref<9x128x128xbf16, #tpu.memory_space<vmem>>, vector<1x128x128xbf16>
    %8 = vector.shape_cast %7 : vector<1x128x128xbf16> to vector<128x128xbf16>
    %cst_5 = arith.constant dense<0.000000e+00> : vector<64x128xf32>
    %9 = tpu.matmul %6, %8, %cst_5 {dimension_numbers = #tpu.dot_dimension_numbers<[1], [0], [0], [1], [0, 0, 1, 1], [], []>} : vector<64x128xbf16>, vector<128x128xbf16>, vector<64x128xf32> -> vector<64x128xf32>
    %10 = arith.addf %1, %9 : vector<64x128xf32>
    %c0_i32_6 = arith.constant 0 : i32
    %11 = arith.addi %0, %c0_i32_6 : i32
    %c1 = arith.constant 1 : index
    %12 = arith.index_cast %11 : i32 to index
    %c0_7 = arith.constant 0 : index
    %c0_8 = arith.constant 0 : index
    %13 = vector.load %arg2[%c1, %12, %c0_7, %c0_8] : memref<4x9x9x128xbf16, #tpu.memory_space<vmem>>, vector<1x8x8x128xbf16>
    %14 = vector.shape_cast %13 : vector<1x8x8x128xbf16> to vector<8x8x128xbf16>
    %15 = vector.shape_cast %14 : vector<8x8x128xbf16> to vector<64x128xbf16>
    %c1_9 = arith.constant 1 : index
    %c0_10 = arith.constant 0 : index
    %c0_11 = arith.constant 0 : index
    %16 = vector.load %arg3[%c1_9, %c0_10, %c0_11] : memref<9x128x128xbf16, #tpu.memory_space<vmem>>, vector<1x128x128xbf16>
    %17 = vector.shape_cast %16 : vector<1x128x128xbf16> to vector<128x128xbf16>
    %cst_12 = arith.constant dense<0.000000e+00> : vector<64x128xf32>
    %18 = tpu.matmul %15, %17, %cst_12 {dimension_numbers = #tpu.dot_dimension_numbers<[1], [0], [0], [1], [0, 0, 1, 1], [], []>} : vector<64x128xbf16>, vector<128x128xbf16>, vector<64x128xf32> -> vector<64x128xf32>
    %19 = arith.addf %10, %18 : vector<64x128xf32>
    %c0_i32_13 = arith.constant 0 : i32
    %20 = arith.addi %0, %c0_i32_13 : i32
    %c0_14 = arith.constant 0 : index
    %21 = arith.index_cast %20 : i32 to index
    %c1_15 = arith.constant 1 : index
    %c0_16 = arith.constant 0 : index
    %22 = vector.load %arg2[%c0_14, %21, %c1_15, %c0_16] : memref<4x9x9x128xbf16, #tpu.memory_space<vmem>>, vector<1x8x8x128xbf16>
    %23 = vector.shape_cast %22 : vector<1x8x8x128xbf16> to vector<8x8x128xbf16>
    %24 = vector.shape_cast %23 : vector<8x8x128xbf16> to vector<64x128xbf16>
    %c2 = arith.constant 2 : index
    %c0_17 = arith.constant 0 : index
    %c0_18 = arith.constant 0 : index
    %25 = vector.load %arg3[%c2, %c0_17, %c0_18] : memref<9x128x128xbf16, #tpu.memory_space<vmem>>, vector<1x128x128xbf16>
    %26 = vector.shape_cast %25 : vector<1x128x128xbf16> to vector<128x128xbf16>
    %cst_19 = arith.constant dense<0.000000e+00> : vector<64x128xf32>
    %27 = tpu.matmul %24, %26, %cst_19 {dimension_numbers = #tpu.dot_dimension_numbers<[1], [0], [0], [1], [0, 0, 1, 1], [], []>} : vector<64x128xbf16>, vector<128x128xbf16>, vector<64x128xf32> -> vector<64x128xf32>
    %28 = arith.addf %19, %27 : vector<64x128xf32>
    %c0_i32_20 = arith.constant 0 : i32
    %29 = arith.addi %0, %c0_i32_20 : i32
    %c2_21 = arith.constant 2 : index
    %30 = arith.index_cast %29 : i32 to index
    %c0_22 = arith.constant 0 : index
    %c0_23 = arith.constant 0 : index
    %31 = vector.load %arg2[%c2_21, %30, %c0_22, %c0_23] : memref<4x9x9x128xbf16, #tpu.memory_space<vmem>>, vector<1x8x8x128xbf16>
    %32 = vector.shape_cast %31 : vector<1x8x8x128xbf16> to vector<8x8x128xbf16>
    %33 = vector.shape_cast %32 : vector<8x8x128xbf16> to vector<64x128xbf16>
    %c3 = arith.constant 3 : index
    %c0_24 = arith.constant 0 : index
    %c0_25 = arith.constant 0 : index
    %34 = vector.load %arg3[%c3, %c0_24, %c0_25] : memref<9x128x128xbf16, #tpu.memory_space<vmem>>, vector<1x128x128xbf16>
    %35 = vector.shape_cast %34 : vector<1x128x128xbf16> to vector<128x128xbf16>
    %cst_26 = arith.constant dense<0.000000e+00> : vector<64x128xf32>
    %36 = tpu.matmul %33, %35, %cst_26 {dimension_numbers = #tpu.dot_dimension_numbers<[1], [0], [0], [1], [0, 0, 1, 1], [], []>} : vector<64x128xbf16>, vector<128x128xbf16>, vector<64x128xf32> -> vector<64x128xf32>
    %37 = arith.addf %28, %36 : vector<64x128xf32>
    %c0_i32_27 = arith.constant 0 : i32
    %38 = arith.addi %0, %c0_i32_27 : i32
    %c3_28 = arith.constant 3 : index
    %39 = arith.index_cast %38 : i32 to index
    %c0_29 = arith.constant 0 : index
    %c0_30 = arith.constant 0 : index
    %40 = vector.load %arg2[%c3_28, %39, %c0_29, %c0_30] : memref<4x9x9x128xbf16, #tpu.memory_space<vmem>>, vector<1x8x8x128xbf16>
    %41 = vector.shape_cast %40 : vector<1x8x8x128xbf16> to vector<8x8x128xbf16>
    %42 = vector.shape_cast %41 : vector<8x8x128xbf16> to vector<64x128xbf16>
    %c4 = arith.constant 4 : index
    %c0_31 = arith.constant 0 : index
    %c0_32 = arith.constant 0 : index
    %43 = vector.load %arg3[%c4, %c0_31, %c0_32] : memref<9x128x128xbf16, #tpu.memory_space<vmem>>, vector<1x128x128xbf16>
    %44 = vector.shape_cast %43 : vector<1x128x128xbf16> to vector<128x128xbf16>
    %cst_33 = arith.constant dense<0.000000e+00> : vector<64x128xf32>
    %45 = tpu.matmul %42, %44, %cst_33 {dimension_numbers = #tpu.dot_dimension_numbers<[1], [0], [0], [1], [0, 0, 1, 1], [], []>} : vector<64x128xbf16>, vector<128x128xbf16>, vector<64x128xf32> -> vector<64x128xf32>
    %46 = arith.addf %37, %45 : vector<64x128xf32>
    %c0_i32_34 = arith.constant 0 : i32
    %47 = arith.addi %0, %c0_i32_34 : i32
    %c2_35 = arith.constant 2 : index
    %48 = arith.index_cast %47 : i32 to index
    %c1_36 = arith.constant 1 : index
    %c0_37 = arith.constant 0 : index
    %49 = vector.load %arg2[%c2_35, %48, %c1_36, %c0_37] : memref<4x9x9x128xbf16, #tpu.memory_space<vmem>>, vector<1x8x8x128xbf16>
    %50 = vector.shape_cast %49 : vector<1x8x8x128xbf16> to vector<8x8x128xbf16>
    %51 = vector.shape_cast %50 : vector<8x8x128xbf16> to vector<64x128xbf16>
    %c5 = arith.constant 5 : index
    %c0_38 = arith.constant 0 : index
    %c0_39 = arith.constant 0 : index
    %52 = vector.load %arg3[%c5, %c0_38, %c0_39] : memref<9x128x128xbf16, #tpu.memory_space<vmem>>, vector<1x128x128xbf16>
    %53 = vector.shape_cast %52 : vector<1x128x128xbf16> to vector<128x128xbf16>
    %cst_40 = arith.constant dense<0.000000e+00> : vector<64x128xf32>
    %54 = tpu.matmul %51, %53, %cst_40 {dimension_numbers = #tpu.dot_dimension_numbers<[1], [0], [0], [1], [0, 0, 1, 1], [], []>} : vector<64x128xbf16>, vector<128x128xbf16>, vector<64x128xf32> -> vector<64x128xf32>
    %55 = arith.addf %46, %54 : vector<64x128xf32>
    %c1_i32 = arith.constant 1 : i32
    %56 = arith.addi %0, %c1_i32 : i32
    %c0_41 = arith.constant 0 : index
    %57 = arith.index_cast %56 : i32 to index
    %c0_42 = arith.constant 0 : index
    %c0_43 = arith.constant 0 : index
    %58 = vector.load %arg2[%c0_41, %57, %c0_42, %c0_43] : memref<4x9x9x128xbf16, #tpu.memory_space<vmem>>, vector<1x8x8x128xbf16>
    %59 = vector.shape_cast %58 : vector<1x8x8x128xbf16> to vector<8x8x128xbf16>
    %60 = vector.shape_cast %59 : vector<8x8x128xbf16> to vector<64x128xbf16>
    %c6 = arith.constant 6 : index
    %c0_44 = arith.constant 0 : index
    %c0_45 = arith.constant 0 : index
    %61 = vector.load %arg3[%c6, %c0_44, %c0_45] : memref<9x128x128xbf16, #tpu.memory_space<vmem>>, vector<1x128x128xbf16>
    %62 = vector.shape_cast %61 : vector<1x128x128xbf16> to vector<128x128xbf16>
    %cst_46 = arith.constant dense<0.000000e+00> : vector<64x128xf32>
    %63 = tpu.matmul %60, %62, %cst_46 {dimension_numbers = #tpu.dot_dimension_numbers<[1], [0], [0], [1], [0, 0, 1, 1], [], []>} : vector<64x128xbf16>, vector<128x128xbf16>, vector<64x128xf32> -> vector<64x128xf32>
    %64 = arith.addf %55, %63 : vector<64x128xf32>
    %c1_i32_47 = arith.constant 1 : i32
    %65 = arith.addi %0, %c1_i32_47 : i32
    %c1_48 = arith.constant 1 : index
    %66 = arith.index_cast %65 : i32 to index
    %c0_49 = arith.constant 0 : index
    %c0_50 = arith.constant 0 : index
    %67 = vector.load %arg2[%c1_48, %66, %c0_49, %c0_50] : memref<4x9x9x128xbf16, #tpu.memory_space<vmem>>, vector<1x8x8x128xbf16>
    %68 = vector.shape_cast %67 : vector<1x8x8x128xbf16> to vector<8x8x128xbf16>
    %69 = vector.shape_cast %68 : vector<8x8x128xbf16> to vector<64x128xbf16>
    %c7 = arith.constant 7 : index
    %c0_51 = arith.constant 0 : index
    %c0_52 = arith.constant 0 : index
    %70 = vector.load %arg3[%c7, %c0_51, %c0_52] : memref<9x128x128xbf16, #tpu.memory_space<vmem>>, vector<1x128x128xbf16>
    %71 = vector.shape_cast %70 : vector<1x128x128xbf16> to vector<128x128xbf16>
    %cst_53 = arith.constant dense<0.000000e+00> : vector<64x128xf32>
    %72 = tpu.matmul %69, %71, %cst_53 {dimension_numbers = #tpu.dot_dimension_numbers<[1], [0], [0], [1], [0, 0, 1, 1], [], []>} : vector<64x128xbf16>, vector<128x128xbf16>, vector<64x128xf32> -> vector<64x128xf32>
    %73 = arith.addf %64, %72 : vector<64x128xf32>
    %c1_i32_54 = arith.constant 1 : i32
    %74 = arith.addi %0, %c1_i32_54 : i32
    %c0_55 = arith.constant 0 : index
    %75 = arith.index_cast %74 : i32 to index
    %c1_56 = arith.constant 1 : index
    %c0_57 = arith.constant 0 : index
    %76 = vector.load %arg2[%c0_55, %75, %c1_56, %c0_57] : memref<4x9x9x128xbf16, #tpu.memory_space<vmem>>, vector<1x8x8x128xbf16>
    %77 = vector.shape_cast %76 : vector<1x8x8x128xbf16> to vector<8x8x128xbf16>
    %78 = vector.shape_cast %77 : vector<8x8x128xbf16> to vector<64x128xbf16>
    %c8 = arith.constant 8 : index
    %c0_58 = arith.constant 0 : index
    %c0_59 = arith.constant 0 : index
    %79 = vector.load %arg3[%c8, %c0_58, %c0_59] : memref<9x128x128xbf16, #tpu.memory_space<vmem>>, vector<1x128x128xbf16>
    %80 = vector.shape_cast %79 : vector<1x128x128xbf16> to vector<128x128xbf16>
    %cst_60 = arith.constant dense<0.000000e+00> : vector<64x128xf32>
    %81 = tpu.matmul %78, %80, %cst_60 {dimension_numbers = #tpu.dot_dimension_numbers<[1], [0], [0], [1], [0, 0, 1, 1], [], []>} : vector<64x128xbf16>, vector<128x128xbf16>, vector<64x128xf32> -> vector<64x128xf32>
    %82 = arith.addf %73, %81 : vector<64x128xf32>
    %c0_61 = arith.constant 0 : index
    %c0_62 = arith.constant 0 : index
    %83 = vector.load %arg4[%c0_61, %c0_62] : memref<1x128xf32, #tpu.memory_space<vmem>>, vector<1x128xf32>
    %84 = vector.broadcast %83 : vector<1x128xf32> to vector<64x128xf32>
    %85 = arith.addf %82, %84 : vector<64x128xf32>
    %cst_63 = arith.constant dense<0.000000e+00> : vector<128xf32>
    %86 = vector.multi_reduction <add>, %85, %cst_63 [0] : vector<64x128xf32> to vector<128xf32>
    %87 = vector.shape_cast %86 : vector<128xf32> to vector<1x128xf32>
    %c0_64 = arith.constant 0 : index
    %c0_65 = arith.constant 0 : index
    %c0_66 = arith.constant 0 : index
    %c0_67 = arith.constant 0 : index
    %88 = vector.load %arg6[%c0_64, %c0_65, %c0_66, %c0_67] : memref<1x1x2x128xf32, #tpu.memory_space<vmem>>, vector<1x1x1x128xf32>
    %89 = vector.shape_cast %88 : vector<1x1x1x128xf32> to vector<1x128xf32>
    %90 = vector.shape_cast %87 : vector<1x128xf32> to vector<1x1x1x128xf32>
    tpu.vector_store %arg6[%c0_64, %c0_65, %c0_66, %c0_67], %90 {strides = array<i32>} : memref<1x1x2x128xf32, #tpu.memory_space<vmem>>, vector<1x1x1x128xf32>,
    %91 = arith.mulf %85, %85 : vector<64x128xf32>
    %cst_68 = arith.constant dense<0.000000e+00> : vector<128xf32>
    %92 = vector.multi_reduction <add>, %91, %cst_68 [0] : vector<64x128xf32> to vector<128xf32>
    %93 = vector.shape_cast %92 : vector<128xf32> to vector<1x128xf32>
    %c0_69 = arith.constant 0 : index
    %c0_70 = arith.constant 0 : index
    %c1_71 = arith.constant 1 : index
    %c0_72 = arith.constant 0 : index
    %94 = vector.load %arg6[%c0_69, %c0_70, %c1_71, %c0_72] : memref<1x1x2x128xf32, #tpu.memory_space<vmem>>, vector<1x1x1x128xf32>
    %95 = vector.shape_cast %94 : vector<1x1x1x128xf32> to vector<1x128xf32>
    %96 = vector.shape_cast %93 : vector<1x128xf32> to vector<1x1x1x128xf32>
    tpu.vector_store %arg6[%c0_69, %c0_70, %c1_71, %c0_72], %96 {strides = array<i32>} : memref<1x1x2x128xf32, #tpu.memory_space<vmem>>, vector<1x1x1x128xf32>,
    %97 = vector.shape_cast %85 : vector<64x128xf32> to vector<8x8x128xf32>
    %98 = arith.truncf %97 : vector<8x8x128xf32> to vector<8x8x128xbf16>
    %c0_73 = arith.constant 0 : index
    %c0_74 = arith.constant 0 : index
    %c0_75 = arith.constant 0 : index
    %c0_76 = arith.constant 0 : index
    %99 = vector.load %arg5[%c0_73, %c0_74, %c0_75, %c0_76] : memref<1x8x8x128xbf16, #tpu.memory_space<vmem>>, vector<1x8x8x128xbf16>
    %100 = vector.shape_cast %99 : vector<1x8x8x128xbf16> to vector<8x8x128xbf16>
    %101 = vector.shape_cast %98 : vector<8x8x128xbf16> to vector<1x8x8x128xbf16>
    tpu.vector_store %arg5[%c0_73, %c0_74, %c0_75, %c0_76], %101 {strides = array<i32>} : memref<1x8x8x128xbf16, #tpu.memory_space<vmem>>, vector<1x8x8x128xbf16>,
    return
  }
  func.func @transform_0(%arg0: i32, %arg1: i32) -> (i32, i32, i32, i32) {
    %c0_i32 = arith.constant 0 : i32
    %c0_i32_0 = arith.constant 0 : i32
    %c0_i32_1 = arith.constant 0 : i32
    %c0_i32_2 = arith.constant 0 : i32
    return %arg0, %c0_i32, %c0_i32_0, %c0_i32_1 : i32, i32, i32, i32
  }
  func.func @transform_1(%arg0: i32, %arg1: i32) -> (i32, i32, i32) {
    %c0_i32 = arith.constant 0 : i32
    %c0_i32_0 = arith.constant 0 : i32
    %c0_i32_1 = arith.constant 0 : i32
    %c0_i32_2 = arith.constant 0 : i32
    return %c0_i32, %c0_i32_0, %c0_i32_1 : i32, i32, i32
  }
  func.func @transform_2(%arg0: i32, %arg1: i32) -> (i32, i32) {
    %c0_i32 = arith.constant 0 : i32
    %c0_i32_0 = arith.constant 0 : i32
    %c0_i32_1 = arith.constant 0 : i32
    return %c0_i32, %c0_i32_0 : i32, i32
  }
  func.func @transform_3(%arg0: i32, %arg1: i32) -> (i32, i32, i32, i32) {
    %c0_i32 = arith.constant 0 : i32
    %c0_i32_0 = arith.constant 0 : i32
    %c0_i32_1 = arith.constant 0 : i32
    return %arg0, %arg1, %c0_i32, %c0_i32_0 : i32, i32, i32, i32
  }
  func.func @transform_4(%arg0: i32, %arg1: i32) -> (i32, i32, i32, i32) {
    %c0_i32 = arith.constant 0 : i32
    %c0_i32_0 = arith.constant 0 : i32
    %c0_i32_1 = arith.constant 0 : i32
    return %arg0, %arg1, %c0_i32, %c0_i32_0 : i32, i32, i32, i32
  }
}

module attributes {stable_mosaic.version = 11 : i64} {
  func.func @_bn_kernel(%arg0: i32, %arg1: i32, %arg2: memref<1x8x8x128xbf16, #tpu.memory_space<vmem>>, %arg3: memref<1x1x128xf32, #tpu.memory_space<vmem>>, %arg4: memref<1x1x128xf32, #tpu.memory_space<vmem>>, %arg5: memref<1x8x8x128xbf16, #tpu.memory_space<vmem>>) attributes {dimension_semantics = [#tpu.dimension_semantics<parallel>, #tpu.dimension_semantics<parallel>], iteration_bounds = array<i64: 2, 1>, scalar_prefetch = 0 : i64, scratch_operands = 0 : i64, tpu.core_type = #tpu.core_type<tc>, window_params = [{transform_indices = @transform_0, window_bounds = array<i64: 1, 8, 8, 128>}, {pipeline_mode = #tpu.pipeline_mode<synchronous>, transform_indices = @transform_1, window_bounds = array<i64: 1, 1, 128>}, {pipeline_mode = #tpu.pipeline_mode<synchronous>, transform_indices = @transform_2, window_bounds = array<i64: 1, 1, 128>}, {transform_indices = @transform_3, window_bounds = array<i64: 1, 8, 8, 128>}]} {
    %c0 = arith.constant 0 : index
    %c0_0 = arith.constant 0 : index
    %c0_1 = arith.constant 0 : index
    %c0_2 = arith.constant 0 : index
    %0 = vector.load %arg2[%c0, %c0_0, %c0_1, %c0_2] : memref<1x8x8x128xbf16, #tpu.memory_space<vmem>>, vector<1x8x8x128xbf16>
    %1 = vector.shape_cast %0 : vector<1x8x8x128xbf16> to vector<8x8x128xbf16>
    %2 = arith.extf %1 : vector<8x8x128xbf16> to vector<8x8x128xf32>
    %c0_3 = arith.constant 0 : index
    %c0_4 = arith.constant 0 : index
    %c0_5 = arith.constant 0 : index
    %3 = vector.load %arg3[%c0_3, %c0_4, %c0_5] : memref<1x1x128xf32, #tpu.memory_space<vmem>>, vector<1x1x128xf32>
    %4 = vector.broadcast %3 : vector<1x1x128xf32> to vector<8x8x128xf32>
    %5 = arith.mulf %2, %4 : vector<8x8x128xf32>
    %c0_6 = arith.constant 0 : index
    %c0_7 = arith.constant 0 : index
    %c0_8 = arith.constant 0 : index
    %6 = vector.load %arg4[%c0_6, %c0_7, %c0_8] : memref<1x1x128xf32, #tpu.memory_space<vmem>>, vector<1x1x128xf32>
    %7 = vector.broadcast %6 : vector<1x1x128xf32> to vector<8x8x128xf32>
    %8 = arith.addf %5, %7 : vector<8x8x128xf32>
    %cst = arith.constant 0.000000e+00 : f32
    %9 = vector.broadcast %cst : f32 to vector<8x8x128xf32>
    %10 = arith.maximumf %8, %9 : vector<8x8x128xf32>
    %11 = arith.truncf %10 : vector<8x8x128xf32> to vector<8x8x128xbf16>
    %c0_9 = arith.constant 0 : index
    %c0_10 = arith.constant 0 : index
    %c0_11 = arith.constant 0 : index
    %c0_12 = arith.constant 0 : index
    %12 = vector.load %arg5[%c0_9, %c0_10, %c0_11, %c0_12] : memref<1x8x8x128xbf16, #tpu.memory_space<vmem>>, vector<1x8x8x128xbf16>
    %13 = vector.shape_cast %12 : vector<1x8x8x128xbf16> to vector<8x8x128xbf16>
    %14 = vector.shape_cast %11 : vector<8x8x128xbf16> to vector<1x8x8x128xbf16>
    tpu.vector_store %arg5[%c0_9, %c0_10, %c0_11, %c0_12], %14 {strides = array<i32>} : memref<1x8x8x128xbf16, #tpu.memory_space<vmem>>, vector<1x8x8x128xbf16>,
    return
  }
  func.func @transform_0(%arg0: i32, %arg1: i32) -> (i32, i32, i32, i32) {
    %c0_i32 = arith.constant 0 : i32
    %c0_i32_0 = arith.constant 0 : i32
    %c0_i32_1 = arith.constant 0 : i32
    return %arg0, %arg1, %c0_i32, %c0_i32_0 : i32, i32, i32, i32
  }
  func.func @transform_1(%arg0: i32, %arg1: i32) -> (i32, i32, i32) {
    %c0_i32 = arith.constant 0 : i32
    %c0_i32_0 = arith.constant 0 : i32
    %c0_i32_1 = arith.constant 0 : i32
    %c0_i32_2 = arith.constant 0 : i32
    return %c0_i32, %c0_i32_0, %c0_i32_1 : i32, i32, i32
  }
  func.func @transform_2(%arg0: i32, %arg1: i32) -> (i32, i32, i32) {
    %c0_i32 = arith.constant 0 : i32
    %c0_i32_0 = arith.constant 0 : i32
    %c0_i32_1 = arith.constant 0 : i32
    %c0_i32_2 = arith.constant 0 : i32
    return %c0_i32, %c0_i32_0, %c0_i32_1 : i32, i32, i32
  }
  func.func @transform_3(%arg0: i32, %arg1: i32) -> (i32, i32, i32, i32) {
    %c0_i32 = arith.constant 0 : i32
    %c0_i32_0 = arith.constant 0 : i32
    %c0_i32_1 = arith.constant 0 : i32
    return %arg0, %arg1, %c0_i32, %c0_i32_0 : i32, i32, i32, i32
  }
}

module attributes {stable_mosaic.version = 11 : i64} {
  func.func @_conv_kernel(%arg0: i32, %arg1: i32, %arg2: memref<1x10x10x128xbf16, #tpu.memory_space<vmem>>, %arg3: memref<9x128x128xbf16, #tpu.memory_space<vmem>>, %arg4: memref<1x128xf32, #tpu.memory_space<vmem>>, %arg5: memref<1x8x8x128xbf16, #tpu.memory_space<vmem>>, %arg6: memref<1x1x2x128xf32, #tpu.memory_space<vmem>>) attributes {dimension_semantics = [#tpu.dimension_semantics<parallel>, #tpu.dimension_semantics<parallel>], iteration_bounds = array<i64: 2, 1>, scalar_prefetch = 0 : i64, scratch_operands = 0 : i64, tpu.core_type = #tpu.core_type<tc>, window_params = [{transform_indices = @transform_0, window_bounds = array<i64: 1, 10, 10, 128>}, {pipeline_mode = #tpu.pipeline_mode<synchronous>, transform_indices = @transform_1, window_bounds = array<i64: 9, 128, 128>}, {pipeline_mode = #tpu.pipeline_mode<synchronous>, transform_indices = @transform_2, window_bounds = array<i64: 1, 128>}, {transform_indices = @transform_3, window_bounds = array<i64: 1, 8, 8, 128>}, {transform_indices = @transform_4, window_bounds = array<i64: 1, 1, 2, 128>}]} {
    %c8_i32 = arith.constant 8 : i32
    %0 = arith.muli %arg1, %c8_i32 : i32
    %cst = arith.constant 0.000000e+00 : f32
    %1 = vector.broadcast %cst : f32 to vector<64x128xf32>
    %c0_i32 = arith.constant 0 : i32
    %2 = arith.addi %0, %c0_i32 : i32
    %c0 = arith.constant 0 : index
    %3 = arith.index_cast %2 : i32 to index
    %c0_0 = arith.constant 0 : index
    %c0_1 = arith.constant 0 : index
    %4 = vector.load %arg2[%c0, %3, %c0_0, %c0_1] : memref<1x10x10x128xbf16, #tpu.memory_space<vmem>>, vector<1x8x8x128xbf16>
    %5 = vector.shape_cast %4 : vector<1x8x8x128xbf16> to vector<8x8x128xbf16>
    %6 = vector.shape_cast %5 : vector<8x8x128xbf16> to vector<64x128xbf16>
    %c0_2 = arith.constant 0 : index
    %c0_3 = arith.constant 0 : index
    %c0_4 = arith.constant 0 : index
    %7 = vector.load %arg3[%c0_2, %c0_3, %c0_4] : memref<9x128x128xbf16, #tpu.memory_space<vmem>>, vector<1x128x128xbf16>
    %8 = vector.shape_cast %7 : vector<1x128x128xbf16> to vector<128x128xbf16>
    %cst_5 = arith.constant dense<0.000000e+00> : vector<64x128xf32>
    %9 = tpu.matmul %6, %8, %cst_5 {dimension_numbers = #tpu.dot_dimension_numbers<[1], [0], [0], [1], [0, 0, 1, 1], [], []>} : vector<64x128xbf16>, vector<128x128xbf16>, vector<64x128xf32> -> vector<64x128xf32>
    %10 = arith.addf %1, %9 : vector<64x128xf32>
    %c0_i32_6 = arith.constant 0 : i32
    %11 = arith.addi %0, %c0_i32_6 : i32
    %c0_7 = arith.constant 0 : index
    %12 = arith.index_cast %11 : i32 to index
    %c1 = arith.constant 1 : index
    %c0_8 = arith.constant 0 : index
    %13 = vector.load %arg2[%c0_7, %12, %c1, %c0_8] : memref<1x10x10x128xbf16, #tpu.memory_space<vmem>>, vector<1x8x8x128xbf16>
    %14 = vector.shape_cast %13 : vector<1x8x8x128xbf16> to vector<8x8x128xbf16>
    %15 = vector.shape_cast %14 : vector<8x8x128xbf16> to vector<64x128xbf16>
    %c1_9 = arith.constant 1 : index
    %c0_10 = arith.constant 0 : index
    %c0_11 = arith.constant 0 : index
    %16 = vector.load %arg3[%c1_9, %c0_10, %c0_11] : memref<9x128x128xbf16, #tpu.memory_space<vmem>>, vector<1x128x128xbf16>
    %17 = vector.shape_cast %16 : vector<1x128x128xbf16> to vector<128x128xbf16>
    %cst_12 = arith.constant dense<0.000000e+00> : vector<64x128xf32>
    %18 = tpu.matmul %15, %17, %cst_12 {dimension_numbers = #tpu.dot_dimension_numbers<[1], [0], [0], [1], [0, 0, 1, 1], [], []>} : vector<64x128xbf16>, vector<128x128xbf16>, vector<64x128xf32> -> vector<64x128xf32>
    %19 = arith.addf %10, %18 : vector<64x128xf32>
    %c0_i32_13 = arith.constant 0 : i32
    %20 = arith.addi %0, %c0_i32_13 : i32
    %c0_14 = arith.constant 0 : index
    %21 = arith.index_cast %20 : i32 to index
    %c2 = arith.constant 2 : index
    %c0_15 = arith.constant 0 : index
    %22 = vector.load %arg2[%c0_14, %21, %c2, %c0_15] : memref<1x10x10x128xbf16, #tpu.memory_space<vmem>>, vector<1x8x8x128xbf16>
    %23 = vector.shape_cast %22 : vector<1x8x8x128xbf16> to vector<8x8x128xbf16>
    %24 = vector.shape_cast %23 : vector<8x8x128xbf16> to vector<64x128xbf16>
    %c2_16 = arith.constant 2 : index
    %c0_17 = arith.constant 0 : index
    %c0_18 = arith.constant 0 : index
    %25 = vector.load %arg3[%c2_16, %c0_17, %c0_18] : memref<9x128x128xbf16, #tpu.memory_space<vmem>>, vector<1x128x128xbf16>
    %26 = vector.shape_cast %25 : vector<1x128x128xbf16> to vector<128x128xbf16>
    %cst_19 = arith.constant dense<0.000000e+00> : vector<64x128xf32>
    %27 = tpu.matmul %24, %26, %cst_19 {dimension_numbers = #tpu.dot_dimension_numbers<[1], [0], [0], [1], [0, 0, 1, 1], [], []>} : vector<64x128xbf16>, vector<128x128xbf16>, vector<64x128xf32> -> vector<64x128xf32>
    %28 = arith.addf %19, %27 : vector<64x128xf32>
    %c1_i32 = arith.constant 1 : i32
    %29 = arith.addi %0, %c1_i32 : i32
    %c0_20 = arith.constant 0 : index
    %30 = arith.index_cast %29 : i32 to index
    %c0_21 = arith.constant 0 : index
    %c0_22 = arith.constant 0 : index
    %31 = vector.load %arg2[%c0_20, %30, %c0_21, %c0_22] : memref<1x10x10x128xbf16, #tpu.memory_space<vmem>>, vector<1x8x8x128xbf16>
    %32 = vector.shape_cast %31 : vector<1x8x8x128xbf16> to vector<8x8x128xbf16>
    %33 = vector.shape_cast %32 : vector<8x8x128xbf16> to vector<64x128xbf16>
    %c3 = arith.constant 3 : index
    %c0_23 = arith.constant 0 : index
    %c0_24 = arith.constant 0 : index
    %34 = vector.load %arg3[%c3, %c0_23, %c0_24] : memref<9x128x128xbf16, #tpu.memory_space<vmem>>, vector<1x128x128xbf16>
    %35 = vector.shape_cast %34 : vector<1x128x128xbf16> to vector<128x128xbf16>
    %cst_25 = arith.constant dense<0.000000e+00> : vector<64x128xf32>
    %36 = tpu.matmul %33, %35, %cst_25 {dimension_numbers = #tpu.dot_dimension_numbers<[1], [0], [0], [1], [0, 0, 1, 1], [], []>} : vector<64x128xbf16>, vector<128x128xbf16>, vector<64x128xf32> -> vector<64x128xf32>
    %37 = arith.addf %28, %36 : vector<64x128xf32>
    %c1_i32_26 = arith.constant 1 : i32
    %38 = arith.addi %0, %c1_i32_26 : i32
    %c0_27 = arith.constant 0 : index
    %39 = arith.index_cast %38 : i32 to index
    %c1_28 = arith.constant 1 : index
    %c0_29 = arith.constant 0 : index
    %40 = vector.load %arg2[%c0_27, %39, %c1_28, %c0_29] : memref<1x10x10x128xbf16, #tpu.memory_space<vmem>>, vector<1x8x8x128xbf16>
    %41 = vector.shape_cast %40 : vector<1x8x8x128xbf16> to vector<8x8x128xbf16>
    %42 = vector.shape_cast %41 : vector<8x8x128xbf16> to vector<64x128xbf16>
    %c4 = arith.constant 4 : index
    %c0_30 = arith.constant 0 : index
    %c0_31 = arith.constant 0 : index
    %43 = vector.load %arg3[%c4, %c0_30, %c0_31] : memref<9x128x128xbf16, #tpu.memory_space<vmem>>, vector<1x128x128xbf16>
    %44 = vector.shape_cast %43 : vector<1x128x128xbf16> to vector<128x128xbf16>
    %cst_32 = arith.constant dense<0.000000e+00> : vector<64x128xf32>
    %45 = tpu.matmul %42, %44, %cst_32 {dimension_numbers = #tpu.dot_dimension_numbers<[1], [0], [0], [1], [0, 0, 1, 1], [], []>} : vector<64x128xbf16>, vector<128x128xbf16>, vector<64x128xf32> -> vector<64x128xf32>
    %46 = arith.addf %37, %45 : vector<64x128xf32>
    %c1_i32_33 = arith.constant 1 : i32
    %47 = arith.addi %0, %c1_i32_33 : i32
    %c0_34 = arith.constant 0 : index
    %48 = arith.index_cast %47 : i32 to index
    %c2_35 = arith.constant 2 : index
    %c0_36 = arith.constant 0 : index
    %49 = vector.load %arg2[%c0_34, %48, %c2_35, %c0_36] : memref<1x10x10x128xbf16, #tpu.memory_space<vmem>>, vector<1x8x8x128xbf16>
    %50 = vector.shape_cast %49 : vector<1x8x8x128xbf16> to vector<8x8x128xbf16>
    %51 = vector.shape_cast %50 : vector<8x8x128xbf16> to vector<64x128xbf16>
    %c5 = arith.constant 5 : index
    %c0_37 = arith.constant 0 : index
    %c0_38 = arith.constant 0 : index
    %52 = vector.load %arg3[%c5, %c0_37, %c0_38] : memref<9x128x128xbf16, #tpu.memory_space<vmem>>, vector<1x128x128xbf16>
    %53 = vector.shape_cast %52 : vector<1x128x128xbf16> to vector<128x128xbf16>
    %cst_39 = arith.constant dense<0.000000e+00> : vector<64x128xf32>
    %54 = tpu.matmul %51, %53, %cst_39 {dimension_numbers = #tpu.dot_dimension_numbers<[1], [0], [0], [1], [0, 0, 1, 1], [], []>} : vector<64x128xbf16>, vector<128x128xbf16>, vector<64x128xf32> -> vector<64x128xf32>
    %55 = arith.addf %46, %54 : vector<64x128xf32>
    %c2_i32 = arith.constant 2 : i32
    %56 = arith.addi %0, %c2_i32 : i32
    %c0_40 = arith.constant 0 : index
    %57 = arith.index_cast %56 : i32 to index
    %c0_41 = arith.constant 0 : index
    %c0_42 = arith.constant 0 : index
    %58 = vector.load %arg2[%c0_40, %57, %c0_41, %c0_42] : memref<1x10x10x128xbf16, #tpu.memory_space<vmem>>, vector<1x8x8x128xbf16>
    %59 = vector.shape_cast %58 : vector<1x8x8x128xbf16> to vector<8x8x128xbf16>
    %60 = vector.shape_cast %59 : vector<8x8x128xbf16> to vector<64x128xbf16>
    %c6 = arith.constant 6 : index
    %c0_43 = arith.constant 0 : index
    %c0_44 = arith.constant 0 : index
    %61 = vector.load %arg3[%c6, %c0_43, %c0_44] : memref<9x128x128xbf16, #tpu.memory_space<vmem>>, vector<1x128x128xbf16>
    %62 = vector.shape_cast %61 : vector<1x128x128xbf16> to vector<128x128xbf16>
    %cst_45 = arith.constant dense<0.000000e+00> : vector<64x128xf32>
    %63 = tpu.matmul %60, %62, %cst_45 {dimension_numbers = #tpu.dot_dimension_numbers<[1], [0], [0], [1], [0, 0, 1, 1], [], []>} : vector<64x128xbf16>, vector<128x128xbf16>, vector<64x128xf32> -> vector<64x128xf32>
    %64 = arith.addf %55, %63 : vector<64x128xf32>
    %c2_i32_46 = arith.constant 2 : i32
    %65 = arith.addi %0, %c2_i32_46 : i32
    %c0_47 = arith.constant 0 : index
    %66 = arith.index_cast %65 : i32 to index
    %c1_48 = arith.constant 1 : index
    %c0_49 = arith.constant 0 : index
    %67 = vector.load %arg2[%c0_47, %66, %c1_48, %c0_49] : memref<1x10x10x128xbf16, #tpu.memory_space<vmem>>, vector<1x8x8x128xbf16>
    %68 = vector.shape_cast %67 : vector<1x8x8x128xbf16> to vector<8x8x128xbf16>
    %69 = vector.shape_cast %68 : vector<8x8x128xbf16> to vector<64x128xbf16>
    %c7 = arith.constant 7 : index
    %c0_50 = arith.constant 0 : index
    %c0_51 = arith.constant 0 : index
    %70 = vector.load %arg3[%c7, %c0_50, %c0_51] : memref<9x128x128xbf16, #tpu.memory_space<vmem>>, vector<1x128x128xbf16>
    %71 = vector.shape_cast %70 : vector<1x128x128xbf16> to vector<128x128xbf16>
    %cst_52 = arith.constant dense<0.000000e+00> : vector<64x128xf32>
    %72 = tpu.matmul %69, %71, %cst_52 {dimension_numbers = #tpu.dot_dimension_numbers<[1], [0], [0], [1], [0, 0, 1, 1], [], []>} : vector<64x128xbf16>, vector<128x128xbf16>, vector<64x128xf32> -> vector<64x128xf32>
    %73 = arith.addf %64, %72 : vector<64x128xf32>
    %c2_i32_53 = arith.constant 2 : i32
    %74 = arith.addi %0, %c2_i32_53 : i32
    %c0_54 = arith.constant 0 : index
    %75 = arith.index_cast %74 : i32 to index
    %c2_55 = arith.constant 2 : index
    %c0_56 = arith.constant 0 : index
    %76 = vector.load %arg2[%c0_54, %75, %c2_55, %c0_56] : memref<1x10x10x128xbf16, #tpu.memory_space<vmem>>, vector<1x8x8x128xbf16>
    %77 = vector.shape_cast %76 : vector<1x8x8x128xbf16> to vector<8x8x128xbf16>
    %78 = vector.shape_cast %77 : vector<8x8x128xbf16> to vector<64x128xbf16>
    %c8 = arith.constant 8 : index
    %c0_57 = arith.constant 0 : index
    %c0_58 = arith.constant 0 : index
    %79 = vector.load %arg3[%c8, %c0_57, %c0_58] : memref<9x128x128xbf16, #tpu.memory_space<vmem>>, vector<1x128x128xbf16>
    %80 = vector.shape_cast %79 : vector<1x128x128xbf16> to vector<128x128xbf16>
    %cst_59 = arith.constant dense<0.000000e+00> : vector<64x128xf32>
    %81 = tpu.matmul %78, %80, %cst_59 {dimension_numbers = #tpu.dot_dimension_numbers<[1], [0], [0], [1], [0, 0, 1, 1], [], []>} : vector<64x128xbf16>, vector<128x128xbf16>, vector<64x128xf32> -> vector<64x128xf32>
    %82 = arith.addf %73, %81 : vector<64x128xf32>
    %c0_60 = arith.constant 0 : index
    %c0_61 = arith.constant 0 : index
    %83 = vector.load %arg4[%c0_60, %c0_61] : memref<1x128xf32, #tpu.memory_space<vmem>>, vector<1x128xf32>
    %84 = vector.broadcast %83 : vector<1x128xf32> to vector<64x128xf32>
    %85 = arith.addf %82, %84 : vector<64x128xf32>
    %cst_62 = arith.constant dense<0.000000e+00> : vector<128xf32>
    %86 = vector.multi_reduction <add>, %85, %cst_62 [0] : vector<64x128xf32> to vector<128xf32>
    %87 = vector.shape_cast %86 : vector<128xf32> to vector<1x128xf32>
    %c0_63 = arith.constant 0 : index
    %c0_64 = arith.constant 0 : index
    %c0_65 = arith.constant 0 : index
    %c0_66 = arith.constant 0 : index
    %88 = vector.load %arg6[%c0_63, %c0_64, %c0_65, %c0_66] : memref<1x1x2x128xf32, #tpu.memory_space<vmem>>, vector<1x1x1x128xf32>
    %89 = vector.shape_cast %88 : vector<1x1x1x128xf32> to vector<1x128xf32>
    %90 = vector.shape_cast %87 : vector<1x128xf32> to vector<1x1x1x128xf32>
    tpu.vector_store %arg6[%c0_63, %c0_64, %c0_65, %c0_66], %90 {strides = array<i32>} : memref<1x1x2x128xf32, #tpu.memory_space<vmem>>, vector<1x1x1x128xf32>,
    %91 = arith.mulf %85, %85 : vector<64x128xf32>
    %cst_67 = arith.constant dense<0.000000e+00> : vector<128xf32>
    %92 = vector.multi_reduction <add>, %91, %cst_67 [0] : vector<64x128xf32> to vector<128xf32>
    %93 = vector.shape_cast %92 : vector<128xf32> to vector<1x128xf32>
    %c0_68 = arith.constant 0 : index
    %c0_69 = arith.constant 0 : index
    %c1_70 = arith.constant 1 : index
    %c0_71 = arith.constant 0 : index
    %94 = vector.load %arg6[%c0_68, %c0_69, %c1_70, %c0_71] : memref<1x1x2x128xf32, #tpu.memory_space<vmem>>, vector<1x1x1x128xf32>
    %95 = vector.shape_cast %94 : vector<1x1x1x128xf32> to vector<1x128xf32>
    %96 = vector.shape_cast %93 : vector<1x128xf32> to vector<1x1x1x128xf32>
    tpu.vector_store %arg6[%c0_68, %c0_69, %c1_70, %c0_71], %96 {strides = array<i32>} : memref<1x1x2x128xf32, #tpu.memory_space<vmem>>, vector<1x1x1x128xf32>,
    %97 = vector.shape_cast %85 : vector<64x128xf32> to vector<8x8x128xf32>
    %98 = arith.truncf %97 : vector<8x8x128xf32> to vector<8x8x128xbf16>
    %c0_72 = arith.constant 0 : index
    %c0_73 = arith.constant 0 : index
    %c0_74 = arith.constant 0 : index
    %c0_75 = arith.constant 0 : index
    %99 = vector.load %arg5[%c0_72, %c0_73, %c0_74, %c0_75] : memref<1x8x8x128xbf16, #tpu.memory_space<vmem>>, vector<1x8x8x128xbf16>
    %100 = vector.shape_cast %99 : vector<1x8x8x128xbf16> to vector<8x8x128xbf16>
    %101 = vector.shape_cast %98 : vector<8x8x128xbf16> to vector<1x8x8x128xbf16>
    tpu.vector_store %arg5[%c0_72, %c0_73, %c0_74, %c0_75], %101 {strides = array<i32>} : memref<1x8x8x128xbf16, #tpu.memory_space<vmem>>, vector<1x8x8x128xbf16>,
    return
  }
  func.func @transform_0(%arg0: i32, %arg1: i32) -> (i32, i32, i32, i32) {
    %c0_i32 = arith.constant 0 : i32
    %c0_i32_0 = arith.constant 0 : i32
    %c0_i32_1 = arith.constant 0 : i32
    %c0_i32_2 = arith.constant 0 : i32
    return %arg0, %c0_i32, %c0_i32_0, %c0_i32_1 : i32, i32, i32, i32
  }
  func.func @transform_1(%arg0: i32, %arg1: i32) -> (i32, i32, i32) {
    %c0_i32 = arith.constant 0 : i32
    %c0_i32_0 = arith.constant 0 : i32
    %c0_i32_1 = arith.constant 0 : i32
    %c0_i32_2 = arith.constant 0 : i32
    return %c0_i32, %c0_i32_0, %c0_i32_1 : i32, i32, i32
  }
  func.func @transform_2(%arg0: i32, %arg1: i32) -> (i32, i32) {
    %c0_i32 = arith.constant 0 : i32
    %c0_i32_0 = arith.constant 0 : i32
    %c0_i32_1 = arith.constant 0 : i32
    return %c0_i32, %c0_i32_0 : i32, i32
  }
  func.func @transform_3(%arg0: i32, %arg1: i32) -> (i32, i32, i32, i32) {
    %c0_i32 = arith.constant 0 : i32
    %c0_i32_0 = arith.constant 0 : i32
    %c0_i32_1 = arith.constant 0 : i32
    return %arg0, %arg1, %c0_i32, %c0_i32_0 : i32, i32, i32, i32
  }
  func.func @transform_4(%arg0: i32, %arg1: i32) -> (i32, i32, i32, i32) {
    %c0_i32 = arith.constant 0 : i32
    %c0_i32_0 = arith.constant 0 : i32
    %c0_i32_1 = arith.constant 0 : i32
    return %arg0, %arg1, %c0_i32, %c0_i32_0 : i32, i32, i32, i32
  }
}

module attributes {stable_mosaic.version = 11 : i64} {
  func.func @_conv_kernel(%arg0: i32, %arg1: i32, %arg2: memref<1x8x8x128xbf16, #tpu.memory_space<vmem>>, %arg3: memref<1x128x128xbf16, #tpu.memory_space<vmem>>, %arg4: memref<1x128xf32, #tpu.memory_space<vmem>>, %arg5: memref<1x8x8x128xbf16, #tpu.memory_space<vmem>>, %arg6: memref<1x1x2x128xf32, #tpu.memory_space<vmem>>) attributes {dimension_semantics = [#tpu.dimension_semantics<parallel>, #tpu.dimension_semantics<parallel>], iteration_bounds = array<i64: 2, 1>, scalar_prefetch = 0 : i64, scratch_operands = 0 : i64, tpu.core_type = #tpu.core_type<tc>, window_params = [{transform_indices = @transform_0, window_bounds = array<i64: 1, 8, 8, 128>}, {pipeline_mode = #tpu.pipeline_mode<synchronous>, transform_indices = @transform_1, window_bounds = array<i64: 1, 128, 128>}, {pipeline_mode = #tpu.pipeline_mode<synchronous>, transform_indices = @transform_2, window_bounds = array<i64: 1, 128>}, {transform_indices = @transform_3, window_bounds = array<i64: 1, 8, 8, 128>}, {transform_indices = @transform_4, window_bounds = array<i64: 1, 1, 2, 128>}]} {
    %c8_i32 = arith.constant 8 : i32
    %0 = arith.muli %arg1, %c8_i32 : i32
    %cst = arith.constant 0.000000e+00 : f32
    %1 = vector.broadcast %cst : f32 to vector<64x128xf32>
    %c0_i32 = arith.constant 0 : i32
    %2 = arith.addi %0, %c0_i32 : i32
    %c0 = arith.constant 0 : index
    %3 = arith.index_cast %2 : i32 to index
    %c0_0 = arith.constant 0 : index
    %c0_1 = arith.constant 0 : index
    %4 = vector.load %arg2[%c0, %3, %c0_0, %c0_1] : memref<1x8x8x128xbf16, #tpu.memory_space<vmem>>, vector<1x8x8x128xbf16>
    %5 = vector.shape_cast %4 : vector<1x8x8x128xbf16> to vector<8x8x128xbf16>
    %6 = vector.shape_cast %5 : vector<8x8x128xbf16> to vector<64x128xbf16>
    %c0_2 = arith.constant 0 : index
    %c0_3 = arith.constant 0 : index
    %c0_4 = arith.constant 0 : index
    %7 = vector.load %arg3[%c0_2, %c0_3, %c0_4] : memref<1x128x128xbf16, #tpu.memory_space<vmem>>, vector<1x128x128xbf16>
    %8 = vector.shape_cast %7 : vector<1x128x128xbf16> to vector<128x128xbf16>
    %cst_5 = arith.constant dense<0.000000e+00> : vector<64x128xf32>
    %9 = tpu.matmul %6, %8, %cst_5 {dimension_numbers = #tpu.dot_dimension_numbers<[1], [0], [0], [1], [0, 0, 1, 1], [], []>} : vector<64x128xbf16>, vector<128x128xbf16>, vector<64x128xf32> -> vector<64x128xf32>
    %10 = arith.addf %1, %9 : vector<64x128xf32>
    %c0_6 = arith.constant 0 : index
    %c0_7 = arith.constant 0 : index
    %11 = vector.load %arg4[%c0_6, %c0_7] : memref<1x128xf32, #tpu.memory_space<vmem>>, vector<1x128xf32>
    %12 = vector.broadcast %11 : vector<1x128xf32> to vector<64x128xf32>
    %13 = arith.addf %10, %12 : vector<64x128xf32>
    %cst_8 = arith.constant dense<0.000000e+00> : vector<128xf32>
    %14 = vector.multi_reduction <add>, %13, %cst_8 [0] : vector<64x128xf32> to vector<128xf32>
    %15 = vector.shape_cast %14 : vector<128xf32> to vector<1x128xf32>
    %c0_9 = arith.constant 0 : index
    %c0_10 = arith.constant 0 : index
    %c0_11 = arith.constant 0 : index
    %c0_12 = arith.constant 0 : index
    %16 = vector.load %arg6[%c0_9, %c0_10, %c0_11, %c0_12] : memref<1x1x2x128xf32, #tpu.memory_space<vmem>>, vector<1x1x1x128xf32>
    %17 = vector.shape_cast %16 : vector<1x1x1x128xf32> to vector<1x128xf32>
    %18 = vector.shape_cast %15 : vector<1x128xf32> to vector<1x1x1x128xf32>
    tpu.vector_store %arg6[%c0_9, %c0_10, %c0_11, %c0_12], %18 {strides = array<i32>} : memref<1x1x2x128xf32, #tpu.memory_space<vmem>>, vector<1x1x1x128xf32>,
    %19 = arith.mulf %13, %13 : vector<64x128xf32>
    %cst_13 = arith.constant dense<0.000000e+00> : vector<128xf32>
    %20 = vector.multi_reduction <add>, %19, %cst_13 [0] : vector<64x128xf32> to vector<128xf32>
    %21 = vector.shape_cast %20 : vector<128xf32> to vector<1x128xf32>
    %c0_14 = arith.constant 0 : index
    %c0_15 = arith.constant 0 : index
    %c1 = arith.constant 1 : index
    %c0_16 = arith.constant 0 : index
    %22 = vector.load %arg6[%c0_14, %c0_15, %c1, %c0_16] : memref<1x1x2x128xf32, #tpu.memory_space<vmem>>, vector<1x1x1x128xf32>
    %23 = vector.shape_cast %22 : vector<1x1x1x128xf32> to vector<1x128xf32>
    %24 = vector.shape_cast %21 : vector<1x128xf32> to vector<1x1x1x128xf32>
    tpu.vector_store %arg6[%c0_14, %c0_15, %c1, %c0_16], %24 {strides = array<i32>} : memref<1x1x2x128xf32, #tpu.memory_space<vmem>>, vector<1x1x1x128xf32>,
    %25 = vector.shape_cast %13 : vector<64x128xf32> to vector<8x8x128xf32>
    %26 = arith.truncf %25 : vector<8x8x128xf32> to vector<8x8x128xbf16>
    %c0_17 = arith.constant 0 : index
    %c0_18 = arith.constant 0 : index
    %c0_19 = arith.constant 0 : index
    %c0_20 = arith.constant 0 : index
    %27 = vector.load %arg5[%c0_17, %c0_18, %c0_19, %c0_20] : memref<1x8x8x128xbf16, #tpu.memory_space<vmem>>, vector<1x8x8x128xbf16>
    %28 = vector.shape_cast %27 : vector<1x8x8x128xbf16> to vector<8x8x128xbf16>
    %29 = vector.shape_cast %26 : vector<8x8x128xbf16> to vector<1x8x8x128xbf16>
    tpu.vector_store %arg5[%c0_17, %c0_18, %c0_19, %c0_20], %29 {strides = array<i32>} : memref<1x8x8x128xbf16, #tpu.memory_space<vmem>>, vector<1x8x8x128xbf16>,
    return
  }
  func.func @transform_0(%arg0: i32, %arg1: i32) -> (i32, i32, i32, i32) {
    %c0_i32 = arith.constant 0 : i32
    %c0_i32_0 = arith.constant 0 : i32
    %c0_i32_1 = arith.constant 0 : i32
    %c0_i32_2 = arith.constant 0 : i32
    return %arg0, %c0_i32, %c0_i32_0, %c0_i32_1 : i32, i32, i32, i32
  }
  func.func @transform_1(%arg0: i32, %arg1: i32) -> (i32, i32, i32) {
    %c0_i32 = arith.constant 0 : i32
    %c0_i32_0 = arith.constant 0 : i32
    %c0_i32_1 = arith.constant 0 : i32
    %c0_i32_2 = arith.constant 0 : i32
    return %c0_i32, %c0_i32_0, %c0_i32_1 : i32, i32, i32
  }
  func.func @transform_2(%arg0: i32, %arg1: i32) -> (i32, i32) {
    %c0_i32 = arith.constant 0 : i32
    %c0_i32_0 = arith.constant 0 : i32
    %c0_i32_1 = arith.constant 0 : i32
    return %c0_i32, %c0_i32_0 : i32, i32
  }
  func.func @transform_3(%arg0: i32, %arg1: i32) -> (i32, i32, i32, i32) {
    %c0_i32 = arith.constant 0 : i32
    %c0_i32_0 = arith.constant 0 : i32
    %c0_i32_1 = arith.constant 0 : i32
    return %arg0, %arg1, %c0_i32, %c0_i32_0 : i32, i32, i32, i32
  }
  func.func @transform_4(%arg0: i32, %arg1: i32) -> (i32, i32, i32, i32) {
    %c0_i32 = arith.constant 0 : i32
    %c0_i32_0 = arith.constant 0 : i32
    %c0_i32_1 = arith.constant 0 : i32
    return %arg0, %arg1, %c0_i32, %c0_i32_0 : i32, i32, i32, i32
  }
}

module attributes {stable_mosaic.version = 11 : i64} {
  func.func @_bn_add_bnsc_kernel(%arg0: i32, %arg1: i32, %arg2: memref<1x8x8x128xbf16, #tpu.memory_space<vmem>>, %arg3: memref<1x1x128xf32, #tpu.memory_space<vmem>>, %arg4: memref<1x1x128xf32, #tpu.memory_space<vmem>>, %arg5: memref<1x8x8x128xbf16, #tpu.memory_space<vmem>>, %arg6: memref<1x1x128xf32, #tpu.memory_space<vmem>>, %arg7: memref<1x1x128xf32, #tpu.memory_space<vmem>>, %arg8: memref<1x8x8x128xf32, #tpu.memory_space<vmem>>) attributes {dimension_semantics = [#tpu.dimension_semantics<parallel>, #tpu.dimension_semantics<parallel>], iteration_bounds = array<i64: 2, 1>, scalar_prefetch = 0 : i64, scratch_operands = 0 : i64, tpu.core_type = #tpu.core_type<tc>, window_params = [{transform_indices = @transform_0, window_bounds = array<i64: 1, 8, 8, 128>}, {pipeline_mode = #tpu.pipeline_mode<synchronous>, transform_indices = @transform_1, window_bounds = array<i64: 1, 1, 128>}, {pipeline_mode = #tpu.pipeline_mode<synchronous>, transform_indices = @transform_2, window_bounds = array<i64: 1, 1, 128>}, {transform_indices = @transform_3, window_bounds = array<i64: 1, 8, 8, 128>}, {pipeline_mode = #tpu.pipeline_mode<synchronous>, transform_indices = @transform_4, window_bounds = array<i64: 1, 1, 128>}, {pipeline_mode = #tpu.pipeline_mode<synchronous>, transform_indices = @transform_5, window_bounds = array<i64: 1, 1, 128>}, {transform_indices = @transform_6, window_bounds = array<i64: 1, 8, 8, 128>}]} {
    %c0 = arith.constant 0 : index
    %c0_0 = arith.constant 0 : index
    %c0_1 = arith.constant 0 : index
    %c0_2 = arith.constant 0 : index
    %0 = vector.load %arg2[%c0, %c0_0, %c0_1, %c0_2] : memref<1x8x8x128xbf16, #tpu.memory_space<vmem>>, vector<1x8x8x128xbf16>
    %1 = vector.shape_cast %0 : vector<1x8x8x128xbf16> to vector<8x8x128xbf16>
    %2 = arith.extf %1 : vector<8x8x128xbf16> to vector<8x8x128xf32>
    %c0_3 = arith.constant 0 : index
    %c0_4 = arith.constant 0 : index
    %c0_5 = arith.constant 0 : index
    %3 = vector.load %arg3[%c0_3, %c0_4, %c0_5] : memref<1x1x128xf32, #tpu.memory_space<vmem>>, vector<1x1x128xf32>
    %4 = vector.broadcast %3 : vector<1x1x128xf32> to vector<8x8x128xf32>
    %5 = arith.mulf %2, %4 : vector<8x8x128xf32>
    %c0_6 = arith.constant 0 : index
    %c0_7 = arith.constant 0 : index
    %c0_8 = arith.constant 0 : index
    %6 = vector.load %arg4[%c0_6, %c0_7, %c0_8] : memref<1x1x128xf32, #tpu.memory_space<vmem>>, vector<1x1x128xf32>
    %7 = vector.broadcast %6 : vector<1x1x128xf32> to vector<8x8x128xf32>
    %8 = arith.addf %5, %7 : vector<8x8x128xf32>
    %cst = arith.constant 0.000000e+00 : f32
    %9 = vector.broadcast %cst : f32 to vector<8x8x128xf32>
    %10 = arith.maximumf %8, %9 : vector<8x8x128xf32>
    %c0_9 = arith.constant 0 : index
    %c0_10 = arith.constant 0 : index
    %c0_11 = arith.constant 0 : index
    %c0_12 = arith.constant 0 : index
    %11 = vector.load %arg5[%c0_9, %c0_10, %c0_11, %c0_12] : memref<1x8x8x128xbf16, #tpu.memory_space<vmem>>, vector<1x8x8x128xbf16>
    %12 = vector.shape_cast %11 : vector<1x8x8x128xbf16> to vector<8x8x128xbf16>
    %13 = arith.extf %12 : vector<8x8x128xbf16> to vector<8x8x128xf32>
    %c0_13 = arith.constant 0 : index
    %c0_14 = arith.constant 0 : index
    %c0_15 = arith.constant 0 : index
    %14 = vector.load %arg6[%c0_13, %c0_14, %c0_15] : memref<1x1x128xf32, #tpu.memory_space<vmem>>, vector<1x1x128xf32>
    %15 = vector.broadcast %14 : vector<1x1x128xf32> to vector<8x8x128xf32>
    %16 = arith.mulf %13, %15 : vector<8x8x128xf32>
    %c0_16 = arith.constant 0 : index
    %c0_17 = arith.constant 0 : index
    %c0_18 = arith.constant 0 : index
    %17 = vector.load %arg7[%c0_16, %c0_17, %c0_18] : memref<1x1x128xf32, #tpu.memory_space<vmem>>, vector<1x1x128xf32>
    %18 = vector.broadcast %17 : vector<1x1x128xf32> to vector<8x8x128xf32>
    %19 = arith.addf %16, %18 : vector<8x8x128xf32>
    %20 = arith.addf %10, %19 : vector<8x8x128xf32>
    %cst_19 = arith.constant 0.000000e+00 : f32
    %21 = vector.broadcast %cst_19 : f32 to vector<8x8x128xf32>
    %22 = arith.maximumf %20, %21 : vector<8x8x128xf32>
    %c0_20 = arith.constant 0 : index
    %c0_21 = arith.constant 0 : index
    %c0_22 = arith.constant 0 : index
    %c0_23 = arith.constant 0 : index
    %23 = vector.load %arg8[%c0_20, %c0_21, %c0_22, %c0_23] : memref<1x8x8x128xf32, #tpu.memory_space<vmem>>, vector<1x8x8x128xf32>
    %24 = vector.shape_cast %23 : vector<1x8x8x128xf32> to vector<8x8x128xf32>
    %25 = vector.shape_cast %22 : vector<8x8x128xf32> to vector<1x8x8x128xf32>
    tpu.vector_store %arg8[%c0_20, %c0_21, %c0_22, %c0_23], %25 {strides = array<i32>} : memref<1x8x8x128xf32, #tpu.memory_space<vmem>>, vector<1x8x8x128xf32>,
    return
  }
  func.func @transform_0(%arg0: i32, %arg1: i32) -> (i32, i32, i32, i32) {
    %c0_i32 = arith.constant 0 : i32
    %c0_i32_0 = arith.constant 0 : i32
    %c0_i32_1 = arith.constant 0 : i32
    return %arg0, %arg1, %c0_i32, %c0_i32_0 : i32, i32, i32, i32
  }
  func.func @transform_1(%arg0: i32, %arg1: i32) -> (i32, i32, i32) {
    %c0_i32 = arith.constant 0 : i32
    %c0_i32_0 = arith.constant 0 : i32
    %c0_i32_1 = arith.constant 0 : i32
    %c0_i32_2 = arith.constant 0 : i32
    return %c0_i32, %c0_i32_0, %c0_i32_1 : i32, i32, i32
  }
  func.func @transform_2(%arg0: i32, %arg1: i32) -> (i32, i32, i32) {
    %c0_i32 = arith.constant 0 : i32
    %c0_i32_0 = arith.constant 0 : i32
    %c0_i32_1 = arith.constant 0 : i32
    %c0_i32_2 = arith.constant 0 : i32
    return %c0_i32, %c0_i32_0, %c0_i32_1 : i32, i32, i32
  }
  func.func @transform_3(%arg0: i32, %arg1: i32) -> (i32, i32, i32, i32) {
    %c0_i32 = arith.constant 0 : i32
    %c0_i32_0 = arith.constant 0 : i32
    %c0_i32_1 = arith.constant 0 : i32
    return %arg0, %arg1, %c0_i32, %c0_i32_0 : i32, i32, i32, i32
  }
  func.func @transform_4(%arg0: i32, %arg1: i32) -> (i32, i32, i32) {
    %c0_i32 = arith.constant 0 : i32
    %c0_i32_0 = arith.constant 0 : i32
    %c0_i32_1 = arith.constant 0 : i32
    %c0_i32_2 = arith.constant 0 : i32
    return %c0_i32, %c0_i32_0, %c0_i32_1 : i32, i32, i32
  }
  func.func @transform_5(%arg0: i32, %arg1: i32) -> (i32, i32, i32) {
    %c0_i32 = arith.constant 0 : i32
    %c0_i32_0 = arith.constant 0 : i32
    %c0_i32_1 = arith.constant 0 : i32
    %c0_i32_2 = arith.constant 0 : i32
    return %c0_i32, %c0_i32_0, %c0_i32_1 : i32, i32, i32
  }
  func.func @transform_6(%arg0: i32, %arg1: i32) -> (i32, i32, i32, i32) {
    %c0_i32 = arith.constant 0 : i32
    %c0_i32_0 = arith.constant 0 : i32
    %c0_i32_1 = arith.constant 0 : i32
    return %arg0, %arg1, %c0_i32, %c0_i32_0 : i32, i32, i32, i32
  }
}

</mosaic_0001>

<llo_original>
// kernel: resblock_forward.6
$region0: #{resblock_forward.6}
  #allocation0 [shape = 'u32[]', space=smem, size = 0x4, offset = 0x4, fixed_abs, tag = 'smem constant byte address 0x4 - core index']
  #allocation1 [shape = 'u32[144,128]{1,0:T(1,128)}', space=vmem, size = 0x12000, scoped, tag = 'internal scratch']
  %s0 = inlined_call_operand.vmem [shape: bf16[2,8,8,128], index: 0, kind: input, shape index: {}, may-alias: {0,3}]
  %s1 = inlined_call_operand.vmem [shape: f32[1,1,128], index: 1, kind: input, shape index: {}]
  %s2 = inlined_call_operand.vmem [shape: f32[1,1,128], index: 2, kind: input, shape index: {}]
  %s3 = inlined_call_operand.vmem [shape: bf16[2,8,8,128], index: 3, kind: output, shape index: {}, may-alias: {0,3}]
  %s4 = sld [smem:[#allocation0]]
  $region45: #{resblock_forward.6} parent=0
    _
  %s6 = ssub.s32 1, %s4
  %s7 = scalar_select 0, %s6, %s4
  loop: start=0, step=1, limit=4
  $region2: #{resblock_forward.6} parent=0 // loop_pre_header
    _
  $region3: #{resblock_forward.6} parent=0 // loop_header
    %s9 = sphi 0, %s13
    %p10 = scmp.ge.s32.totalorder %s9, 4
    %s16 = sphi 0, %s28
    %s17 = sphi 0, %s24
    %s18 = sphi 0, %s16
    %s19 = sphi 0, %s17
    %s20 = sphi 0, %s18
    %s21 = sphi 0, %s19
    %s33 = sphi 0, %s35
    %s36 = sphi 0, %s33
    %s37 = sphi 0, %s36
    %s53 = sphi 0, %s37
    %s57 = sphi 0, %s57
    %s59 = sphi 0, %s57
    %s60 = sphi 0, %s59
    %s74 = sphi 0, %s60
    %s78 = sphi 0, %s78
    %s80 = sphi 0, %s78
    %s81 = sphi 0, %s80
    %s95 = sphi 0, %s81
    %s103 = sphi 0, %s105
    %s106 = sphi 0, %s103
    %s107 = sphi 0, %s106
    %s123 = sphi 0, %s107
  $region4: #{resblock_forward.6} parent=0 // loop_header_branch
    %12 = sbr.rel (%p10) target = $region8
  $region5: #{resblock_forward.6} parent=0 // loop_body
    %s14 = ssub.s32 %s9, 1
    %s15 = ssub.s32 %s9, 2
    %s22 = sadd.s32 1, %s17
    %p23 = scmp.ge.s32.totalorder %s22, 1
    %s24 = scalar_select %p23, 0, %s22
    %s25 = sadd.s32 1, %s16
    %s26 = scalar_select %p23, %s25, %s16
    %p27 = scmp.ge.s32.totalorder %s26, 2
    %s28 = scalar_select %p27, 0, %s26
    %s29 = ssub.s32 %s16, %s28
    %s30 = ssub.s32 %s17, %s24
    %s31 = sor.u32 %s29, %s30
    %p32 = scmp.eq.s32.totalorder %s31, 0
    %s34 = sadd.s32 %s33, 1
    %s35 = scalar_select %p32, %s33, %s34
    %p38 = pneg %p32
    %p39 = scmp.eq.s32.totalorder %s9, 1
    %p40 = por %p38, %p39
    %p41 = scmp.ne.s32.totalorder %s33, %s36
    %p42 = scmp.eq.s32.totalorder %s9, 0
    %p43 = por %p41, %p42
    %p44 = scmp.ne.s32.totalorder %s33, %s36
    %p45 = scmp.eq.s32.totalorder %s14, 1
    %p46 = por %p44, %p45
    %p47 = scmp.ne.s32.totalorder %s36, %s37
    %p48 = scmp.eq.s32.totalorder %s14, 0
    %p49 = por %p47, %p48
    %p50 = scmp.ne.s32.totalorder %s36, %s37
    %p51 = scmp.eq.s32.totalorder %s15, 1
    %p52 = por %p50, %p51
    %p54 = scmp.ne.s32.totalorder %s37, %s53
    %p55 = scmp.eq.s32.totalorder %s15, 0
    %p56 = por %p54, %p55
    %s58 = sadd.s32 %s57, 1
    %p61 = scmp.eq.s32.totalorder %s9, 1
    %p62 = scmp.ne.s32.totalorder %s57, %s59
    %p63 = scmp.eq.s32.totalorder %s9, 0
    %p64 = por %p62, %p63
    %p65 = scmp.ne.s32.totalorder %s57, %s59
    %p66 = scmp.eq.s32.totalorder %s14, 1
    %p67 = por %p65, %p66
    %p68 = scmp.ne.s32.totalorder %s59, %s60
    %p69 = scmp.eq.s32.totalorder %s14, 0
    %p70 = por %p68, %p69
    %p71 = scmp.ne.s32.totalorder %s59, %s60
    %p72 = scmp.eq.s32.totalorder %s15, 1
    %p73 = por %p71, %p72
    %p75 = scmp.ne.s32.totalorder %s60, %s74
    %p76 = scmp.eq.s32.totalorder %s15, 0
    %p77 = por %p75, %p76
    %s79 = sadd.s32 %s78, 1
    %p82 = scmp.eq.s32.totalorder %s9, 1
    %p83 = scmp.ne.s32.totalorder %s78, %s80
    %p84 = scmp.eq.s32.totalorder %s9, 0
    %p85 = por %p83, %p84
    %p86 = scmp.ne.s32.totalorder %s78, %s80
    %p87 = scmp.eq.s32.totalorder %s14, 1
    %p88 = por %p86, %p87
    %p89 = scmp.ne.s32.totalorder %s80, %s81
    %p90 = scmp.eq.s32.totalorder %s14, 0
    %p91 = por %p89, %p90
    %p92 = scmp.ne.s32.totalorder %s80, %s81
    %p93 = scmp.eq.s32.totalorder %s15, 1
    %p94 = por %p92, %p93
    %p96 = scmp.ne.s32.totalorder %s81, %s95
    %p97 = scmp.eq.s32.totalorder %s15, 0
    %p98 = por %p96, %p97
    %s99 = ssub.s32 %s16, %s28
    %s100 = ssub.s32 %s17, %s24
    %s101 = sor.u32 %s99, %s100
    %p102 = scmp.eq.s32.totalorder %s101, 0
    %s104 = sadd.s32 %s103, 1
    %s105 = scalar_select %p102, %s103, %s104
    %p108 = pneg %p102
    %p109 = scmp.eq.s32.totalorder %s9, 1
    %p110 = por %p108, %p109
    %p111 = scmp.ne.s32.totalorder %s103, %s106
    %p112 = scmp.eq.s32.totalorder %s9, 0
    %p113 = por %p111, %p112
    %p114 = scmp.ne.s32.totalorder %s103, %s106
    %p115 = scmp.eq.s32.totalorder %s14, 1
    %p116 = por %p114, %p115
    %p117 = scmp.ne.s32.totalorder %s106, %s107
    %p118 = scmp.eq.s32.totalorder %s14, 0
    %p119 = por %p117, %p118
    %p120 = scmp.ne.s32.totalorder %s106, %s107
    %p121 = scmp.eq.s32.totalorder %s15, 1
    %p122 = por %p120, %p121
    %p124 = scmp.ne.s32.totalorder %s107, %s123
    %p125 = scmp.eq.s32.totalorder %s15, 0
    %p126 = por %p124, %p125
    %p127 = scmp.le.s32.totalorder 1, %s9
    %p128 = scmp.lt.s32.totalorder %s9, 3
    %p129 = pnand %p127, %p128
    %p130 = pneg %p129
    // Predicated region
    $region9: #{resblock_forward.6} parent=5 // pred_check
      _
    $region10: #{resblock_forward.6} parent=5 // pred_check_branch
      %132 = sbr.rel (%p129) target = $region12
    $region11: #{resblock_forward.6} parent=5 // pred_region
      %s133 = ssub.s32 %s9, 1
      // Predicated region
      $region13: #{resblock_forward.6} parent=11 // pred_check
        %p134 = pneg %p70
      $region14: #{resblock_forward.6} parent=11 // pred_check_branch
        %136 = sbr.rel (%p134) target = $region16
      $region15: #{resblock_forward.6} parent=11 // pred_region
        _
      $region16: #{resblock_forward.6} parent=11 // pred_fallthru
        _
      // Predicated region
      $region17: #{resblock_forward.6} parent=11 // pred_check
        %p137 = pneg %p91
      $region18: #{resblock_forward.6} parent=11 // pred_check_branch
        %139 = sbr.rel (%p137) target = $region20
      $region19: #{resblock_forward.6} parent=11 // pred_region
        _
      $region20: #{resblock_forward.6} parent=11 // pred_fallthru
        _
    $region12: #{resblock_forward.6} parent=5 // pred_fallthru
      _
    %p140 = scmp.lt.s32.totalorder %s9, 2
    // Predicated region
    $region21: #{resblock_forward.6} parent=5 // pred_check
      %p141 = pneg %p140
    $region22: #{resblock_forward.6} parent=5 // pred_check_branch
      %143 = sbr.rel (%p141) target = $region24
    $region23: #{resblock_forward.6} parent=5 // pred_region
      // Predicated region
      $region25: #{resblock_forward.6} parent=23 // pred_check
        %p144 = pneg %p43
      $region26: #{resblock_forward.6} parent=23 // pred_check_branch
        %146 = sbr.rel (%p144) target = $region28
      $region27: #{resblock_forward.6} parent=23 // pred_region
        %s147 = smul.u32 8, %s17
        %p148 = scmp.lt.s32.totalorder %s16, 1
        %s149 = scalar_select %p148, %s16, 1
        %p150 = scmp.lt.s32.totalorder %s147, 7
        %s151 = scalar_select %p150, %s147, 7
        %s152 = smul.addr %s149, 8
        %s153 = sadd.s32 %s151, %s152
        %s154 = smul.addr %s153, 4
        %s155 = scalar_lea.vmem %s0, %s154
        %s156 = smul.u32 8, %s17
      $region28: #{resblock_forward.6} parent=23 // pred_fallthru
        _
    $region24: #{resblock_forward.6} parent=5 // pred_fallthru
      _
    %p157 = scmp.le.s32.totalorder 1, %s9
    %p158 = scmp.lt.s32.totalorder %s9, 3
    %p159 = pnand %p157, %p158
    %p160 = pneg %p159
    // Predicated region
    $region29: #{resblock_forward.6} parent=5 // pred_check
      _
    $region30: #{resblock_forward.6} parent=5 // pred_check_branch
      %162 = sbr.rel (%p159) target = $region32
    $region31: #{resblock_forward.6} parent=5 // pred_region
      %s163 = ssub.s32 %s9, 1
      %s164 = smul.u32 8, %s19
      %p165 = scmp.lt.s32.totalorder %s18, 1
      %s166 = scalar_select %p165, %s18, 1
      %p167 = scmp.lt.s32.totalorder %s164, 7
      %s168 = scalar_select %p167, %s164, 7
      %s169 = smul.addr %s166, 8
      %s170 = sadd.s32 %s168, %s169
      %s171 = smul.addr %s170, 4
      %s172 = scalar_lea.vmem %s0, %s171
      %p173 = pneg %p49
      %p174 = pneg %p46
      %p175 = pneg %p70
      %p176 = pneg %p67
      %p177 = pneg %p91
      %p178 = pneg %p88
      %p179 = pneg %p119
      %p180 = pneg %p116
      %s181 = smul.u32 8, %s19
      %p182 = scmp.lt.s32.totalorder %s18, 1
      %s183 = scalar_select %p182, %s18, 1
      %p184 = scmp.lt.s32.totalorder %s181, 7
      %s185 = scalar_select %p184, %s181, 7
      %s186 = smul.addr %s183, 8
      %s187 = sadd.s32 %s185, %s186
      %s188 = smul.addr %s187, 4
      %s189 = scalar_lea.vmem %s3, %s188
      %s190 = smul.u32 8, %s19
      %p191 = scmp.lt.s32.totalorder %s18, 1
      %s192 = scalar_select %p191, %s18, 1
      %p193 = scmp.lt.s32.totalorder %s190, 7
      %s194 = scalar_select %p193, %s190, 7
      %s195 = smul.addr %s192, 8
      %s196 = sadd.s32 %s194, %s195
      %s197 = smul.addr %s196, 4
      %s198 = scalar_lea.vmem %s0, %s197
      %s199 = smul.u32 8, %s19
      %s200 = smul.u32 8, %s19
      %p201 = scmp.lt.s32.totalorder %s18, 1
      %s202 = scalar_select %p201, %s18, 1
      %p203 = scmp.lt.s32.totalorder %s200, 7
      %s204 = scalar_select %p203, %s200, 7
      %s205 = smul.addr %s202, 8
      %s206 = sadd.s32 %s204, %s205
      %s207 = smul.addr %s206, 4
      %s208 = scalar_lea.vmem %s3, %s207
      %s209 = smul.u32 8, %s19
      %v210 = vld [vmem:[%s198] sm:$0xf]
      %v211 = vld [vmem:[%s198 + $0x4] sm:$0xf]
      %v212 = vld [vmem:[%s198 + $0x8] sm:$0xf]
      %v213 = vld [vmem:[%s198 + $0xc] sm:$0xf]
      %v214 = vld [vmem:[%s198 + $0x10] sm:$0xf]
      %v215 = vld [vmem:[%s198 + $0x14] sm:$0xf]
      %v216 = vld [vmem:[%s198 + $0x18] sm:$0xf]
      %v217 = vld [vmem:[%s198 + $0x1c] sm:$0xf]
      %v218 = vunpack.c.l.bf16 %v210
      %v219 = vunpack.c.l.bf16 %v211
      %v220 = vunpack.c.l.bf16 %v212
      %v221 = vunpack.c.l.bf16 %v213
      %v222 = vunpack.c.l.bf16 %v214
      %v223 = vunpack.c.l.bf16 %v215
      %v224 = vunpack.c.l.bf16 %v216
      %v225 = vunpack.c.l.bf16 %v217
      %v226 = vld [vmem:[%s1] sm:$0x1]
      %v228 = vlaneseq
      %v229 = vshrl.u32 %v228, 7
      %v230 = vsub.s32 0, %v229
      %v231 = vrot.slane %v226, %v230
      %v233 = vmul.f32 %v218, %v231
      %v234 = vmul.f32 %v219, %v231
      %v235 = vmul.f32 %v220, %v231
      %v236 = vmul.f32 %v221, %v231
      %v237 = vmul.f32 %v222, %v231
      %v238 = vmul.f32 %v223, %v231
      %v239 = vmul.f32 %v224, %v231
      %v240 = vmul.f32 %v225, %v231
      %v241 = vld [vmem:[%s2] sm:$0x1]
      %v243 = vlaneseq
      %v244 = vshrl.u32 %v243, 7
      %v245 = vsub.s32 0, %v244
      %v246 = vrot.slane %v241, %v245
      %v248 = vadd.f32 %v233, %v246
      %v249 = vadd.f32 %v234, %v246
      %v250 = vadd.f32 %v235, %v246
      %v251 = vadd.f32 %v236, %v246
      %v252 = vadd.f32 %v237, %v246
      %v253 = vadd.f32 %v238, %v246
      %v254 = vadd.f32 %v239, %v246
      %v255 = vadd.f32 %v240, %v246
      %v256 = vmax.f32 %v248, 0.0
      %v257 = vmax.f32 %v249, 0.0
      %v258 = vmax.f32 %v250, 0.0
      %v259 = vmax.f32 %v251, 0.0
      %v260 = vmax.f32 %v252, 0.0
      %v261 = vmax.f32 %v253, 0.0
      %v262 = vmax.f32 %v254, 0.0
      %v263 = vmax.f32 %v255, 0.0
      %v264 = vpack.c.bf16 %v256, %v256
      %v265 = vpack.c.bf16 %v257, %v257
      %v266 = vpack.c.bf16 %v258, %v258
      %v267 = vpack.c.bf16 %v259, %v259
      %v268 = vpack.c.bf16 %v260, %v260
      %v269 = vpack.c.bf16 %v261, %v261
      %v270 = vpack.c.bf16 %v262, %v262
      %v271 = vpack.c.bf16 %v263, %v263
      %272 = vst [vmem:[%s208] sm:$0xf] %v264
      %273 = vst [vmem:[%s208 + $0x4] sm:$0xf] %v265
      %274 = vst [vmem:[%s208 + $0x8] sm:$0xf] %v266
      %275 = vst [vmem:[%s208 + $0xc] sm:$0xf] %v267
      %276 = vst [vmem:[%s208 + $0x10] sm:$0xf] %v268
      %277 = vst [vmem:[%s208 + $0x14] sm:$0xf] %v269
      %278 = vst [vmem:[%s208 + $0x18] sm:$0xf] %v270
      %279 = vst [vmem:[%s208 + $0x1c] sm:$0xf] %v271
      %s280 = smul.u32 8, %s19
      %p281 = scmp.lt.s32.totalorder %s18, 1
      %s282 = scalar_select %p281, %s18, 1
      %p283 = scmp.lt.s32.totalorder %s280, 7
      %s284 = scalar_select %p283, %s280, 7
      %s285 = smul.addr %s282, 8
      %s286 = sadd.s32 %s284, %s285
      %s287 = smul.addr %s286, 4
      %s288 = scalar_lea.vmem %s3, %s287
      // Predicated region
      $region33: #{resblock_forward.6} parent=31 // pred_check
        %p289 = pneg %p116
      $region34: #{resblock_forward.6} parent=31 // pred_check_branch
        %291 = sbr.rel (%p289) target = $region36
      $region35: #{resblock_forward.6} parent=31 // pred_region
        %s292 = smul.u32 8, %s19
      $region36: #{resblock_forward.6} parent=31 // pred_fallthru
        _
    $region32: #{resblock_forward.6} parent=5 // pred_fallthru
      _
    %p293 = scmp.le.s32.totalorder 2, %s9
    // Predicated region
    $region37: #{resblock_forward.6} parent=5 // pred_check
      %p294 = pneg %p293
    $region38: #{resblock_forward.6} parent=5 // pred_check_branch
      %296 = sbr.rel (%p294) target = $region40
    $region39: #{resblock_forward.6} parent=5 // pred_region
      %s297 = ssub.s32 %s9, 2
      // Predicated region
      $region41: #{resblock_forward.6} parent=39 // pred_check
        %p298 = pneg %p122
      $region42: #{resblock_forward.6} parent=39 // pred_check_branch
        %300 = sbr.rel (%p298) target = $region44
      $region43: #{resblock_forward.6} parent=39 // pred_region
        %s301 = smul.u32 8, %s21
        %p302 = scmp.lt.s32.totalorder %s20, 1
        %s303 = scalar_select %p302, %s20, 1
        %p304 = scmp.lt.s32.totalorder %s301, 7
        %s305 = scalar_select %p304, %s301, 7
        %s306 = smul.addr %s303, 8
        %s307 = sadd.s32 %s305, %s306
        %s308 = smul.addr %s307, 4
        %s309 = scalar_lea.vmem %s3, %s308
      $region44: #{resblock_forward.6} parent=39 // pred_fallthru
        _
    $region40: #{resblock_forward.6} parent=5 // pred_fallthru
      _
  $region6: #{resblock_forward.6} parent=0 // loop_footer
    %s13 = sadd.s32 1, %s9
  $region7: #{resblock_forward.6} parent=0 // loop_footer_branch
    %8 = sbr.rel target = $region3
  $region8: #{resblock_forward.6} parent=0 // loop_exit
    _

// kernel: resblock_forward.8
$region0: #{resblock_forward.8}
  #allocation0 [shape = 'u32[]', space=smem, size = 0x4, offset = 0x4, fixed_abs, tag = 'smem constant byte address 0x4 - core index']
  #allocation1 [shape = 'u32[144,128]{1,0:T(1,128)}', space=vmem, size = 0x12000, scoped, tag = 'internal scratch']
  %s0 = inlined_call_operand.vmem [shape: bf16[2,8,8,128], index: 0, kind: input, shape index: {}]
  %s1 = inlined_call_operand.vmem [shape: bf16[1,128,128], index: 1, kind: input, shape index: {}]
  %s2 = inlined_call_operand.vmem [shape: f32[1,128], index: 2, kind: input, shape index: {}]
  %s3 = inlined_call_operand.vmem [shape: bf16[2,8,8,128], index: 3, kind: output, shape index: {0}]
  %s4 = inlined_call_operand.vmem [shape: f32[2,1,2,128], index: 4, kind: output, shape index: {1}]
  %5 = xla_tuple %s3, %s4
  %s6 = sld [smem:[#allocation0]]
  $region53: #{resblock_forward.8} parent=0
    _
  %s8 = ssub.s32 1, %s6
  %s9 = scalar_select 0, %s8, %s6
  loop: start=0, step=1, limit=4
  $region2: #{resblock_forward.8} parent=0 // loop_pre_header
    _
  $region3: #{resblock_forward.8} parent=0 // loop_header
    %s11 = sphi 0, %s15
    %p12 = scmp.ge.s32.totalorder %s11, 4
    %s18 = sphi 0, %s30
    %s19 = sphi 0, %s26
    %s20 = sphi 0, %s18
    %s21 = sphi 0, %s19
    %s22 = sphi 0, %s20
    %s23 = sphi 0, %s21
    %s33 = sphi 0, %s35
    %s36 = sphi 0, %s33
    %s37 = sphi 0, %s36
    %s53 = sphi 0, %s37
    %s57 = sphi 0, %s57
    %s59 = sphi 0, %s57
    %s60 = sphi 0, %s59
    %s74 = sphi 0, %s60
    %s78 = sphi 0, %s78
    %s80 = sphi 0, %s78
    %s81 = sphi 0, %s80
    %s95 = sphi 0, %s81
    %s103 = sphi 0, %s105
    %s106 = sphi 0, %s103
    %s107 = sphi 0, %s106
    %s123 = sphi 0, %s107
    %s131 = sphi 0, %s133
    %s134 = sphi 0, %s131
    %s135 = sphi 0, %s134
    %s151 = sphi 0, %s135
  $region4: #{resblock_forward.8} parent=0 // loop_header_branch
    %14 = sbr.rel (%p12) target = $region8
  $region5: #{resblock_forward.8} parent=0 // loop_body
    %s16 = ssub.s32 %s11, 1
    %s17 = ssub.s32 %s11, 2
    %s24 = sadd.s32 1, %s19
    %p25 = scmp.ge.s32.totalorder %s24, 1
    %s26 = scalar_select %p25, 0, %s24
    %s27 = sadd.s32 1, %s18
    %s28 = scalar_select %p25, %s27, %s18
    %p29 = scmp.ge.s32.totalorder %s28, 2
    %s30 = scalar_select %p29, 0, %s28
    %s31 = ssub.s32 %s18, %s30
    %p32 = scmp.eq.s32.totalorder %s31, 0
    %s34 = sadd.s32 %s33, 1
    %s35 = scalar_select %p32, %s33, %s34
    %p38 = pneg %p32
    %p39 = scmp.eq.s32.totalorder %s11, 1
    %p40 = por %p38, %p39
    %p41 = scmp.ne.s32.totalorder %s33, %s36
    %p42 = scmp.eq.s32.totalorder %s11, 0
    %p43 = por %p41, %p42
    %p44 = scmp.ne.s32.totalorder %s33, %s36
    %p45 = scmp.eq.s32.totalorder %s16, 1
    %p46 = por %p44, %p45
    %p47 = scmp.ne.s32.totalorder %s36, %s37
    %p48 = scmp.eq.s32.totalorder %s16, 0
    %p49 = por %p47, %p48
    %p50 = scmp.ne.s32.totalorder %s36, %s37
    %p51 = scmp.eq.s32.totalorder %s17, 1
    %p52 = por %p50, %p51
    %p54 = scmp.ne.s32.totalorder %s37, %s53
    %p55 = scmp.eq.s32.totalorder %s17, 0
    %p56 = por %p54, %p55
    %s58 = sadd.s32 %s57, 1
    %p61 = scmp.eq.s32.totalorder %s11, 1
    %p62 = scmp.ne.s32.totalorder %s57, %s59
    %p63 = scmp.eq.s32.totalorder %s11, 0
    %p64 = por %p62, %p63
    %p65 = scmp.ne.s32.totalorder %s57, %s59
    %p66 = scmp.eq.s32.totalorder %s16, 1
    %p67 = por %p65, %p66
    %p68 = scmp.ne.s32.totalorder %s59, %s60
    %p69 = scmp.eq.s32.totalorder %s16, 0
    %p70 = por %p68, %p69
    %p71 = scmp.ne.s32.totalorder %s59, %s60
    %p72 = scmp.eq.s32.totalorder %s17, 1
    %p73 = por %p71, %p72
    %p75 = scmp.ne.s32.totalorder %s60, %s74
    %p76 = scmp.eq.s32.totalorder %s17, 0
    %p77 = por %p75, %p76
    %s79 = sadd.s32 %s78, 1
    %p82 = scmp.eq.s32.totalorder %s11, 1
    %p83 = scmp.ne.s32.totalorder %s78, %s80
    %p84 = scmp.eq.s32.totalorder %s11, 0
    %p85 = por %p83, %p84
    %p86 = scmp.ne.s32.totalorder %s78, %s80
    %p87 = scmp.eq.s32.totalorder %s16, 1
    %p88 = por %p86, %p87
    %p89 = scmp.ne.s32.totalorder %s80, %s81
    %p90 = scmp.eq.s32.totalorder %s16, 0
    %p91 = por %p89, %p90
    %p92 = scmp.ne.s32.totalorder %s80, %s81
    %p93 = scmp.eq.s32.totalorder %s17, 1
    %p94 = por %p92, %p93
    %p96 = scmp.ne.s32.totalorder %s81, %s95
    %p97 = scmp.eq.s32.totalorder %s17, 0
    %p98 = por %p96, %p97
    %s99 = ssub.s32 %s18, %s30
    %s100 = ssub.s32 %s19, %s26
    %s101 = sor.u32 %s99, %s100
    %p102 = scmp.eq.s32.totalorder %s101, 0
    %s104 = sadd.s32 %s103, 1
    %s105 = scalar_select %p102, %s103, %s104
    %p108 = pneg %p102
    %p109 = scmp.eq.s32.totalorder %s11, 1
    %p110 = por %p108, %p109
    %p111 = scmp.ne.s32.totalorder %s103, %s106
    %p112 = scmp.eq.s32.totalorder %s11, 0
    %p113 = por %p111, %p112
    %p114 = scmp.ne.s32.totalorder %s103, %s106
    %p115 = scmp.eq.s32.totalorder %s16, 1
    %p116 = por %p114, %p115
    %p117 = scmp.ne.s32.totalorder %s106, %s107
    %p118 = scmp.eq.s32.totalorder %s16, 0
    %p119 = por %p117, %p118
    %p120 = scmp.ne.s32.totalorder %s106, %s107
    %p121 = scmp.eq.s32.totalorder %s17, 1
    %p122 = por %p120, %p121
    %p124 = scmp.ne.s32.totalorder %s107, %s123
    %p125 = scmp.eq.s32.totalorder %s17, 0
    %p126 = por %p124, %p125
    %s127 = ssub.s32 %s18, %s30
    %s128 = ssub.s32 %s19, %s26
    %s129 = sor.u32 %s127, %s128
    %p130 = scmp.eq.s32.totalorder %s129, 0
    %s132 = sadd.s32 %s131, 1
    %s133 = scalar_select %p130, %s131, %s132
    %p136 = pneg %p130
    %p137 = scmp.eq.s32.totalorder %s11, 1
    %p138 = por %p136, %p137
    %p139 = scmp.ne.s32.totalorder %s131, %s134
    %p140 = scmp.eq.s32.totalorder %s11, 0
    %p141 = por %p139, %p140
    %p142 = scmp.ne.s32.totalorder %s131, %s134
    %p143 = scmp.eq.s32.totalorder %s16, 1
    %p144 = por %p142, %p143
    %p145 = scmp.ne.s32.totalorder %s134, %s135
    %p146 = scmp.eq.s32.totalorder %s16, 0
    %p147 = por %p145, %p146
    %p148 = scmp.ne.s32.totalorder %s134, %s135
    %p149 = scmp.eq.s32.totalorder %s17, 1
    %p150 = por %p148, %p149
    %p152 = scmp.ne.s32.totalorder %s135, %s151
    %p153 = scmp.eq.s32.totalorder %s17, 0
    %p154 = por %p152, %p153
    %p155 = scmp.le.s32.totalorder 1, %s11
    %p156 = scmp.lt.s32.totalorder %s11, 3
    %p157 = pnand %p155, %p156
    %p158 = pneg %p157
    // Predicated region
    $region9: #{resblock_forward.8} parent=5 // pred_check
      _
    $region10: #{resblock_forward.8} parent=5 // pred_check_branch
      %160 = sbr.rel (%p157) target = $region12
    $region11: #{resblock_forward.8} parent=5 // pred_region
      %s161 = ssub.s32 %s11, 1
      // Predicated region
      $region13: #{resblock_forward.8} parent=11 // pred_check
        %p162 = pneg %p70
      $region14: #{resblock_forward.8} parent=11 // pred_check_branch
        %164 = sbr.rel (%p162) target = $region16
      $region15: #{resblock_forward.8} parent=11 // pred_region
        _
      $region16: #{resblock_forward.8} parent=11 // pred_fallthru
        _
      // Predicated region
      $region17: #{resblock_forward.8} parent=11 // pred_check
        %p165 = pneg %p91
      $region18: #{resblock_forward.8} parent=11 // pred_check_branch
        %167 = sbr.rel (%p165) target = $region20
      $region19: #{resblock_forward.8} parent=11 // pred_region
        _
      $region20: #{resblock_forward.8} parent=11 // pred_fallthru
        _
    $region12: #{resblock_forward.8} parent=5 // pred_fallthru
      _
    %p168 = scmp.lt.s32.totalorder %s11, 2
    // Predicated region
    $region21: #{resblock_forward.8} parent=5 // pred_check
      %p169 = pneg %p168
    $region22: #{resblock_forward.8} parent=5 // pred_check_branch
      %171 = sbr.rel (%p169) target = $region24
    $region23: #{resblock_forward.8} parent=5 // pred_region
      // Predicated region
      $region25: #{resblock_forward.8} parent=23 // pred_check
        %p172 = pneg %p43
      $region26: #{resblock_forward.8} parent=23 // pred_check_branch
        %174 = sbr.rel (%p172) target = $region28
      $region27: #{resblock_forward.8} parent=23 // pred_region
        %p175 = scmp.lt.s32.totalorder %s18, 1
        %s176 = scalar_select %p175, %s18, 1
        %s177 = smul.addr %s176, 8
        %s178 = smul.addr %s177, 4
        %s179 = scalar_lea.vmem %s0, %s178
      $region28: #{resblock_forward.8} parent=23 // pred_fallthru
        _
    $region24: #{resblock_forward.8} parent=5 // pred_fallthru
      _
    %p180 = scmp.le.s32.totalorder 1, %s11
    %p181 = scmp.lt.s32.totalorder %s11, 3
    %p182 = pnand %p180, %p181
    %p183 = pneg %p182
    // Predicated region
    $region29: #{resblock_forward.8} parent=5 // pred_check
      _
    $region30: #{resblock_forward.8} parent=5 // pred_check_branch
      %185 = sbr.rel (%p182) target = $region32
    $region31: #{resblock_forward.8} parent=5 // pred_region
      %s186 = ssub.s32 %s11, 1
      %p187 = scmp.lt.s32.totalorder %s20, 1
      %s188 = scalar_select %p187, %s20, 1
      %s189 = smul.addr %s188, 8
      %s190 = smul.addr %s189, 4
      %s191 = scalar_lea.vmem %s0, %s190
      %p192 = pneg %p49
      %p193 = pneg %p46
      %p194 = pneg %p70
      %p195 = pneg %p67
      %p196 = pneg %p91
      %p197 = pneg %p88
      %p198 = pneg %p119
      %p199 = pneg %p116
      %s200 = smul.u32 8, %s21
      %p201 = scmp.lt.s32.totalorder %s20, 1
      %s202 = scalar_select %p201, %s20, 1
      %p203 = scmp.lt.s32.totalorder %s200, 7
      %s204 = scalar_select %p203, %s200, 7
      %s205 = smul.addr %s202, 8
      %s206 = sadd.s32 %s204, %s205
      %s207 = smul.addr %s206, 4
      %s208 = scalar_lea.vmem %s3, %s207
      %p209 = pneg %p147
      %p210 = pneg %p144
      %p211 = scmp.lt.s32.totalorder %s20, 1
      %s212 = scalar_select %p211, %s20, 1
      %p213 = scmp.lt.s32.totalorder %s21, 0
      %s214 = scalar_select %p213, %s21, 0
      %s215 = sadd.s32 %s214, %s212
      %s216 = smul.addr %s215, 2
      %s217 = scalar_lea.vmem %s4, %s216
      %p218 = scmp.lt.s32.totalorder %s20, 1
      %s219 = scalar_select %p218, %s20, 1
      %s220 = smul.addr %s219, 8
      %s221 = smul.addr %s220, 4
      %s222 = scalar_lea.vmem %s0, %s221
      %s223 = smul.u32 8, %s21
      %p224 = scmp.lt.s32.totalorder %s20, 1
      %s225 = scalar_select %p224, %s20, 1
      %p226 = scmp.lt.s32.totalorder %s223, 7
      %s227 = scalar_select %p226, %s223, 7
      %s228 = smul.addr %s225, 8
      %s229 = sadd.s32 %s227, %s228
      %s230 = smul.addr %s229, 4
      %s231 = scalar_lea.vmem %s3, %s230
      %s232 = smul.u32 8, %s21
      %p233 = scmp.lt.s32.totalorder %s20, 1
      %s234 = scalar_select %p233, %s20, 1
      %p235 = scmp.lt.s32.totalorder %s21, 0
      %s236 = scalar_select %p235, %s21, 0
      %s237 = sadd.s32 %s236, %s234
      %s238 = smul.addr %s237, 2
      %s239 = scalar_lea.vmem %s4, %s238
      %s241 = smul.u32 %s21, 8
      %s242 = smul.addr %s241, 4
      %s243 = scalar_lea.vmem %s222, %s242
      %v244 = vld [vmem:[%s243] sm:$0xf]
      %v245 = vld [vmem:[%s243 + $0x4] sm:$0xf]
      %v246 = vld [vmem:[%s243 + $0x8] sm:$0xf]
      %v247 = vld [vmem:[%s243 + $0xc] sm:$0xf]
      %v248 = vld [vmem:[%s243 + $0x10] sm:$0xf]
      %v249 = vld [vmem:[%s243 + $0x14] sm:$0xf]
      %v250 = vld [vmem:[%s243 + $0x18] sm:$0xf]
      %v251 = vld [vmem:[%s243 + $0x1c] sm:$0xf]
      %v252 = vld [vmem:[%s1] sm:$0xf]
      %v253 = vld [vmem:[%s1 + $0x4] sm:$0xf]
      %v254 = vld [vmem:[%s1 + $0x8] sm:$0xf]
      %v255 = vld [vmem:[%s1 + $0xc] sm:$0xf]
      %v256 = vld [vmem:[%s1 + $0x10] sm:$0xf]
      %v257 = vld [vmem:[%s1 + $0x14] sm:$0xf]
      %v258 = vld [vmem:[%s1 + $0x18] sm:$0xf]
      %v259 = vld [vmem:[%s1 + $0x1c] sm:$0xf]
      %v260 = vld [vmem:[%s1 + $0x20] sm:$0xf]
      %v261 = vld [vmem:[%s1 + $0x24] sm:$0xf]
      %v262 = vld [vmem:[%s1 + $0x28] sm:$0xf]
      %v263 = vld [vmem:[%s1 + $0x2c] sm:$0xf]
      %v264 = vld [vmem:[%s1 + $0x30] sm:$0xf]
      %v265 = vld [vmem:[%s1 + $0x34] sm:$0xf]
      %v266 = vld [vmem:[%s1 + $0x38] sm:$0xf]
      %v267 = vld [vmem:[%s1 + $0x3c] sm:$0xf]
      %v268 = vld [vmem:[%s2] sm:$0x1]
      %v270 = vlaneseq
      %v271 = vshrl.u32 %v270, 7
      %v272 = vsub.s32 0, %v271
      %v273 = vrot.slane %v268, %v272
      %v283 = vunpack.c.l.b16 %v244
      %v284 = vunpack.c.l.b16 %v245
      %v285 = vunpack.c.l.b16 %v246
      %v286 = vunpack.c.l.b16 %v247
      %v287 = vunpack.c.l.b16 %v248
      %v288 = vunpack.c.l.b16 %v249
      %v289 = vunpack.c.l.b16 %v250
      %v290 = vunpack.c.l.b16 %v251
      %v291 = vpack.c.b16 %v284, %v283
      %v292 = vpack.c.b16 %v286, %v285
      %v293 = vpack.c.b16 %v288, %v287
      %v294 = vpack.c.b16 %v290, %v289
      %v315 = vunpack.c.l.b16 %v252
      %v316 = vunpack.c.l.b16 %v253
      %v317 = vunpack.c.l.b16 %v254
      %v318 = vunpack.c.l.b16 %v255
      %v319 = vunpack.c.l.b16 %v256
      %v320 = vunpack.c.l.b16 %v257
      %v321 = vunpack.c.l.b16 %v258
      %v322 = vunpack.c.l.b16 %v259
      %v323 = vunpack.c.l.b16 %v260
      %v324 = vunpack.c.l.b16 %v261
      %v325 = vunpack.c.l.b16 %v262
      %v326 = vunpack.c.l.b16 %v263
      %v327 = vunpack.c.l.b16 %v264
      %v328 = vunpack.c.l.b16 %v265
      %v329 = vunpack.c.l.b16 %v266
      %v330 = vunpack.c.l.b16 %v267
      %v331 = vpack.c.b16 %v316, %v315
      %v332 = vpack.c.b16 %v318, %v317
      %v333 = vpack.c.b16 %v320, %v319
      %v334 = vpack.c.b16 %v322, %v321
      %v335 = vpack.c.b16 %v324, %v323
      %v336 = vpack.c.b16 %v326, %v325
      %v337 = vpack.c.b16 %v328, %v327
      %v338 = vpack.c.b16 %v330, %v329
      %347 = vmatprep.subr.bf16.mxu0 0
      %348 = vmatpush1.bf16.msra.mxu0 %v331
      %349 = vmatprep.subr.bf16.mxu0 0
      %350 = vmatpush1.bf16.msra.mxu0 %v332
      %351 = vmatprep.subr.bf16.mxu0 0
      %352 = vmatpush1.bf16.msra.mxu0 %v333
      %353 = vmatprep.subr.bf16.mxu0 0
      %354 = vmatpush1.bf16.msra.mxu0 %v334
      %355 = vmatprep.subr.bf16.mxu0 0
      %356 = vmatpush1.bf16.msra.mxu0 %v335
      %357 = vmatprep.subr.bf16.mxu0 0
      %358 = vmatpush1.bf16.msra.mxu0 %v336
      %359 = vmatprep.subr.bf16.mxu0 0
      %360 = vmatpush1.bf16.msra.mxu0 %v337
      %361 = vmatprep.subr.bf16.mxu0 0
      %362 = vmatpush1.bf16.msra.mxu0 %v338
      %363 = vmatprep.subr.bf16.mxu0 0
      %364 = vmatpush1.bf16.msra.mxu0 0
      %365 = vmatprep.subr.bf16.mxu0 0
      %366 = vmatpush1.bf16.msra.mxu0 0
      %367 = vmatprep.subr.bf16.mxu0 0
      %368 = vmatpush1.bf16.msra.mxu0 0
      %369 = vmatprep.subr.bf16.mxu0 0
      %370 = vmatpush1.bf16.msra.mxu0 0
      %371 = vmatprep.subr.bf16.mxu0 0
      %372 = vmatpush1.bf16.msra.mxu0 0
      %373 = vmatprep.subr.bf16.mxu0 0
      %374 = vmatpush1.bf16.msra.mxu0 0
      %375 = vmatprep.subr.bf16.mxu0 0
      %376 = vmatpush1.bf16.msra.mxu0 0
      %377 = vmatprep.subr.bf16.mxu0 0
      %378 = vmatpush1.bf16.msra.mxu0 0
      %379 = vmatprep.mubr.bf16.mxu0 0
      %380 = vmatmul.mubr.bf16.gmra.mrb[0].mxu0 %v291
      %v381 = vpop.f32.mrb[0].mxu0
      %v382 = vadd.f32 %v273, %v381
      %v383 = vpop.f32.mrb[0].mxu0
      %v384 = vpop.f32.mrb[0].mxu0
      %v385 = vadd.f32 %v273, %v384
      %v386 = vpop.f32.mrb[0].mxu0
      %387 = vmatprep.mubr.bf16.mxu0 0
      %388 = vmatmul.mubr.bf16.gmra.mrb[0].mxu0 %v292
      %v389 = vpop.f32.mrb[0].mxu0
      %v390 = vadd.f32 %v273, %v389
      %v391 = vpop.f32.mrb[0].mxu0
      %v392 = vpop.f32.mrb[0].mxu0
      %v393 = vadd.f32 %v273, %v392
      %v394 = vpop.f32.mrb[0].mxu0
      %395 = vmatprep.mubr.bf16.mxu0 0
      %396 = vmatmul.mubr.bf16.gmra.mrb[0].mxu0 %v293
      %v397 = vpop.f32.mrb[0].mxu0
      %v398 = vadd.f32 %v273, %v397
      %v399 = vpop.f32.mrb[0].mxu0
      %v400 = vpop.f32.mrb[0].mxu0
      %v401 = vadd.f32 %v273, %v400
      %v402 = vpop.f32.mrb[0].mxu0
      %403 = vmatprep.mubr.bf16.mxu0 0
      %404 = vmatmul.mubr.bf16.gmra.mrb[0].mxu0 %v294
      %v405 = vpop.f32.mrb[0].mxu0
      %v406 = vadd.f32 %v273, %v405
      %v407 = vpop.f32.mrb[0].mxu0
      %v408 = vpop.f32.mrb[0].mxu0
      %v409 = vadd.f32 %v273, %v408
      %v410 = vpop.f32.mrb[0].mxu0
      %411 = vdwg.mxu0
      %v412 = vadd.f32 %v382, %v385
      %v413 = vadd.f32 %v412, %v390
      %v414 = vadd.f32 %v413, %v393
      %v415 = vadd.f32 %v414, %v398
      %v416 = vadd.f32 %v415, %v401
      %v417 = vadd.f32 %v416, %v406
      %v418 = vadd.f32 %v417, %v409
      %v419 = vrot.slane %v418, 4
      %v420 = vadd.f32 %v418, %v419
      %v421 = vrot.slane %v420, 2
      %v422 = vadd.f32 %v420, %v421
      %v423 = vrot.slane %v422, 1
      %v424 = vadd.f32 %v422, %v423
      %425 = vst [vmem:[%s239] sm:$0x1] %v424
      %v426 = vmul.f32 %v382, %v382
      %v427 = vmul.f32 %v385, %v385
      %v428 = vmul.f32 %v390, %v390
      %v429 = vmul.f32 %v393, %v393
      %v430 = vmul.f32 %v398, %v398
      %v431 = vmul.f32 %v401, %v401
      %v432 = vmul.f32 %v406, %v406
      %v433 = vmul.f32 %v409, %v409
      %v434 = vadd.f32 %v426, %v427
      %v435 = vadd.f32 %v434, %v428
      %v436 = vadd.f32 %v435, %v429
      %v437 = vadd.f32 %v436, %v430
      %v438 = vadd.f32 %v437, %v431
      %v439 = vadd.f32 %v438, %v432
      %v440 = vadd.f32 %v439, %v433
      %v441 = vrot.slane %v440, 4
      %v442 = vadd.f32 %v440, %v441
      %v443 = vrot.slane %v442, 2
      %v444 = vadd.f32 %v442, %v443
      %v445 = vrot.slane %v444, 1
      %v446 = vadd.f32 %v444, %v445
      %447 = vst [vmem:[%s239 + $0x1] sm:$0x1] %v446
      %v448 = vpack.c.bf16 %v382, %v382
      %v449 = vpack.c.bf16 %v385, %v385
      %v450 = vpack.c.bf16 %v390, %v390
      %v451 = vpack.c.bf16 %v393, %v393
      %v452 = vpack.c.bf16 %v398, %v398
      %v453 = vpack.c.bf16 %v401, %v401
      %v454 = vpack.c.bf16 %v406, %v406
      %v455 = vpack.c.bf16 %v409, %v409
      %456 = vst [vmem:[%s231] sm:$0xf] %v448
      %457 = vst [vmem:[%s231 + $0x4] sm:$0xf] %v449
      %458 = vst [vmem:[%s231 + $0x8] sm:$0xf] %v450
      %459 = vst [vmem:[%s231 + $0xc] sm:$0xf] %v451
      %460 = vst [vmem:[%s231 + $0x10] sm:$0xf] %v452
      %461 = vst [vmem:[%s231 + $0x14] sm:$0xf] %v453
      %462 = vst [vmem:[%s231 + $0x18] sm:$0xf] %v454
      %463 = vst [vmem:[%s231 + $0x1c] sm:$0xf] %v455
      %s464 = smul.u32 8, %s21
      %p465 = scmp.lt.s32.totalorder %s20, 1
      %s466 = scalar_select %p465, %s20, 1
      %p467 = scmp.lt.s32.totalorder %s464, 7
      %s468 = scalar_select %p467, %s464, 7
      %s469 = smul.addr %s466, 8
      %s470 = sadd.s32 %s468, %s469
      %s471 = smul.addr %s470, 4
      %s472 = scalar_lea.vmem %s3, %s471
      %p473 = scmp.lt.s32.totalorder %s20, 1
      %s474 = scalar_select %p473, %s20, 1
      %p475 = scmp.lt.s32.totalorder %s21, 0
      %s476 = scalar_select %p475, %s21, 0
      %s477 = sadd.s32 %s476, %s474
      %s478 = smul.addr %s477, 2
      %s479 = scalar_lea.vmem %s4, %s478
      // Predicated region
      $region33: #{resblock_forward.8} parent=31 // pred_check
        %p480 = pneg %p116
      $region34: #{resblock_forward.8} parent=31 // pred_check_branch
        %482 = sbr.rel (%p480) target = $region36
      $region35: #{resblock_forward.8} parent=31 // pred_region
        %s483 = smul.u32 8, %s21
      $region36: #{resblock_forward.8} parent=31 // pred_fallthru
        _
      // Predicated region
      $region37: #{resblock_forward.8} parent=31 // pred_check
        %p484 = pneg %p144
      $region38: #{resblock_forward.8} parent=31 // pred_check_branch
        %486 = sbr.rel (%p484) target = $region40
      $region39: #{resblock_forward.8} parent=31 // pred_region
        _
      $region40: #{resblock_forward.8} parent=31 // pred_fallthru
        _
    $region32: #{resblock_forward.8} parent=5 // pred_fallthru
      _
    %p487 = scmp.le.s32.totalorder 2, %s11
    // Predicated region
    $region41: #{resblock_forward.8} parent=5 // pred_check
      %p488 = pneg %p487
    $region42: #{resblock_forward.8} parent=5 // pred_check_branch
      %490 = sbr.rel (%p488) target = $region44
    $region43: #{resblock_forward.8} parent=5 // pred_region
      %s491 = ssub.s32 %s11, 2
      // Predicated region
      $region45: #{resblock_forward.8} parent=43 // pred_check
        %p492 = pneg %p122
      $region46: #{resblock_forward.8} parent=43 // pred_check_branch
        %494 = sbr.rel (%p492) target = $region48
      $region47: #{resblock_forward.8} parent=43 // pred_region
        %s495 = smul.u32 8, %s23
        %p496 = scmp.lt.s32.totalorder %s22, 1
        %s497 = scalar_select %p496, %s22, 1
        %p498 = scmp.lt.s32.totalorder %s495, 7
        %s499 = scalar_select %p498, %s495, 7
        %s500 = smul.addr %s497, 8
        %s501 = sadd.s32 %s499, %s500
        %s502 = smul.addr %s501, 4
        %s503 = scalar_lea.vmem %s3, %s502
      $region48: #{resblock_forward.8} parent=43 // pred_fallthru
        _
      // Predicated region
      $region49: #{resblock_forward.8} parent=43 // pred_check
        %p504 = pneg %p150
      $region50: #{resblock_forward.8} parent=43 // pred_check_branch
        %506 = sbr.rel (%p504) target = $region52
      $region51: #{resblock_forward.8} parent=43 // pred_region
        %p507 = scmp.lt.s32.totalorder %s22, 1
        %s508 = scalar_select %p507, %s22, 1
        %p509 = scmp.lt.s32.totalorder %s23, 0
        %s510 = scalar_select %p509, %s23, 0
        %s511 = sadd.s32 %s510, %s508
        %s512 = smul.addr %s511, 2
        %s513 = scalar_lea.vmem %s4, %s512
      $region52: #{resblock_forward.8} parent=43 // pred_fallthru
        _
    $region44: #{resblock_forward.8} parent=5 // pred_fallthru
      _
  $region6: #{resblock_forward.8} parent=0 // loop_footer
    %s15 = sadd.s32 1, %s11
  $region7: #{resblock_forward.8} parent=0 // loop_footer_branch
    %10 = sbr.rel target = $region3
  $region8: #{resblock_forward.8} parent=0 // loop_exit
    _

// kernel: resblock_forward.9
$region0: #{resblock_forward.9}
  #allocation0 [shape = 'u32[]', space=smem, size = 0x4, offset = 0x4, fixed_abs, tag = 'smem constant byte address 0x4 - core index']
  #allocation1 [shape = 'u32[144,128]{1,0:T(1,128)}', space=vmem, size = 0x12000, scoped, tag = 'internal scratch']
  %s0 = inlined_call_operand.vmem [shape: bf16[2,8,8,128], index: 0, kind: input, shape index: {}]
  %s1 = inlined_call_operand.vmem [shape: f32[1,1,128], index: 1, kind: input, shape index: {}]
  %s2 = inlined_call_operand.vmem [shape: f32[1,1,128], index: 2, kind: input, shape index: {}]
  %s3 = inlined_call_operand.vmem [shape: bf16[2,8,8,128], index: 3, kind: input, shape index: {}]
  %s4 = inlined_call_operand.vmem [shape: f32[1,1,128], index: 4, kind: input, shape index: {}]
  %s5 = inlined_call_operand.vmem [shape: f32[1,1,128], index: 5, kind: input, shape index: {}]
  %s6 = inlined_call_operand.vmem [shape: f32[2,8,8,128], index: 6, kind: output, shape index: {}]
  %s7 = sld [smem:[#allocation0]]
  $region57: #{resblock_forward.9} parent=0
    _
  %s9 = ssub.s32 1, %s7
  %s10 = scalar_select 0, %s9, %s7
  loop: start=0, step=1, limit=4
  $region2: #{resblock_forward.9} parent=0 // loop_pre_header
    _
  $region3: #{resblock_forward.9} parent=0 // loop_header
    %s12 = sphi 0, %s16
    %p13 = scmp.ge.s32.totalorder %s12, 4
    %s19 = sphi 0, %s31
    %s20 = sphi 0, %s27
    %s21 = sphi 0, %s19
    %s22 = sphi 0, %s20
    %s23 = sphi 0, %s21
    %s24 = sphi 0, %s22
    %s36 = sphi 0, %s38
    %s39 = sphi 0, %s36
    %s40 = sphi 0, %s39
    %s56 = sphi 0, %s40
    %s60 = sphi 0, %s60
    %s62 = sphi 0, %s60
    %s63 = sphi 0, %s62
    %s77 = sphi 0, %s63
    %s81 = sphi 0, %s81
    %s83 = sphi 0, %s81
    %s84 = sphi 0, %s83
    %s98 = sphi 0, %s84
    %s106 = sphi 0, %s108
    %s109 = sphi 0, %s106
    %s110 = sphi 0, %s109
    %s126 = sphi 0, %s110
    %s130 = sphi 0, %s130
    %s132 = sphi 0, %s130
    %s133 = sphi 0, %s132
    %s147 = sphi 0, %s133
    %s151 = sphi 0, %s151
    %s153 = sphi 0, %s151
    %s154 = sphi 0, %s153
    %s168 = sphi 0, %s154
    %s176 = sphi 0, %s178
    %s179 = sphi 0, %s176
    %s180 = sphi 0, %s179
    %s196 = sphi 0, %s180
  $region4: #{resblock_forward.9} parent=0 // loop_header_branch
    %15 = sbr.rel (%p13) target = $region8
  $region5: #{resblock_forward.9} parent=0 // loop_body
    %s17 = ssub.s32 %s12, 1
    %s18 = ssub.s32 %s12, 2
    %s25 = sadd.s32 1, %s20
    %p26 = scmp.ge.s32.totalorder %s25, 1
    %s27 = scalar_select %p26, 0, %s25
    %s28 = sadd.s32 1, %s19
    %s29 = scalar_select %p26, %s28, %s19
    %p30 = scmp.ge.s32.totalorder %s29, 2
    %s31 = scalar_select %p30, 0, %s29
    %s32 = ssub.s32 %s19, %s31
    %s33 = ssub.s32 %s20, %s27
    %s34 = sor.u32 %s32, %s33
    %p35 = scmp.eq.s32.totalorder %s34, 0
    %s37 = sadd.s32 %s36, 1
    %s38 = scalar_select %p35, %s36, %s37
    %p41 = pneg %p35
    %p42 = scmp.eq.s32.totalorder %s12, 1
    %p43 = por %p41, %p42
    %p44 = scmp.ne.s32.totalorder %s36, %s39
    %p45 = scmp.eq.s32.totalorder %s12, 0
    %p46 = por %p44, %p45
    %p47 = scmp.ne.s32.totalorder %s36, %s39
    %p48 = scmp.eq.s32.totalorder %s17, 1
    %p49 = por %p47, %p48
    %p50 = scmp.ne.s32.totalorder %s39, %s40
    %p51 = scmp.eq.s32.totalorder %s17, 0
    %p52 = por %p50, %p51
    %p53 = scmp.ne.s32.totalorder %s39, %s40
    %p54 = scmp.eq.s32.totalorder %s18, 1
    %p55 = por %p53, %p54
    %p57 = scmp.ne.s32.totalorder %s40, %s56
    %p58 = scmp.eq.s32.totalorder %s18, 0
    %p59 = por %p57, %p58
    %s61 = sadd.s32 %s60, 1
    %p64 = scmp.eq.s32.totalorder %s12, 1
    %p65 = scmp.ne.s32.totalorder %s60, %s62
    %p66 = scmp.eq.s32.totalorder %s12, 0
    %p67 = por %p65, %p66
    %p68 = scmp.ne.s32.totalorder %s60, %s62
    %p69 = scmp.eq.s32.totalorder %s17, 1
    %p70 = por %p68, %p69
    %p71 = scmp.ne.s32.totalorder %s62, %s63
    %p72 = scmp.eq.s32.totalorder %s17, 0
    %p73 = por %p71, %p72
    %p74 = scmp.ne.s32.totalorder %s62, %s63
    %p75 = scmp.eq.s32.totalorder %s18, 1
    %p76 = por %p74, %p75
    %p78 = scmp.ne.s32.totalorder %s63, %s77
    %p79 = scmp.eq.s32.totalorder %s18, 0
    %p80 = por %p78, %p79
    %s82 = sadd.s32 %s81, 1
    %p85 = scmp.eq.s32.totalorder %s12, 1
    %p86 = scmp.ne.s32.totalorder %s81, %s83
    %p87 = scmp.eq.s32.totalorder %s12, 0
    %p88 = por %p86, %p87
    %p89 = scmp.ne.s32.totalorder %s81, %s83
    %p90 = scmp.eq.s32.totalorder %s17, 1
    %p91 = por %p89, %p90
    %p92 = scmp.ne.s32.totalorder %s83, %s84
    %p93 = scmp.eq.s32.totalorder %s17, 0
    %p94 = por %p92, %p93
    %p95 = scmp.ne.s32.totalorder %s83, %s84
    %p96 = scmp.eq.s32.totalorder %s18, 1
    %p97 = por %p95, %p96
    %p99 = scmp.ne.s32.totalorder %s84, %s98
    %p100 = scmp.eq.s32.totalorder %s18, 0
    %p101 = por %p99, %p100
    %s102 = ssub.s32 %s19, %s31
    %s103 = ssub.s32 %s20, %s27
    %s104 = sor.u32 %s102, %s103
    %p105 = scmp.eq.s32.totalorder %s104, 0
    %s107 = sadd.s32 %s106, 1
    %s108 = scalar_select %p105, %s106, %s107
    %p111 = pneg %p105
    %p112 = scmp.eq.s32.totalorder %s12, 1
    %p113 = por %p111, %p112
    %p114 = scmp.ne.s32.totalorder %s106, %s109
    %p115 = scmp.eq.s32.totalorder %s12, 0
    %p116 = por %p114, %p115
    %p117 = scmp.ne.s32.totalorder %s106, %s109
    %p118 = scmp.eq.s32.totalorder %s17, 1
    %p119 = por %p117, %p118
    %p120 = scmp.ne.s32.totalorder %s109, %s110
    %p121 = scmp.eq.s32.totalorder %s17, 0
    %p122 = por %p120, %p121
    %p123 = scmp.ne.s32.totalorder %s109, %s110
    %p124 = scmp.eq.s32.totalorder %s18, 1
    %p125 = por %p123, %p124
    %p127 = scmp.ne.s32.totalorder %s110, %s126
    %p128 = scmp.eq.s32.totalorder %s18, 0
    %p129 = por %p127, %p128
    %s131 = sadd.s32 %s130, 1
    %p134 = scmp.eq.s32.totalorder %s12, 1
    %p135 = scmp.ne.s32.totalorder %s130, %s132
    %p136 = scmp.eq.s32.totalorder %s12, 0
    %p137 = por %p135, %p136
    %p138 = scmp.ne.s32.totalorder %s130, %s132
    %p139 = scmp.eq.s32.totalorder %s17, 1
    %p140 = por %p138, %p139
    %p141 = scmp.ne.s32.totalorder %s132, %s133
    %p142 = scmp.eq.s32.totalorder %s17, 0
    %p143 = por %p141, %p142
    %p144 = scmp.ne.s32.totalorder %s132, %s133
    %p145 = scmp.eq.s32.totalorder %s18, 1
    %p146 = por %p144, %p145
    %p148 = scmp.ne.s32.totalorder %s133, %s147
    %p149 = scmp.eq.s32.totalorder %s18, 0
    %p150 = por %p148, %p149
    %s152 = sadd.s32 %s151, 1
    %p155 = scmp.eq.s32.totalorder %s12, 1
    %p156 = scmp.ne.s32.totalorder %s151, %s153
    %p157 = scmp.eq.s32.totalorder %s12, 0
    %p158 = por %p156, %p157
    %p159 = scmp.ne.s32.totalorder %s151, %s153
    %p160 = scmp.eq.s32.totalorder %s17, 1
    %p161 = por %p159, %p160
    %p162 = scmp.ne.s32.totalorder %s153, %s154
    %p163 = scmp.eq.s32.totalorder %s17, 0
    %p164 = por %p162, %p163
    %p165 = scmp.ne.s32.totalorder %s153, %s154
    %p166 = scmp.eq.s32.totalorder %s18, 1
    %p167 = por %p165, %p166
    %p169 = scmp.ne.s32.totalorder %s154, %s168
    %p170 = scmp.eq.s32.totalorder %s18, 0
    %p171 = por %p169, %p170
    %s172 = ssub.s32 %s19, %s31
    %s173 = ssub.s32 %s20, %s27
    %s174 = sor.u32 %s172, %s173
    %p175 = scmp.eq.s32.totalorder %s174, 0
    %s177 = sadd.s32 %s176, 1
    %s178 = scalar_select %p175, %s176, %s177
    %p181 = pneg %p175
    %p182 = scmp.eq.s32.totalorder %s12, 1
    %p183 = por %p181, %p182
    %p184 = scmp.ne.s32.totalorder %s176, %s179
    %p185 = scmp.eq.s32.totalorder %s12, 0
    %p186 = por %p184, %p185
    %p187 = scmp.ne.s32.totalorder %s176, %s179
    %p188 = scmp.eq.s32.totalorder %s17, 1
    %p189 = por %p187, %p188
    %p190 = scmp.ne.s32.totalorder %s179, %s180
    %p191 = scmp.eq.s32.totalorder %s17, 0
    %p192 = por %p190, %p191
    %p193 = scmp.ne.s32.totalorder %s179, %s180
    %p194 = scmp.eq.s32.totalorder %s18, 1
    %p195 = por %p193, %p194
    %p197 = scmp.ne.s32.totalorder %s180, %s196
    %p198 = scmp.eq.s32.totalorder %s18, 0
    %p199 = por %p197, %p198
    %p200 = scmp.le.s32.totalorder 1, %s12
    %p201 = scmp.lt.s32.totalorder %s12, 3
    %p202 = pnand %p200, %p201
    %p203 = pneg %p202
    // Predicated region
    $region9: #{resblock_forward.9} parent=5 // pred_check
      _
    $region10: #{resblock_forward.9} parent=5 // pred_check_branch
      %205 = sbr.rel (%p202) target = $region12
    $region11: #{resblock_forward.9} parent=5 // pred_region
      %s206 = ssub.s32 %s12, 1
      // Predicated region
      $region13: #{resblock_forward.9} parent=11 // pred_check
        %p207 = pneg %p73
      $region14: #{resblock_forward.9} parent=11 // pred_check_branch
        %209 = sbr.rel (%p207) target = $region16
      $region15: #{resblock_forward.9} parent=11 // pred_region
        _
      $region16: #{resblock_forward.9} parent=11 // pred_fallthru
        _
      // Predicated region
      $region17: #{resblock_forward.9} parent=11 // pred_check
        %p210 = pneg %p94
      $region18: #{resblock_forward.9} parent=11 // pred_check_branch
        %212 = sbr.rel (%p210) target = $region20
      $region19: #{resblock_forward.9} parent=11 // pred_region
        _
      $region20: #{resblock_forward.9} parent=11 // pred_fallthru
        _
      // Predicated region
      $region21: #{resblock_forward.9} parent=11 // pred_check
        %p213 = pneg %p143
      $region22: #{resblock_forward.9} parent=11 // pred_check_branch
        %215 = sbr.rel (%p213) target = $region24
      $region23: #{resblock_forward.9} parent=11 // pred_region
        _
      $region24: #{resblock_forward.9} parent=11 // pred_fallthru
        _
      // Predicated region
      $region25: #{resblock_forward.9} parent=11 // pred_check
        %p216 = pneg %p164
      $region26: #{resblock_forward.9} parent=11 // pred_check_branch
        %218 = sbr.rel (%p216) target = $region28
      $region27: #{resblock_forward.9} parent=11 // pred_region
        _
      $region28: #{resblock_forward.9} parent=11 // pred_fallthru
        _
    $region12: #{resblock_forward.9} parent=5 // pred_fallthru
      _
    %p219 = scmp.lt.s32.totalorder %s12, 2
    // Predicated region
    $region29: #{resblock_forward.9} parent=5 // pred_check
      %p220 = pneg %p219
    $region30: #{resblock_forward.9} parent=5 // pred_check_branch
      %222 = sbr.rel (%p220) target = $region32
    $region31: #{resblock_forward.9} parent=5 // pred_region
      // Predicated region
      $region33: #{resblock_forward.9} parent=31 // pred_check
        %p223 = pneg %p46
      $region34: #{resblock_forward.9} parent=31 // pred_check_branch
        %225 = sbr.rel (%p223) target = $region36
      $region35: #{resblock_forward.9} parent=31 // pred_region
        %s226 = smul.u32 8, %s20
        %p227 = scmp.lt.s32.totalorder %s19, 1
        %s228 = scalar_select %p227, %s19, 1
        %p229 = scmp.lt.s32.totalorder %s226, 7
        %s230 = scalar_select %p229, %s226, 7
        %s231 = smul.addr %s228, 8
        %s232 = sadd.s32 %s230, %s231
        %s233 = smul.addr %s232, 4
        %s234 = scalar_lea.vmem %s0, %s233
        %s235 = smul.u32 8, %s20
      $region36: #{resblock_forward.9} parent=31 // pred_fallthru
        _
      // Predicated region
      $region37: #{resblock_forward.9} parent=31 // pred_check
        %p236 = pneg %p116
      $region38: #{resblock_forward.9} parent=31 // pred_check_branch
        %238 = sbr.rel (%p236) target = $region40
      $region39: #{resblock_forward.9} parent=31 // pred_region
        %s239 = smul.u32 8, %s20
        %p240 = scmp.lt.s32.totalorder %s19, 1
        %s241 = scalar_select %p240, %s19, 1
        %p242 = scmp.lt.s32.totalorder %s239, 7
        %s243 = scalar_select %p242, %s239, 7
        %s244 = smul.addr %s241, 8
        %s245 = sadd.s32 %s243, %s244
        %s246 = smul.addr %s245, 4
        %s247 = scalar_lea.vmem %s3, %s246
        %s248 = smul.u32 8, %s20
      $region40: #{resblock_forward.9} parent=31 // pred_fallthru
        _
    $region32: #{resblock_forward.9} parent=5 // pred_fallthru
      _
    %p249 = scmp.le.s32.totalorder 1, %s12
    %p250 = scmp.lt.s32.totalorder %s12, 3
    %p251 = pnand %p249, %p250
    %p252 = pneg %p251
    // Predicated region
    $region41: #{resblock_forward.9} parent=5 // pred_check
      _
    $region42: #{resblock_forward.9} parent=5 // pred_check_branch
      %254 = sbr.rel (%p251) target = $region44
    $region43: #{resblock_forward.9} parent=5 // pred_region
      %s255 = ssub.s32 %s12, 1
      %s256 = smul.u32 8, %s22
      %p257 = scmp.lt.s32.totalorder %s21, 1
      %s258 = scalar_select %p257, %s21, 1
      %p259 = scmp.lt.s32.totalorder %s256, 7
      %s260 = scalar_select %p259, %s256, 7
      %s261 = smul.addr %s258, 8
      %s262 = sadd.s32 %s260, %s261
      %s263 = smul.addr %s262, 4
      %s264 = scalar_lea.vmem %s0, %s263
      %p265 = pneg %p52
      %p266 = pneg %p49
      %p267 = pneg %p73
      %p268 = pneg %p70
      %p269 = pneg %p94
      %p270 = pneg %p91
      %s271 = smul.u32 8, %s22
      %p272 = scmp.lt.s32.totalorder %s21, 1
      %s273 = scalar_select %p272, %s21, 1
      %p274 = scmp.lt.s32.totalorder %s271, 7
      %s275 = scalar_select %p274, %s271, 7
      %s276 = smul.addr %s273, 8
      %s277 = sadd.s32 %s275, %s276
      %s278 = smul.addr %s277, 4
      %s279 = scalar_lea.vmem %s3, %s278
      %p280 = pneg %p122
      %p281 = pneg %p119
      %p282 = pneg %p143
      %p283 = pneg %p140
      %p284 = pneg %p164
      %p285 = pneg %p161
      %p286 = pneg %p192
      %p287 = pneg %p189
      %s288 = smul.u32 8, %s22
      %p289 = scmp.lt.s32.totalorder %s21, 1
      %s290 = scalar_select %p289, %s21, 1
      %p291 = scmp.lt.s32.totalorder %s288, 7
      %s292 = scalar_select %p291, %s288, 7
      %s293 = smul.addr %s290, 8
      %s294 = sadd.s32 %s292, %s293
      %s295 = smul.addr %s294, 8
      %s296 = scalar_lea.vmem %s6, %s295
      %s297 = smul.u32 8, %s22
      %p298 = scmp.lt.s32.totalorder %s21, 1
      %s299 = scalar_select %p298, %s21, 1
      %p300 = scmp.lt.s32.totalorder %s297, 7
      %s301 = scalar_select %p300, %s297, 7
      %s302 = smul.addr %s299, 8
      %s303 = sadd.s32 %s301, %s302
      %s304 = smul.addr %s303, 4
      %s305 = scalar_lea.vmem %s0, %s304
      %s306 = smul.u32 8, %s22
      %s307 = smul.u32 8, %s22
      %p308 = scmp.lt.s32.totalorder %s21, 1
      %s309 = scalar_select %p308, %s21, 1
      %p310 = scmp.lt.s32.totalorder %s307, 7
      %s311 = scalar_select %p310, %s307, 7
      %s312 = smul.addr %s309, 8
      %s313 = sadd.s32 %s311, %s312
      %s314 = smul.addr %s313, 4
      %s315 = scalar_lea.vmem %s3, %s314
      %s316 = smul.u32 8, %s22
      %s317 = smul.u32 8, %s22
      %p318 = scmp.lt.s32.totalorder %s21, 1
      %s319 = scalar_select %p318, %s21, 1
      %p320 = scmp.lt.s32.totalorder %s317, 7
      %s321 = scalar_select %p320, %s317, 7
      %s322 = smul.addr %s319, 8
      %s323 = sadd.s32 %s321, %s322
      %s324 = smul.addr %s323, 8
      %s325 = scalar_lea.vmem %s6, %s324
      %s326 = smul.u32 8, %s22
      %v327 = vld [vmem:[%s305] sm:$0xf]
      %v328 = vld [vmem:[%s305 + $0x4] sm:$0xf]
      %v329 = vld [vmem:[%s305 + $0x8] sm:$0xf]
      %v330 = vld [vmem:[%s305 + $0xc] sm:$0xf]
      %v331 = vld [vmem:[%s305 + $0x10] sm:$0xf]
      %v332 = vld [vmem:[%s305 + $0x14] sm:$0xf]
      %v333 = vld [vmem:[%s305 + $0x18] sm:$0xf]
      %v334 = vld [vmem:[%s305 + $0x1c] sm:$0xf]
      %v335 = vunpack.c.l.bf16 %v327
      %v336 = vunpack.c.l.bf16 %v328
      %v337 = vunpack.c.l.bf16 %v329
      %v338 = vunpack.c.l.bf16 %v330
      %v339 = vunpack.c.l.bf16 %v331
      %v340 = vunpack.c.l.bf16 %v332
      %v341 = vunpack.c.l.bf16 %v333
      %v342 = vunpack.c.l.bf16 %v334
      %v343 = vld [vmem:[%s1] sm:$0x1]
      %v345 = vlaneseq
      %v346 = vshrl.u32 %v345, 7
      %v347 = vsub.s32 0, %v346
      %v348 = vrot.slane %v343, %v347
      %v350 = vmul.f32 %v335, %v348
      %v351 = vmul.f32 %v336, %v348
      %v352 = vmul.f32 %v337, %v348
      %v353 = vmul.f32 %v338, %v348
      %v354 = vmul.f32 %v339, %v348
      %v355 = vmul.f32 %v340, %v348
      %v356 = vmul.f32 %v341, %v348
      %v357 = vmul.f32 %v342, %v348
      %v358 = vld [vmem:[%s2] sm:$0x1]
      %v360 = vlaneseq
      %v361 = vshrl.u32 %v360, 7
      %v362 = vsub.s32 0, %v361
      %v363 = vrot.slane %v358, %v362
      %v365 = vadd.f32 %v350, %v363
      %v366 = vadd.f32 %v351, %v363
      %v367 = vadd.f32 %v352, %v363
      %v368 = vadd.f32 %v353, %v363
      %v369 = vadd.f32 %v354, %v363
      %v370 = vadd.f32 %v355, %v363
      %v371 = vadd.f32 %v356, %v363
      %v372 = vadd.f32 %v357, %v363
      %v373 = vmax.f32 %v365, 0.0
      %v374 = vmax.f32 %v366, 0.0
      %v375 = vmax.f32 %v367, 0.0
      %v376 = vmax.f32 %v368, 0.0
      %v377 = vmax.f32 %v369, 0.0
      %v378 = vmax.f32 %v370, 0.0
      %v379 = vmax.f32 %v371, 0.0
      %v380 = vmax.f32 %v372, 0.0
      %v381 = vld [vmem:[%s315] sm:$0xf]
      %v382 = vld [vmem:[%s315 + $0x4] sm:$0xf]
      %v383 = vld [vmem:[%s315 + $0x8] sm:$0xf]
      %v384 = vld [vmem:[%s315 + $0xc] sm:$0xf]
      %v385 = vld [vmem:[%s315 + $0x10] sm:$0xf]
      %v386 = vld [vmem:[%s315 + $0x14] sm:$0xf]
      %v387 = vld [vmem:[%s315 + $0x18] sm:$0xf]
      %v388 = vld [vmem:[%s315 + $0x1c] sm:$0xf]
      %v389 = vunpack.c.l.bf16 %v381
      %v390 = vunpack.c.l.bf16 %v382
      %v391 = vunpack.c.l.bf16 %v383
      %v392 = vunpack.c.l.bf16 %v384
      %v393 = vunpack.c.l.bf16 %v385
      %v394 = vunpack.c.l.bf16 %v386
      %v395 = vunpack.c.l.bf16 %v387
      %v396 = vunpack.c.l.bf16 %v388
      %v397 = vld [vmem:[%s4] sm:$0x1]
      %v399 = vlaneseq
      %v400 = vshrl.u32 %v399, 7
      %v401 = vsub.s32 0, %v400
      %v402 = vrot.slane %v397, %v401
      %v404 = vmul.f32 %v389, %v402
      %v405 = vmul.f32 %v390, %v402
      %v406 = vmul.f32 %v391, %v402
      %v407 = vmul.f32 %v392, %v402
      %v408 = vmul.f32 %v393, %v402
      %v409 = vmul.f32 %v394, %v402
      %v410 = vmul.f32 %v395, %v402
      %v411 = vmul.f32 %v396, %v402
      %v412 = vld [vmem:[%s5] sm:$0x1]
      %v414 = vlaneseq
      %v415 = vshrl.u32 %v414, 7
      %v416 = vsub.s32 0, %v415
      %v417 = vrot.slane %v412, %v416
      %v419 = vadd.f32 %v404, %v417
      %v420 = vadd.f32 %v405, %v417
      %v421 = vadd.f32 %v406, %v417
      %v422 = vadd.f32 %v407, %v417
      %v423 = vadd.f32 %v408, %v417
      %v424 = vadd.f32 %v409, %v417
      %v425 = vadd.f32 %v410, %v417
      %v426 = vadd.f32 %v411, %v417
      %v427 = vadd.f32 %v373, %v419
      %v428 = vadd.f32 %v374, %v420
      %v429 = vadd.f32 %v375, %v421
      %v430 = vadd.f32 %v376, %v422
      %v431 = vadd.f32 %v377, %v423
      %v432 = vadd.f32 %v378, %v424
      %v433 = vadd.f32 %v379, %v425
      %v434 = vadd.f32 %v380, %v426
      %v435 = vmax.f32 %v427, 0.0
      %v436 = vmax.f32 %v428, 0.0
      %v437 = vmax.f32 %v429, 0.0
      %v438 = vmax.f32 %v430, 0.0
      %v439 = vmax.f32 %v431, 0.0
      %v440 = vmax.f32 %v432, 0.0
      %v441 = vmax.f32 %v433, 0.0
      %v442 = vmax.f32 %v434, 0.0
      %443 = vst [vmem:[%s325] sm:$0xff] %v435
      %444 = vst [vmem:[%s325 + $0x8] sm:$0xff] %v436
      %445 = vst [vmem:[%s325 + $0x10] sm:$0xff] %v437
      %446 = vst [vmem:[%s325 + $0x18] sm:$0xff] %v438
      %447 = vst [vmem:[%s325 + $0x20] sm:$0xff] %v439
      %448 = vst [vmem:[%s325 + $0x28] sm:$0xff] %v440
      %449 = vst [vmem:[%s325 + $0x30] sm:$0xff] %v441
      %450 = vst [vmem:[%s325 + $0x38] sm:$0xff] %v442
      %s451 = smul.u32 8, %s22
      %p452 = scmp.lt.s32.totalorder %s21, 1
      %s453 = scalar_select %p452, %s21, 1
      %p454 = scmp.lt.s32.totalorder %s451, 7
      %s455 = scalar_select %p454, %s451, 7
      %s456 = smul.addr %s453, 8
      %s457 = sadd.s32 %s455, %s456
      %s458 = smul.addr %s457, 8
      %s459 = scalar_lea.vmem %s6, %s458
      // Predicated region
      $region45: #{resblock_forward.9} parent=43 // pred_check
        %p460 = pneg %p189
      $region46: #{resblock_forward.9} parent=43 // pred_check_branch
        %462 = sbr.rel (%p460) target = $region48
      $region47: #{resblock_forward.9} parent=43 // pred_region
        %s463 = smul.u32 8, %s22
      $region48: #{resblock_forward.9} parent=43 // pred_fallthru
        _
    $region44: #{resblock_forward.9} parent=5 // pred_fallthru
      _
    %p464 = scmp.le.s32.totalorder 2, %s12
    // Predicated region
    $region49: #{resblock_forward.9} parent=5 // pred_check
      %p465 = pneg %p464
    $region50: #{resblock_forward.9} parent=5 // pred_check_branch
      %467 = sbr.rel (%p465) target = $region52
    $region51: #{resblock_forward.9} parent=5 // pred_region
      %s468 = ssub.s32 %s12, 2
      // Predicated region
      $region53: #{resblock_forward.9} parent=51 // pred_check
        %p469 = pneg %p195
      $region54: #{resblock_forward.9} parent=51 // pred_check_branch
        %471 = sbr.rel (%p469) target = $region56
      $region55: #{resblock_forward.9} parent=51 // pred_region
        %s472 = smul.u32 8, %s24
        %p473 = scmp.lt.s32.totalorder %s23, 1
        %s474 = scalar_select %p473, %s23, 1
        %p475 = scmp.lt.s32.totalorder %s472, 7
        %s476 = scalar_select %p475, %s472, 7
        %s477 = smul.addr %s474, 8
        %s478 = sadd.s32 %s476, %s477
        %s479 = smul.addr %s478, 8
        %s480 = scalar_lea.vmem %s6, %s479
      $region56: #{resblock_forward.9} parent=51 // pred_fallthru
        _
    $region52: #{resblock_forward.9} parent=5 // pred_fallthru
      _
  $region6: #{resblock_forward.9} parent=0 // loop_footer
    %s16 = sadd.s32 1, %s12
  $region7: #{resblock_forward.9} parent=0 // loop_footer_branch
    %11 = sbr.rel target = $region3
  $region8: #{resblock_forward.9} parent=0 // loop_exit
    _

// kernel: resblock_forward.5
$region0: #{resblock_forward.5}
  #allocation0 [shape = 'u32[]', space=smem, size = 0x4, offset = 0x4, fixed_abs, tag = 'smem constant byte address 0x4 - core index']
  #allocation1 [shape = 'u32[144,128]{1,0:T(1,128)}', space=vmem, size = 0x12000, scoped, tag = 'internal scratch']
  %s0 = inlined_call_operand.vmem [shape: bf16[8,9,9,128], index: 0, kind: input, shape index: {}]
  %s1 = inlined_call_operand.vmem [shape: bf16[9,128,128], index: 1, kind: input, shape index: {}]
  %s2 = inlined_call_operand.vmem [shape: f32[1,128], index: 2, kind: input, shape index: {}]
  %s3 = inlined_call_operand.vmem [shape: bf16[2,8,8,128], index: 3, kind: output, shape index: {0}]
  %s4 = inlined_call_operand.vmem [shape: f32[2,1,2,128], index: 4, kind: output, shape index: {1}]
  %5 = xla_tuple %s3, %s4
  %s6 = sld [smem:[#allocation0]]
  $region53: #{resblock_forward.5} parent=0
    _
  %s8 = ssub.s32 1, %s6
  %s9 = scalar_select 0, %s8, %s6
  loop: start=0, step=1, limit=4
  $region2: #{resblock_forward.5} parent=0 // loop_pre_header
    _
  $region3: #{resblock_forward.5} parent=0 // loop_header
    %s11 = sphi 0, %s15
    %p12 = scmp.ge.s32.totalorder %s11, 4
    %s18 = sphi 0, %s30
    %s19 = sphi 0, %s26
    %s20 = sphi 0, %s18
    %s21 = sphi 0, %s19
    %s22 = sphi 0, %s20
    %s23 = sphi 0, %s21
    %s33 = sphi 0, %s35
    %s36 = sphi 0, %s33
    %s37 = sphi 0, %s36
    %s53 = sphi 0, %s37
    %s57 = sphi 0, %s57
    %s59 = sphi 0, %s57
    %s60 = sphi 0, %s59
    %s74 = sphi 0, %s60
    %s78 = sphi 0, %s78
    %s80 = sphi 0, %s78
    %s81 = sphi 0, %s80
    %s95 = sphi 0, %s81
    %s103 = sphi 0, %s105
    %s106 = sphi 0, %s103
    %s107 = sphi 0, %s106
    %s123 = sphi 0, %s107
    %s131 = sphi 0, %s133
    %s134 = sphi 0, %s131
    %s135 = sphi 0, %s134
    %s151 = sphi 0, %s135
  $region4: #{resblock_forward.5} parent=0 // loop_header_branch
    %14 = sbr.rel (%p12) target = $region8
  $region5: #{resblock_forward.5} parent=0 // loop_body
    %s16 = ssub.s32 %s11, 1
    %s17 = ssub.s32 %s11, 2
    %s24 = sadd.s32 1, %s19
    %p25 = scmp.ge.s32.totalorder %s24, 1
    %s26 = scalar_select %p25, 0, %s24
    %s27 = sadd.s32 1, %s18
    %s28 = scalar_select %p25, %s27, %s18
    %p29 = scmp.ge.s32.totalorder %s28, 2
    %s30 = scalar_select %p29, 0, %s28
    %s31 = ssub.s32 %s18, %s30
    %p32 = scmp.eq.s32.totalorder %s31, 0
    %s34 = sadd.s32 %s33, 1
    %s35 = scalar_select %p32, %s33, %s34
    %p38 = pneg %p32
    %p39 = scmp.eq.s32.totalorder %s11, 1
    %p40 = por %p38, %p39
    %p41 = scmp.ne.s32.totalorder %s33, %s36
    %p42 = scmp.eq.s32.totalorder %s11, 0
    %p43 = por %p41, %p42
    %p44 = scmp.ne.s32.totalorder %s33, %s36
    %p45 = scmp.eq.s32.totalorder %s16, 1
    %p46 = por %p44, %p45
    %p47 = scmp.ne.s32.totalorder %s36, %s37
    %p48 = scmp.eq.s32.totalorder %s16, 0
    %p49 = por %p47, %p48
    %p50 = scmp.ne.s32.totalorder %s36, %s37
    %p51 = scmp.eq.s32.totalorder %s17, 1
    %p52 = por %p50, %p51
    %p54 = scmp.ne.s32.totalorder %s37, %s53
    %p55 = scmp.eq.s32.totalorder %s17, 0
    %p56 = por %p54, %p55
    %s58 = sadd.s32 %s57, 1
    %p61 = scmp.eq.s32.totalorder %s11, 1
    %p62 = scmp.ne.s32.totalorder %s57, %s59
    %p63 = scmp.eq.s32.totalorder %s11, 0
    %p64 = por %p62, %p63
    %p65 = scmp.ne.s32.totalorder %s57, %s59
    %p66 = scmp.eq.s32.totalorder %s16, 1
    %p67 = por %p65, %p66
    %p68 = scmp.ne.s32.totalorder %s59, %s60
    %p69 = scmp.eq.s32.totalorder %s16, 0
    %p70 = por %p68, %p69
    %p71 = scmp.ne.s32.totalorder %s59, %s60
    %p72 = scmp.eq.s32.totalorder %s17, 1
    %p73 = por %p71, %p72
    %p75 = scmp.ne.s32.totalorder %s60, %s74
    %p76 = scmp.eq.s32.totalorder %s17, 0
    %p77 = por %p75, %p76
    %s79 = sadd.s32 %s78, 1
    %p82 = scmp.eq.s32.totalorder %s11, 1
    %p83 = scmp.ne.s32.totalorder %s78, %s80
    %p84 = scmp.eq.s32.totalorder %s11, 0
    %p85 = por %p83, %p84
    %p86 = scmp.ne.s32.totalorder %s78, %s80
    %p87 = scmp.eq.s32.totalorder %s16, 1
    %p88 = por %p86, %p87
    %p89 = scmp.ne.s32.totalorder %s80, %s81
    %p90 = scmp.eq.s32.totalorder %s16, 0
    %p91 = por %p89, %p90
    %p92 = scmp.ne.s32.totalorder %s80, %s81
    %p93 = scmp.eq.s32.totalorder %s17, 1
    %p94 = por %p92, %p93
    %p96 = scmp.ne.s32.totalorder %s81, %s95
    %p97 = scmp.eq.s32.totalorder %s17, 0
    %p98 = por %p96, %p97
    %s99 = ssub.s32 %s18, %s30
    %s100 = ssub.s32 %s19, %s26
    %s101 = sor.u32 %s99, %s100
    %p102 = scmp.eq.s32.totalorder %s101, 0
    %s104 = sadd.s32 %s103, 1
    %s105 = scalar_select %p102, %s103, %s104
    %p108 = pneg %p102
    %p109 = scmp.eq.s32.totalorder %s11, 1
    %p110 = por %p108, %p109
    %p111 = scmp.ne.s32.totalorder %s103, %s106
    %p112 = scmp.eq.s32.totalorder %s11, 0
    %p113 = por %p111, %p112
    %p114 = scmp.ne.s32.totalorder %s103, %s106
    %p115 = scmp.eq.s32.totalorder %s16, 1
    %p116 = por %p114, %p115
    %p117 = scmp.ne.s32.totalorder %s106, %s107
    %p118 = scmp.eq.s32.totalorder %s16, 0
    %p119 = por %p117, %p118
    %p120 = scmp.ne.s32.totalorder %s106, %s107
    %p121 = scmp.eq.s32.totalorder %s17, 1
    %p122 = por %p120, %p121
    %p124 = scmp.ne.s32.totalorder %s107, %s123
    %p125 = scmp.eq.s32.totalorder %s17, 0
    %p126 = por %p124, %p125
    %s127 = ssub.s32 %s18, %s30
    %s128 = ssub.s32 %s19, %s26
    %s129 = sor.u32 %s127, %s128
    %p130 = scmp.eq.s32.totalorder %s129, 0
    %s132 = sadd.s32 %s131, 1
    %s133 = scalar_select %p130, %s131, %s132
    %p136 = pneg %p130
    %p137 = scmp.eq.s32.totalorder %s11, 1
    %p138 = por %p136, %p137
    %p139 = scmp.ne.s32.totalorder %s131, %s134
    %p140 = scmp.eq.s32.totalorder %s11, 0
    %p141 = por %p139, %p140
    %p142 = scmp.ne.s32.totalorder %s131, %s134
    %p143 = scmp.eq.s32.totalorder %s16, 1
    %p144 = por %p142, %p143
    %p145 = scmp.ne.s32.totalorder %s134, %s135
    %p146 = scmp.eq.s32.totalorder %s16, 0
    %p147 = por %p145, %p146
    %p148 = scmp.ne.s32.totalorder %s134, %s135
    %p149 = scmp.eq.s32.totalorder %s17, 1
    %p150 = por %p148, %p149
    %p152 = scmp.ne.s32.totalorder %s135, %s151
    %p153 = scmp.eq.s32.totalorder %s17, 0
    %p154 = por %p152, %p153
    %p155 = scmp.le.s32.totalorder 1, %s11
    %p156 = scmp.lt.s32.totalorder %s11, 3
    %p157 = pnand %p155, %p156
    %p158 = pneg %p157
    // Predicated region
    $region9: #{resblock_forward.5} parent=5 // pred_check
      _
    $region10: #{resblock_forward.5} parent=5 // pred_check_branch
      %160 = sbr.rel (%p157) target = $region12
    $region11: #{resblock_forward.5} parent=5 // pred_region
      %s161 = ssub.s32 %s11, 1
      // Predicated region
      $region13: #{resblock_forward.5} parent=11 // pred_check
        %p162 = pneg %p70
      $region14: #{resblock_forward.5} parent=11 // pred_check_branch
        %164 = sbr.rel (%p162) target = $region16
      $region15: #{resblock_forward.5} parent=11 // pred_region
        _
      $region16: #{resblock_forward.5} parent=11 // pred_fallthru
        _
      // Predicated region
      $region17: #{resblock_forward.5} parent=11 // pred_check
        %p165 = pneg %p91
      $region18: #{resblock_forward.5} parent=11 // pred_check_branch
        %167 = sbr.rel (%p165) target = $region20
      $region19: #{resblock_forward.5} parent=11 // pred_region
        _
      $region20: #{resblock_forward.5} parent=11 // pred_fallthru
        _
    $region12: #{resblock_forward.5} parent=5 // pred_fallthru
      _
    %p168 = scmp.lt.s32.totalorder %s11, 2
    // Predicated region
    $region21: #{resblock_forward.5} parent=5 // pred_check
      %p169 = pneg %p168
    $region22: #{resblock_forward.5} parent=5 // pred_check_branch
      %171 = sbr.rel (%p169) target = $region24
    $region23: #{resblock_forward.5} parent=5 // pred_region
      // Predicated region
      $region25: #{resblock_forward.5} parent=23 // pred_check
        %p172 = pneg %p43
      $region26: #{resblock_forward.5} parent=23 // pred_check_branch
        %174 = sbr.rel (%p172) target = $region28
      $region27: #{resblock_forward.5} parent=23 // pred_region
        %s175 = smul.u32 4, %s18
        %p176 = scmp.lt.s32.totalorder %s175, 7
        %s177 = scalar_select %p176, %s175, 7
        %s178 = smul.addr %s177, 18
        %s179 = smul.addr %s178, 4
        %s180 = scalar_lea.vmem %s0, %s179
        %s181 = smul.u32 4, %s18
      $region28: #{resblock_forward.5} parent=23 // pred_fallthru
        _
    $region24: #{resblock_forward.5} parent=5 // pred_fallthru
      _
    %p182 = scmp.le.s32.totalorder 1, %s11
    %p183 = scmp.lt.s32.totalorder %s11, 3
    %p184 = pnand %p182, %p183
    %p185 = pneg %p184
    // Predicated region
    $region29: #{resblock_forward.5} parent=5 // pred_check
      _
    $region30: #{resblock_forward.5} parent=5 // pred_check_branch
      %187 = sbr.rel (%p184) target = $region32
    $region31: #{resblock_forward.5} parent=5 // pred_region
      %s188 = ssub.s32 %s11, 1
      %s189 = smul.u32 4, %s20
      %p190 = scmp.lt.s32.totalorder %s189, 7
      %s191 = scalar_select %p190, %s189, 7
      %s192 = smul.addr %s191, 18
      %s193 = smul.addr %s192, 4
      %s194 = scalar_lea.vmem %s0, %s193
      %p195 = pneg %p49
      %p196 = pneg %p46
      %p197 = pneg %p70
      %p198 = pneg %p67
      %p199 = pneg %p91
      %p200 = pneg %p88
      %p201 = pneg %p119
      %p202 = pneg %p116
      %s203 = smul.u32 8, %s21
      %p204 = scmp.lt.s32.totalorder %s20, 1
      %s205 = scalar_select %p204, %s20, 1
      %p206 = scmp.lt.s32.totalorder %s203, 7
      %s207 = scalar_select %p206, %s203, 7
      %s208 = smul.addr %s205, 8
      %s209 = sadd.s32 %s207, %s208
      %s210 = smul.addr %s209, 4
      %s211 = scalar_lea.vmem %s3, %s210
      %p212 = pneg %p147
      %p213 = pneg %p144
      %p214 = scmp.lt.s32.totalorder %s20, 1
      %s215 = scalar_select %p214, %s20, 1
      %p216 = scmp.lt.s32.totalorder %s21, 0
      %s217 = scalar_select %p216, %s21, 0
      %s218 = sadd.s32 %s217, %s215
      %s219 = smul.addr %s218, 2
      %s220 = scalar_lea.vmem %s4, %s219
      %s221 = smul.u32 4, %s20
      %p222 = scmp.lt.s32.totalorder %s221, 7
      %s223 = scalar_select %p222, %s221, 7
      %s224 = smul.addr %s223, 18
      %s225 = smul.addr %s224, 4
      %s226 = scalar_lea.vmem %s0, %s225
      %s227 = smul.u32 4, %s20
      %s228 = smul.u32 8, %s21
      %p229 = scmp.lt.s32.totalorder %s20, 1
      %s230 = scalar_select %p229, %s20, 1
      %p231 = scmp.lt.s32.totalorder %s228, 7
      %s232 = scalar_select %p231, %s228, 7
      %s233 = smul.addr %s230, 8
      %s234 = sadd.s32 %s232, %s233
      %s235 = smul.addr %s234, 4
      %s236 = scalar_lea.vmem %s3, %s235
      %s237 = smul.u32 8, %s21
      %p238 = scmp.lt.s32.totalorder %s20, 1
      %s239 = scalar_select %p238, %s20, 1
      %p240 = scmp.lt.s32.totalorder %s21, 0
      %s241 = scalar_select %p240, %s21, 0
      %s242 = sadd.s32 %s241, %s239
      %s243 = smul.addr %s242, 2
      %s244 = scalar_lea.vmem %s4, %s243
      %s246 = smul.u32 %s21, 8
      %s247 = smul.u32 %s246, 2
      %s248 = smul.addr %s247, 4
      %s249 = scalar_lea.vmem %s226, %s248
      %v250 = vld [vmem:[%s249] sm:$0xf]
      %v251 = vld [vmem:[%s249 + $0x8] sm:$0xf]
      %v252 = vld [vmem:[%s249 + $0x10] sm:$0xf]
      %v253 = vld [vmem:[%s249 + $0x18] sm:$0xf]
      %v254 = vld [vmem:[%s249 + $0x20] sm:$0xf]
      %v255 = vld [vmem:[%s249 + $0x28] sm:$0xf]
      %v256 = vld [vmem:[%s249 + $0x30] sm:$0xf]
      %v257 = vld [vmem:[%s249 + $0x38] sm:$0xf]
      %v258 = vld [vmem:[%s1] sm:$0xf]
      %v259 = vld [vmem:[%s1 + $0x4] sm:$0xf]
      %v260 = vld [vmem:[%s1 + $0x8] sm:$0xf]
      %v261 = vld [vmem:[%s1 + $0xc] sm:$0xf]
      %v262 = vld [vmem:[%s1 + $0x10] sm:$0xf]
      %v263 = vld [vmem:[%s1 + $0x14] sm:$0xf]
      %v264 = vld [vmem:[%s1 + $0x18] sm:$0xf]
      %v265 = vld [vmem:[%s1 + $0x1c] sm:$0xf]
      %v266 = vld [vmem:[%s1 + $0x20] sm:$0xf]
      %v267 = vld [vmem:[%s1 + $0x24] sm:$0xf]
      %v268 = vld [vmem:[%s1 + $0x28] sm:$0xf]
      %v269 = vld [vmem:[%s1 + $0x2c] sm:$0xf]
      %v270 = vld [vmem:[%s1 + $0x30] sm:$0xf]
      %v271 = vld [vmem:[%s1 + $0x34] sm:$0xf]
      %v272 = vld [vmem:[%s1 + $0x38] sm:$0xf]
      %v273 = vld [vmem:[%s1 + $0x3c] sm:$0xf]
      %s274 = sadd.s32 %s247, 18
      %s275 = smul.addr %s274, 4
      %s276 = scalar_lea.vmem %s226, %s275
      %v277 = vld [vmem:[%s276] sm:$0xf]
      %v278 = vld [vmem:[%s276 + $0x8] sm:$0xf]
      %v279 = vld [vmem:[%s276 + $0x10] sm:$0xf]
      %v280 = vld [vmem:[%s276 + $0x18] sm:$0xf]
      %v281 = vld [vmem:[%s276 + $0x20] sm:$0xf]
      %v282 = vld [vmem:[%s276 + $0x28] sm:$0xf]
      %v283 = vld [vmem:[%s276 + $0x30] sm:$0xf]
      %v284 = vld [vmem:[%s276 + $0x38] sm:$0xf]
      %s285 = scalar_lea.vmem %s1, 64
      %v286 = vld [vmem:[%s285] sm:$0xf]
      %v287 = vld [vmem:[%s285 + $0x4] sm:$0xf]
      %v288 = vld [vmem:[%s285 + $0x8] sm:$0xf]
      %v289 = vld [vmem:[%s285 + $0xc] sm:$0xf]
      %v290 = vld [vmem:[%s285 + $0x10] sm:$0xf]
      %v291 = vld [vmem:[%s285 + $0x14] sm:$0xf]
      %v292 = vld [vmem:[%s285 + $0x18] sm:$0xf]
      %v293 = vld [vmem:[%s285 + $0x1c] sm:$0xf]
      %v294 = vld [vmem:[%s285 + $0x20] sm:$0xf]
      %v295 = vld [vmem:[%s285 + $0x24] sm:$0xf]
      %v296 = vld [vmem:[%s285 + $0x28] sm:$0xf]
      %v297 = vld [vmem:[%s285 + $0x2c] sm:$0xf]
      %v298 = vld [vmem:[%s285 + $0x30] sm:$0xf]
      %v299 = vld [vmem:[%s285 + $0x34] sm:$0xf]
      %v300 = vld [vmem:[%s285 + $0x38] sm:$0xf]
      %v301 = vld [vmem:[%s285 + $0x3c] sm:$0xf]
      %v310 = vunpack.c.l.b16 %v277
      %v311 = vunpack.c.l.b16 %v278
      %v312 = vunpack.c.l.b16 %v279
      %v313 = vunpack.c.l.b16 %v280
      %v314 = vunpack.c.l.b16 %v281
      %v315 = vunpack.c.l.b16 %v282
      %v316 = vunpack.c.l.b16 %v283
      %v317 = vunpack.c.l.b16 %v284
      %v318 = vpack.c.b16 %v311, %v310
      %v319 = vpack.c.b16 %v313, %v312
      %v320 = vpack.c.b16 %v315, %v314
      %v321 = vpack.c.b16 %v317, %v316
      %v342 = vunpack.c.l.b16 %v286
      %v343 = vunpack.c.l.b16 %v287
      %v344 = vunpack.c.l.b16 %v288
      %v345 = vunpack.c.l.b16 %v289
      %v346 = vunpack.c.l.b16 %v290
      %v347 = vunpack.c.l.b16 %v291
      %v348 = vunpack.c.l.b16 %v292
      %v349 = vunpack.c.l.b16 %v293
      %v350 = vunpack.c.l.b16 %v294
      %v351 = vunpack.c.l.b16 %v295
      %v352 = vunpack.c.l.b16 %v296
      %v353 = vunpack.c.l.b16 %v297
      %v354 = vunpack.c.l.b16 %v298
      %v355 = vunpack.c.l.b16 %v299
      %v356 = vunpack.c.l.b16 %v300
      %v357 = vunpack.c.l.b16 %v301
      %v358 = vpack.c.b16 %v343, %v342
      %v359 = vpack.c.b16 %v345, %v344
      %v360 = vpack.c.b16 %v347, %v346
      %v361 = vpack.c.b16 %v349, %v348
      %v362 = vpack.c.b16 %v351, %v350
      %v363 = vpack.c.b16 %v353, %v352
      %v364 = vpack.c.b16 %v355, %v354
      %v365 = vpack.c.b16 %v357, %v356
      %374 = vmatprep.subr.bf16.mxu0 0
      %375 = vmatpush1.bf16.msra.mxu0 %v358
      %376 = vmatprep.subr.bf16.mxu0 0
      %377 = vmatpush1.bf16.msra.mxu0 %v359
      %378 = vmatprep.subr.bf16.mxu0 0
      %379 = vmatpush1.bf16.msra.mxu0 %v360
      %380 = vmatprep.subr.bf16.mxu0 0
      %381 = vmatpush1.bf16.msra.mxu0 %v361
      %382 = vmatprep.subr.bf16.mxu0 0
      %383 = vmatpush1.bf16.msra.mxu0 %v362
      %384 = vmatprep.subr.bf16.mxu0 0
      %385 = vmatpush1.bf16.msra.mxu0 %v363
      %386 = vmatprep.subr.bf16.mxu0 0
      %387 = vmatpush1.bf16.msra.mxu0 %v364
      %388 = vmatprep.subr.bf16.mxu0 0
      %389 = vmatpush1.bf16.msra.mxu0 %v365
      %390 = vmatprep.subr.bf16.mxu0 0
      %391 = vmatpush1.bf16.msra.mxu0 0
      %392 = vmatprep.subr.bf16.mxu0 0
      %393 = vmatpush1.bf16.msra.mxu0 0
      %394 = vmatprep.subr.bf16.mxu0 0
      %395 = vmatpush1.bf16.msra.mxu0 0
      %396 = vmatprep.subr.bf16.mxu0 0
      %397 = vmatpush1.bf16.msra.mxu0 0
      %398 = vmatprep.subr.bf16.mxu0 0
      %399 = vmatpush1.bf16.msra.mxu0 0
      %400 = vmatprep.subr.bf16.mxu0 0
      %401 = vmatpush1.bf16.msra.mxu0 0
      %402 = vmatprep.subr.bf16.mxu0 0
      %403 = vmatpush1.bf16.msra.mxu0 0
      %404 = vmatprep.subr.bf16.mxu0 0
      %405 = vmatpush1.bf16.msra.mxu0 0
      %406 = vmatprep.mubr.bf16.mxu0 0
      %407 = vmatmul.mubr.bf16.gmra.mrb[0].mxu0 %v318
      %v408 = vpop.f32.mrb[0].mxu0
      %v409 = vadd.f32 0.0, %v408
      %v410 = vpop.f32.mrb[0].mxu0
      %v411 = vpop.f32.mrb[0].mxu0
      %v412 = vadd.f32 0.0, %v411
      %v413 = vpop.f32.mrb[0].mxu0
      %414 = vmatprep.mubr.bf16.mxu0 0
      %415 = vmatmul.mubr.bf16.gmra.mrb[0].mxu0 %v319
      %v416 = vpop.f32.mrb[0].mxu0
      %v417 = vadd.f32 0.0, %v416
      %v418 = vpop.f32.mrb[0].mxu0
      %v419 = vpop.f32.mrb[0].mxu0
      %v420 = vadd.f32 0.0, %v419
      %v421 = vpop.f32.mrb[0].mxu0
      %422 = vmatprep.mubr.bf16.mxu0 0
      %423 = vmatmul.mubr.bf16.gmra.mrb[0].mxu0 %v320
      %v424 = vpop.f32.mrb[0].mxu0
      %v425 = vadd.f32 0.0, %v424
      %v426 = vpop.f32.mrb[0].mxu0
      %v427 = vpop.f32.mrb[0].mxu0
      %v428 = vadd.f32 0.0, %v427
      %v429 = vpop.f32.mrb[0].mxu0
      %430 = vmatprep.mubr.bf16.mxu0 0
      %431 = vmatmul.mubr.bf16.gmra.mrb[0].mxu0 %v321
      %v432 = vpop.f32.mrb[0].mxu0
      %v433 = vadd.f32 0.0, %v432
      %v434 = vpop.f32.mrb[0].mxu0
      %v435 = vpop.f32.mrb[0].mxu0
      %v436 = vadd.f32 0.0, %v435
      %v437 = vpop.f32.mrb[0].mxu0
      %438 = vdwg.mxu0
      %v447 = vunpack.c.l.b16 %v250
      %v448 = vunpack.c.l.b16 %v251
      %v449 = vunpack.c.l.b16 %v252
      %v450 = vunpack.c.l.b16 %v253
      %v451 = vunpack.c.l.b16 %v254
      %v452 = vunpack.c.l.b16 %v255
      %v453 = vunpack.c.l.b16 %v256
      %v454 = vunpack.c.l.b16 %v257
      %v455 = vpack.c.b16 %v448, %v447
      %v456 = vpack.c.b16 %v450, %v449
      %v457 = vpack.c.b16 %v452, %v451
      %v458 = vpack.c.b16 %v454, %v453
      %v479 = vunpack.c.l.b16 %v258
      %v480 = vunpack.c.l.b16 %v259
      %v481 = vunpack.c.l.b16 %v260
      %v482 = vunpack.c.l.b16 %v261
      %v483 = vunpack.c.l.b16 %v262
      %v484 = vunpack.c.l.b16 %v263
      %v485 = vunpack.c.l.b16 %v264
      %v486 = vunpack.c.l.b16 %v265
      %v487 = vunpack.c.l.b16 %v266
      %v488 = vunpack.c.l.b16 %v267
      %v489 = vunpack.c.l.b16 %v268
      %v490 = vunpack.c.l.b16 %v269
      %v491 = vunpack.c.l.b16 %v270
      %v492 = vunpack.c.l.b16 %v271
      %v493 = vunpack.c.l.b16 %v272
      %v494 = vunpack.c.l.b16 %v273
      %v495 = vpack.c.b16 %v480, %v479
      %v496 = vpack.c.b16 %v482, %v481
      %v497 = vpack.c.b16 %v484, %v483
      %v498 = vpack.c.b16 %v486, %v485
      %v499 = vpack.c.b16 %v488, %v487
      %v500 = vpack.c.b16 %v490, %v489
      %v501 = vpack.c.b16 %v492, %v491
      %v502 = vpack.c.b16 %v494, %v493
      %511 = vmatprep.subr.bf16.mxu0 0
      %512 = vmatpush1.bf16.msra.mxu0 %v495
      %513 = vmatprep.subr.bf16.mxu0 0
      %514 = vmatpush1.bf16.msra.mxu0 %v496
      %515 = vmatprep.subr.bf16.mxu0 0
      %516 = vmatpush1.bf16.msra.mxu0 %v497
      %517 = vmatprep.subr.bf16.mxu0 0
      %518 = vmatpush1.bf16.msra.mxu0 %v498
      %519 = vmatprep.subr.bf16.mxu0 0
      %520 = vmatpush1.bf16.msra.mxu0 %v499
      %521 = vmatprep.subr.bf16.mxu0 0
      %522 = vmatpush1.bf16.msra.mxu0 %v500
      %523 = vmatprep.subr.bf16.mxu0 0
      %524 = vmatpush1.bf16.msra.mxu0 %v501
      %525 = vmatprep.subr.bf16.mxu0 0
      %526 = vmatpush1.bf16.msra.mxu0 %v502
      %527 = vmatprep.subr.bf16.mxu0 0
      %528 = vmatpush1.bf16.msra.mxu0 0
      %529 = vmatprep.subr.bf16.mxu0 0
      %530 = vmatpush1.bf16.msra.mxu0 0
      %531 = vmatprep.subr.bf16.mxu0 0
      %532 = vmatpush1.bf16.msra.mxu0 0
      %533 = vmatprep.subr.bf16.mxu0 0
      %534 = vmatpush1.bf16.msra.mxu0 0
      %535 = vmatprep.subr.bf16.mxu0 0
      %536 = vmatpush1.bf16.msra.mxu0 0
      %537 = vmatprep.subr.bf16.mxu0 0
      %538 = vmatpush1.bf16.msra.mxu0 0
      %539 = vmatprep.subr.bf16.mxu0 0
      %540 = vmatpush1.bf16.msra.mxu0 0
      %541 = vmatprep.subr.bf16.mxu0 0
      %542 = vmatpush1.bf16.msra.mxu0 0
      %543 = vmatprep.mubr.bf16.mxu0 0
      %544 = vmatmul.mubr.bf16.gmra.mrb[0].mxu0 %v455
      %v545 = vpop.f32.mrb[0].mxu0
      %v546 = vadd.f32 %v409, %v545
      %v547 = vpop.f32.mrb[0].mxu0
      %v548 = vpop.f32.mrb[0].mxu0
      %v549 = vadd.f32 %v412, %v548
      %v550 = vpop.f32.mrb[0].mxu0
      %551 = vmatprep.mubr.bf16.mxu0 0
      %552 = vmatmul.mubr.bf16.gmra.mrb[0].mxu0 %v456
      %v553 = vpop.f32.mrb[0].mxu0
      %v554 = vadd.f32 %v417, %v553
      %v555 = vpop.f32.mrb[0].mxu0
      %v556 = vpop.f32.mrb[0].mxu0
      %v557 = vadd.f32 %v420, %v556
      %v558 = vpop.f32.mrb[0].mxu0
      %559 = vmatprep.mubr.bf16.mxu0 0
      %560 = vmatmul.mubr.bf16.gmra.mrb[0].mxu0 %v457
      %v561 = vpop.f32.mrb[0].mxu0
      %v562 = vadd.f32 %v425, %v561
      %v563 = vpop.f32.mrb[0].mxu0
      %v564 = vpop.f32.mrb[0].mxu0
      %v565 = vadd.f32 %v428, %v564
      %v566 = vpop.f32.mrb[0].mxu0
      %567 = vmatprep.mubr.bf16.mxu0 0
      %568 = vmatmul.mubr.bf16.gmra.mrb[0].mxu0 %v458
      %v569 = vpop.f32.mrb[0].mxu0
      %v570 = vadd.f32 %v433, %v569
      %v571 = vpop.f32.mrb[0].mxu0
      %v572 = vpop.f32.mrb[0].mxu0
      %v573 = vadd.f32 %v436, %v572
      %v574 = vpop.f32.mrb[0].mxu0
      %575 = vdwg.mxu0
      %v576 = vld [vmem:[%s249] sm:$0xf]
      %v577 = vld [vmem:[%s249 + $0x4] sm:$0x1]
      %v578 = vld [vmem:[%s249 + $0x8] sm:$0xf]
      %v579 = vld [vmem:[%s249 + $0xc] sm:$0x1]
      %v580 = vld [vmem:[%s249 + $0x10] sm:$0xf]
      %v581 = vld [vmem:[%s249 + $0x14] sm:$0x1]
      %v582 = vld [vmem:[%s249 + $0x18] sm:$0xf]
      %v583 = vld [vmem:[%s249 + $0x1c] sm:$0x1]
      %v584 = vld [vmem:[%s249 + $0x20] sm:$0xf]
      %v585 = vld [vmem:[%s249 + $0x24] sm:$0x1]
      %v586 = vld [vmem:[%s249 + $0x28] sm:$0xf]
      %v587 = vld [vmem:[%s249 + $0x2c] sm:$0x1]
      %v588 = vld [vmem:[%s249 + $0x30] sm:$0xf]
      %v589 = vld [vmem:[%s249 + $0x34] sm:$0x1]
      %v590 = vld [vmem:[%s249 + $0x38] sm:$0xf]
      %v591 = vld [vmem:[%s249 + $0x3c] sm:$0x1]
      %vm592 = vsmask.f32 3328
      %vm593 = vsmask.f32 7440
      %vm594 = vmor %vm592, %vm593
      %v596 = vshrl.u32 %v576, 16
      %v598 = vrot.slane %v596, 4
      %v599 = vshll.u32 %v576, 16
      %v601 = vrot.slane %v599, 5
      %v602 = vor.u32 %v598, %v601
      %v603 = vrot.slane %v602, 4
      %v605 = vshll.u32 %v577, 16
      %v607 = vrot.slane %v605, 5
      %v608 = vsel %vm594, %v603, %v607
      %v610 = vshrl.u32 %v578, 16
      %v612 = vrot.slane %v610, 4
      %v613 = vshll.u32 %v578, 16
      %v615 = vrot.slane %v613, 5
      %v616 = vor.u32 %v612, %v615
      %v617 = vrot.slane %v616, 4
      %v619 = vshll.u32 %v579, 16
      %v621 = vrot.slane %v619, 5
      %v622 = vsel %vm594, %v617, %v621
      %v624 = vshrl.u32 %v580, 16
      %v626 = vrot.slane %v624, 4
      %v627 = vshll.u32 %v580, 16
      %v629 = vrot.slane %v627, 5
      %v630 = vor.u32 %v626, %v629
      %v631 = vrot.slane %v630, 4
      %v633 = vshll.u32 %v581, 16
      %v635 = vrot.slane %v633, 5
      %v636 = vsel %vm594, %v631, %v635
      %v638 = vshrl.u32 %v582, 16
      %v640 = vrot.slane %v638, 4
      %v641 = vshll.u32 %v582, 16
      %v643 = vrot.slane %v641, 5
      %v644 = vor.u32 %v640, %v643
      %v645 = vrot.slane %v644, 4
      %v647 = vshll.u32 %v583, 16
      %v649 = vrot.slane %v647, 5
      %v650 = vsel %vm594, %v645, %v649
      %v652 = vshrl.u32 %v584, 16
      %v654 = vrot.slane %v652, 4
      %v655 = vshll.u32 %v584, 16
      %v657 = vrot.slane %v655, 5
      %v658 = vor.u32 %v654, %v657
      %v659 = vrot.slane %v658, 4
      %v661 = vshll.u32 %v585, 16
      %v663 = vrot.slane %v661, 5
      %v664 = vsel %vm594, %v659, %v663
      %v666 = vshrl.u32 %v586, 16
      %v668 = vrot.slane %v666, 4
      %v669 = vshll.u32 %v586, 16
      %v671 = vrot.slane %v669, 5
      %v672 = vor.u32 %v668, %v671
      %v673 = vrot.slane %v672, 4
      %v675 = vshll.u32 %v587, 16
      %v677 = vrot.slane %v675, 5
      %v678 = vsel %vm594, %v673, %v677
      %v680 = vshrl.u32 %v588, 16
      %v682 = vrot.slane %v680, 4
      %v683 = vshll.u32 %v588, 16
      %v685 = vrot.slane %v683, 5
      %v686 = vor.u32 %v682, %v685
      %v687 = vrot.slane %v686, 4
      %v689 = vshll.u32 %v589, 16
      %v691 = vrot.slane %v689, 5
      %v692 = vsel %vm594, %v687, %v691
      %v694 = vshrl.u32 %v590, 16
      %v696 = vrot.slane %v694, 4
      %v697 = vshll.u32 %v590, 16
      %v699 = vrot.slane %v697, 5
      %v700 = vor.u32 %v696, %v699
      %v701 = vrot.slane %v700, 4
      %v703 = vshll.u32 %v591, 16
      %v705 = vrot.slane %v703, 5
      %v706 = vsel %vm594, %v701, %v705
      %s707 = scalar_lea.vmem %s1, 128
      %v708 = vld [vmem:[%s707] sm:$0xf]
      %v709 = vld [vmem:[%s707 + $0x4] sm:$0xf]
      %v710 = vld [vmem:[%s707 + $0x8] sm:$0xf]
      %v711 = vld [vmem:[%s707 + $0xc] sm:$0xf]
      %v712 = vld [vmem:[%s707 + $0x10] sm:$0xf]
      %v713 = vld [vmem:[%s707 + $0x14] sm:$0xf]
      %v714 = vld [vmem:[%s707 + $0x18] sm:$0xf]
      %v715 = vld [vmem:[%s707 + $0x1c] sm:$0xf]
      %v716 = vld [vmem:[%s707 + $0x20] sm:$0xf]
      %v717 = vld [vmem:[%s707 + $0x24] sm:$0xf]
      %v718 = vld [vmem:[%s707 + $0x28] sm:$0xf]
      %v719 = vld [vmem:[%s707 + $0x2c] sm:$0xf]
      %v720 = vld [vmem:[%s707 + $0x30] sm:$0xf]
      %v721 = vld [vmem:[%s707 + $0x34] sm:$0xf]
      %v722 = vld [vmem:[%s707 + $0x38] sm:$0xf]
      %v723 = vld [vmem:[%s707 + $0x3c] sm:$0xf]
      %v724 = vunpack.c.l.b16 %v608
      %v725 = vunpack.c.l.b16 %v622
      %v726 = vunpack.c.l.b16 %v636
      %v727 = vunpack.c.l.b16 %v650
      %v728 = vunpack.c.l.b16 %v664
      %v729 = vunpack.c.l.b16 %v678
      %v730 = vunpack.c.l.b16 %v692
      %v731 = vunpack.c.l.b16 %v706
      %v732 = vpack.c.b16 %v725, %v724
      %v733 = vpack.c.b16 %v727, %v726
      %v734 = vpack.c.b16 %v729, %v728
      %v735 = vpack.c.b16 %v731, %v730
      %v756 = vunpack.c.l.b16 %v708
      %v757 = vunpack.c.l.b16 %v709
      %v758 = vunpack.c.l.b16 %v710
      %v759 = vunpack.c.l.b16 %v711
      %v760 = vunpack.c.l.b16 %v712
      %v761 = vunpack.c.l.b16 %v713
      %v762 = vunpack.c.l.b16 %v714
      %v763 = vunpack.c.l.b16 %v715
      %v764 = vunpack.c.l.b16 %v716
      %v765 = vunpack.c.l.b16 %v717
      %v766 = vunpack.c.l.b16 %v718
      %v767 = vunpack.c.l.b16 %v719
      %v768 = vunpack.c.l.b16 %v720
      %v769 = vunpack.c.l.b16 %v721
      %v770 = vunpack.c.l.b16 %v722
      %v771 = vunpack.c.l.b16 %v723
      %v772 = vpack.c.b16 %v757, %v756
      %v773 = vpack.c.b16 %v759, %v758
      %v774 = vpack.c.b16 %v761, %v760
      %v775 = vpack.c.b16 %v763, %v762
      %v776 = vpack.c.b16 %v765, %v764
      %v777 = vpack.c.b16 %v767, %v766
      %v778 = vpack.c.b16 %v769, %v768
      %v779 = vpack.c.b16 %v771, %v770
      %788 = vmatprep.subr.bf16.mxu0 0
      %789 = vmatpush1.bf16.msra.mxu0 %v772
      %790 = vmatprep.subr.bf16.mxu0 0
      %791 = vmatpush1.bf16.msra.mxu0 %v773
      %792 = vmatprep.subr.bf16.mxu0 0
      %793 = vmatpush1.bf16.msra.mxu0 %v774
      %794 = vmatprep.subr.bf16.mxu0 0
      %795 = vmatpush1.bf16.msra.mxu0 %v775
      %796 = vmatprep.subr.bf16.mxu0 0
      %797 = vmatpush1.bf16.msra.mxu0 %v776
      %798 = vmatprep.subr.bf16.mxu0 0
      %799 = vmatpush1.bf16.msra.mxu0 %v777
      %800 = vmatprep.subr.bf16.mxu0 0
      %801 = vmatpush1.bf16.msra.mxu0 %v778
      %802 = vmatprep.subr.bf16.mxu0 0
      %803 = vmatpush1.bf16.msra.mxu0 %v779
      %804 = vmatprep.subr.bf16.mxu0 0
      %805 = vmatpush1.bf16.msra.mxu0 0
      %806 = vmatprep.subr.bf16.mxu0 0
      %807 = vmatpush1.bf16.msra.mxu0 0
      %808 = vmatprep.subr.bf16.mxu0 0
      %809 = vmatpush1.bf16.msra.mxu0 0
      %810 = vmatprep.subr.bf16.mxu0 0
      %811 = vmatpush1.bf16.msra.mxu0 0
      %812 = vmatprep.subr.bf16.mxu0 0
      %813 = vmatpush1.bf16.msra.mxu0 0
      %814 = vmatprep.subr.bf16.mxu0 0
      %815 = vmatpush1.bf16.msra.mxu0 0
      %816 = vmatprep.subr.bf16.mxu0 0
      %817 = vmatpush1.bf16.msra.mxu0 0
      %818 = vmatprep.subr.bf16.mxu0 0
      %819 = vmatpush1.bf16.msra.mxu0 0
      %820 = vmatprep.mubr.bf16.mxu0 0
      %821 = vmatmul.mubr.bf16.gmra.mrb[0].mxu0 %v732
      %v822 = vpop.f32.mrb[0].mxu0
      %v823 = vadd.f32 0.0, %v822
      %v824 = vpop.f32.mrb[0].mxu0
      %v825 = vpop.f32.mrb[0].mxu0
      %v826 = vadd.f32 0.0, %v825
      %v827 = vpop.f32.mrb[0].mxu0
      %828 = vmatprep.mubr.bf16.mxu0 0
      %829 = vmatmul.mubr.bf16.gmra.mrb[0].mxu0 %v733
      %v830 = vpop.f32.mrb[0].mxu0
      %v831 = vadd.f32 0.0, %v830
      %v832 = vpop.f32.mrb[0].mxu0
      %v833 = vpop.f32.mrb[0].mxu0
      %v834 = vadd.f32 0.0, %v833
      %v835 = vpop.f32.mrb[0].mxu0
      %836 = vmatprep.mubr.bf16.mxu0 0
      %837 = vmatmul.mubr.bf16.gmra.mrb[0].mxu0 %v734
      %v838 = vpop.f32.mrb[0].mxu0
      %v839 = vadd.f32 0.0, %v838
      %v840 = vpop.f32.mrb[0].mxu0
      %v841 = vpop.f32.mrb[0].mxu0
      %v842 = vadd.f32 0.0, %v841
      %v843 = vpop.f32.mrb[0].mxu0
      %844 = vmatprep.mubr.bf16.mxu0 0
      %845 = vmatmul.mubr.bf16.gmra.mrb[0].mxu0 %v735
      %v846 = vpop.f32.mrb[0].mxu0
      %v847 = vadd.f32 0.0, %v846
      %v848 = vpop.f32.mrb[0].mxu0
      %v849 = vpop.f32.mrb[0].mxu0
      %v850 = vadd.f32 0.0, %v849
      %v851 = vpop.f32.mrb[0].mxu0
      %852 = vdwg.mxu0
      %v853 = vadd.f32 %v546, %v823
      %v854 = vadd.f32 %v549, %v826
      %v855 = vadd.f32 %v554, %v831
      %v856 = vadd.f32 %v557, %v834
      %v857 = vadd.f32 %v562, %v839
      %v858 = vadd.f32 %v565, %v842
      %v859 = vadd.f32 %v570, %v847
      %v860 = vadd.f32 %v573, %v850
      %s861 = sadd.s32 %s247, 36
      %s862 = smul.addr %s861, 4
      %s863 = scalar_lea.vmem %s226, %s862
      %v864 = vld [vmem:[%s863] sm:$0xf]
      %v865 = vld [vmem:[%s863 + $0x8] sm:$0xf]
      %v866 = vld [vmem:[%s863 + $0x10] sm:$0xf]
      %v867 = vld [vmem:[%s863 + $0x18] sm:$0xf]
      %v868 = vld [vmem:[%s863 + $0x20] sm:$0xf]
      %v869 = vld [vmem:[%s863 + $0x28] sm:$0xf]
      %v870 = vld [vmem:[%s863 + $0x30] sm:$0xf]
      %v871 = vld [vmem:[%s863 + $0x38] sm:$0xf]
      %s872 = scalar_lea.vmem %s1, 192
      %v873 = vld [vmem:[%s872] sm:$0xf]
      %v874 = vld [vmem:[%s872 + $0x4] sm:$0xf]
      %v875 = vld [vmem:[%s872 + $0x8] sm:$0xf]
      %v876 = vld [vmem:[%s872 + $0xc] sm:$0xf]
      %v877 = vld [vmem:[%s872 + $0x10] sm:$0xf]
      %v878 = vld [vmem:[%s872 + $0x14] sm:$0xf]
      %v879 = vld [vmem:[%s872 + $0x18] sm:$0xf]
      %v880 = vld [vmem:[%s872 + $0x1c] sm:$0xf]
      %v881 = vld [vmem:[%s872 + $0x20] sm:$0xf]
      %v882 = vld [vmem:[%s872 + $0x24] sm:$0xf]
      %v883 = vld [vmem:[%s872 + $0x28] sm:$0xf]
      %v884 = vld [vmem:[%s872 + $0x2c] sm:$0xf]
      %v885 = vld [vmem:[%s872 + $0x30] sm:$0xf]
      %v886 = vld [vmem:[%s872 + $0x34] sm:$0xf]
      %v887 = vld [vmem:[%s872 + $0x38] sm:$0xf]
      %v888 = vld [vmem:[%s872 + $0x3c] sm:$0xf]
      %v897 = vunpack.c.l.b16 %v864
      %v898 = vunpack.c.l.b16 %v865
      %v899 = vunpack.c.l.b16 %v866
      %v900 = vunpack.c.l.b16 %v867
      %v901 = vunpack.c.l.b16 %v868
      %v902 = vunpack.c.l.b16 %v869
      %v903 = vunpack.c.l.b16 %v870
      %v904 = vunpack.c.l.b16 %v871
      %v905 = vpack.c.b16 %v898, %v897
      %v906 = vpack.c.b16 %v900, %v899
      %v907 = vpack.c.b16 %v902, %v901
      %v908 = vpack.c.b16 %v904, %v903
      %v929 = vunpack.c.l.b16 %v873
      %v930 = vunpack.c.l.b16 %v874
      %v931 = vunpack.c.l.b16 %v875
      %v932 = vunpack.c.l.b16 %v876
      %v933 = vunpack.c.l.b16 %v877
      %v934 = vunpack.c.l.b16 %v878
      %v935 = vunpack.c.l.b16 %v879
      %v936 = vunpack.c.l.b16 %v880
      %v937 = vunpack.c.l.b16 %v881
      %v938 = vunpack.c.l.b16 %v882
      %v939 = vunpack.c.l.b16 %v883
      %v940 = vunpack.c.l.b16 %v884
      %v941 = vunpack.c.l.b16 %v885
      %v942 = vunpack.c.l.b16 %v886
      %v943 = vunpack.c.l.b16 %v887
      %v944 = vunpack.c.l.b16 %v888
      %v945 = vpack.c.b16 %v930, %v929
      %v946 = vpack.c.b16 %v932, %v931
      %v947 = vpack.c.b16 %v934, %v933
      %v948 = vpack.c.b16 %v936, %v935
      %v949 = vpack.c.b16 %v938, %v937
      %v950 = vpack.c.b16 %v940, %v939
      %v951 = vpack.c.b16 %v942, %v941
      %v952 = vpack.c.b16 %v944, %v943
      %961 = vmatprep.subr.bf16.mxu0 0
      %962 = vmatpush1.bf16.msra.mxu0 %v945
      %963 = vmatprep.subr.bf16.mxu0 0
      %964 = vmatpush1.bf16.msra.mxu0 %v946
      %965 = vmatprep.subr.bf16.mxu0 0
      %966 = vmatpush1.bf16.msra.mxu0 %v947
      %967 = vmatprep.subr.bf16.mxu0 0
      %968 = vmatpush1.bf16.msra.mxu0 %v948
      %969 = vmatprep.subr.bf16.mxu0 0
      %970 = vmatpush1.bf16.msra.mxu0 %v949
      %971 = vmatprep.subr.bf16.mxu0 0
      %972 = vmatpush1.bf16.msra.mxu0 %v950
      %973 = vmatprep.subr.bf16.mxu0 0
      %974 = vmatpush1.bf16.msra.mxu0 %v951
      %975 = vmatprep.subr.bf16.mxu0 0
      %976 = vmatpush1.bf16.msra.mxu0 %v952
      %977 = vmatprep.subr.bf16.mxu0 0
      %978 = vmatpush1.bf16.msra.mxu0 0
      %979 = vmatprep.subr.bf16.mxu0 0
      %980 = vmatpush1.bf16.msra.mxu0 0
      %981 = vmatprep.subr.bf16.mxu0 0
      %982 = vmatpush1.bf16.msra.mxu0 0
      %983 = vmatprep.subr.bf16.mxu0 0
      %984 = vmatpush1.bf16.msra.mxu0 0
      %985 = vmatprep.subr.bf16.mxu0 0
      %986 = vmatpush1.bf16.msra.mxu0 0
      %987 = vmatprep.subr.bf16.mxu0 0
      %988 = vmatpush1.bf16.msra.mxu0 0
      %989 = vmatprep.subr.bf16.mxu0 0
      %990 = vmatpush1.bf16.msra.mxu0 0
      %991 = vmatprep.subr.bf16.mxu0 0
      %992 = vmatpush1.bf16.msra.mxu0 0
      %993 = vmatprep.mubr.bf16.mxu0 0
      %994 = vmatmul.mubr.bf16.gmra.mrb[0].mxu0 %v905
      %v995 = vpop.f32.mrb[0].mxu0
      %v996 = vadd.f32 0.0, %v995
      %v997 = vpop.f32.mrb[0].mxu0
      %v998 = vpop.f32.mrb[0].mxu0
      %v999 = vadd.f32 0.0, %v998
      %v1000 = vpop.f32.mrb[0].mxu0
      %1001 = vmatprep.mubr.bf16.mxu0 0
      %1002 = vmatmul.mubr.bf16.gmra.mrb[0].mxu0 %v906
      %v1003 = vpop.f32.mrb[0].mxu0
      %v1004 = vadd.f32 0.0, %v1003
      %v1005 = vpop.f32.mrb[0].mxu0
      %v1006 = vpop.f32.mrb[0].mxu0
      %v1007 = vadd.f32 0.0, %v1006
      %v1008 = vpop.f32.mrb[0].mxu0
      %1009 = vmatprep.mubr.bf16.mxu0 0
      %1010 = vmatmul.mubr.bf16.gmra.mrb[0].mxu0 %v907
      %v1011 = vpop.f32.mrb[0].mxu0
      %v1012 = vadd.f32 0.0, %v1011
      %v1013 = vpop.f32.mrb[0].mxu0
      %v1014 = vpop.f32.mrb[0].mxu0
      %v1015 = vadd.f32 0.0, %v1014
      %v1016 = vpop.f32.mrb[0].mxu0
      %1017 = vmatprep.mubr.bf16.mxu0 0
      %1018 = vmatmul.mubr.bf16.gmra.mrb[0].mxu0 %v908
      %v1019 = vpop.f32.mrb[0].mxu0
      %v1020 = vadd.f32 0.0, %v1019
      %v1021 = vpop.f32.mrb[0].mxu0
      %v1022 = vpop.f32.mrb[0].mxu0
      %v1023 = vadd.f32 0.0, %v1022
      %v1024 = vpop.f32.mrb[0].mxu0
      %1025 = vdwg.mxu0
      %v1026 = vadd.f32 %v853, %v996
      %v1027 = vadd.f32 %v854, %v999
      %v1028 = vadd.f32 %v855, %v1004
      %v1029 = vadd.f32 %v856, %v1007
      %v1030 = vadd.f32 %v857, %v1012
      %v1031 = vadd.f32 %v858, %v1015
      %v1032 = vadd.f32 %v859, %v1020
      %v1033 = vadd.f32 %v860, %v1023
      %s1034 = sadd.s32 %s247, 54
      %s1035 = smul.addr %s1034, 4
      %s1036 = scalar_lea.vmem %s226, %s1035
      %v1037 = vld [vmem:[%s1036] sm:$0xf]
      %v1038 = vld [vmem:[%s1036 + $0x8] sm:$0xf]
      %v1039 = vld [vmem:[%s1036 + $0x10] sm:$0xf]
      %v1040 = vld [vmem:[%s1036 + $0x18] sm:$0xf]
      %v1041 = vld [vmem:[%s1036 + $0x20] sm:$0xf]
      %v1042 = vld [vmem:[%s1036 + $0x28] sm:$0xf]
      %v1043 = vld [vmem:[%s1036 + $0x30] sm:$0xf]
      %v1044 = vld [vmem:[%s1036 + $0x38] sm:$0xf]
      %s1045 = scalar_lea.vmem %s1, 256
      %v1046 = vld [vmem:[%s1045] sm:$0xf]
      %v1047 = vld [vmem:[%s1045 + $0x4] sm:$0xf]
      %v1048 = vld [vmem:[%s1045 + $0x8] sm:$0xf]
      %v1049 = vld [vmem:[%s1045 + $0xc] sm:$0xf]
      %v1050 = vld [vmem:[%s1045 + $0x10] sm:$0xf]
      %v1051 = vld [vmem:[%s1045 + $0x14] sm:$0xf]
      %v1052 = vld [vmem:[%s1045 + $0x18] sm:$0xf]
      %v1053 = vld [vmem:[%s1045 + $0x1c] sm:$0xf]
      %v1054 = vld [vmem:[%s1045 + $0x20] sm:$0xf]
      %v1055 = vld [vmem:[%s1045 + $0x24] sm:$0xf]
      %v1056 = vld [vmem:[%s1045 + $0x28] sm:$0xf]
      %v1057 = vld [vmem:[%s1045 + $0x2c] sm:$0xf]
      %v1058 = vld [vmem:[%s1045 + $0x30] sm:$0xf]
      %v1059 = vld [vmem:[%s1045 + $0x34] sm:$0xf]
      %v1060 = vld [vmem:[%s1045 + $0x38] sm:$0xf]
      %v1061 = vld [vmem:[%s1045 + $0x3c] sm:$0xf]
      %v1070 = vunpack.c.l.b16 %v1037
      %v1071 = vunpack.c.l.b16 %v1038
      %v1072 = vunpack.c.l.b16 %v1039
      %v1073 = vunpack.c.l.b16 %v1040
      %v1074 = vunpack.c.l.b16 %v1041
      %v1075 = vunpack.c.l.b16 %v1042
      %v1076 = vunpack.c.l.b16 %v1043
      %v1077 = vunpack.c.l.b16 %v1044
      %v1078 = vpack.c.b16 %v1071, %v1070
      %v1079 = vpack.c.b16 %v1073, %v1072
      %v1080 = vpack.c.b16 %v1075, %v1074
      %v1081 = vpack.c.b16 %v1077, %v1076
      %v1102 = vunpack.c.l.b16 %v1046
      %v1103 = vunpack.c.l.b16 %v1047
      %v1104 = vunpack.c.l.b16 %v1048
      %v1105 = vunpack.c.l.b16 %v1049
      %v1106 = vunpack.c.l.b16 %v1050
      %v1107 = vunpack.c.l.b16 %v1051
      %v1108 = vunpack.c.l.b16 %v1052
      %v1109 = vunpack.c.l.b16 %v1053
      %v1110 = vunpack.c.l.b16 %v1054
      %v1111 = vunpack.c.l.b16 %v1055
      %v1112 = vunpack.c.l.b16 %v1056
      %v1113 = vunpack.c.l.b16 %v1057
      %v1114 = vunpack.c.l.b16 %v1058
      %v1115 = vunpack.c.l.b16 %v1059
      %v1116 = vunpack.c.l.b16 %v1060
      %v1117 = vunpack.c.l.b16 %v1061
      %v1118 = vpack.c.b16 %v1103, %v1102
      %v1119 = vpack.c.b16 %v1105, %v1104
      %v1120 = vpack.c.b16 %v1107, %v1106
      %v1121 = vpack.c.b16 %v1109, %v1108
      %v1122 = vpack.c.b16 %v1111, %v1110
      %v1123 = vpack.c.b16 %v1113, %v1112
      %v1124 = vpack.c.b16 %v1115, %v1114
      %v1125 = vpack.c.b16 %v1117, %v1116
      %1134 = vmatprep.subr.bf16.mxu0 0
      %1135 = vmatpush1.bf16.msra.mxu0 %v1118
      %1136 = vmatprep.subr.bf16.mxu0 0
      %1137 = vmatpush1.bf16.msra.mxu0 %v1119
      %1138 = vmatprep.subr.bf16.mxu0 0
      %1139 = vmatpush1.bf16.msra.mxu0 %v1120
      %1140 = vmatprep.subr.bf16.mxu0 0
      %1141 = vmatpush1.bf16.msra.mxu0 %v1121
      %1142 = vmatprep.subr.bf16.mxu0 0
      %1143 = vmatpush1.bf16.msra.mxu0 %v1122
      %1144 = vmatprep.subr.bf16.mxu0 0
      %1145 = vmatpush1.bf16.msra.mxu0 %v1123
      %1146 = vmatprep.subr.bf16.mxu0 0
      %1147 = vmatpush1.bf16.msra.mxu0 %v1124
      %1148 = vmatprep.subr.bf16.mxu0 0
      %1149 = vmatpush1.bf16.msra.mxu0 %v1125
      %1150 = vmatprep.subr.bf16.mxu0 0
      %1151 = vmatpush1.bf16.msra.mxu0 0
      %1152 = vmatprep.subr.bf16.mxu0 0
      %1153 = vmatpush1.bf16.msra.mxu0 0
      %1154 = vmatprep.subr.bf16.mxu0 0
      %1155 = vmatpush1.bf16.msra.mxu0 0
      %1156 = vmatprep.subr.bf16.mxu0 0
      %1157 = vmatpush1.bf16.msra.mxu0 0
      %1158 = vmatprep.subr.bf16.mxu0 0
      %1159 = vmatpush1.bf16.msra.mxu0 0
      %1160 = vmatprep.subr.bf16.mxu0 0
      %1161 = vmatpush1.bf16.msra.mxu0 0
      %1162 = vmatprep.subr.bf16.mxu0 0
      %1163 = vmatpush1.bf16.msra.mxu0 0
      %1164 = vmatprep.subr.bf16.mxu0 0
      %1165 = vmatpush1.bf16.msra.mxu0 0
      %1166 = vmatprep.mubr.bf16.mxu0 0
      %1167 = vmatmul.mubr.bf16.gmra.mrb[0].mxu0 %v1078
      %v1168 = vpop.f32.mrb[0].mxu0
      %v1169 = vadd.f32 0.0, %v1168
      %v1170 = vpop.f32.mrb[0].mxu0
      %v1171 = vpop.f32.mrb[0].mxu0
      %v1172 = vadd.f32 0.0, %v1171
      %v1173 = vpop.f32.mrb[0].mxu0
      %1174 = vmatprep.mubr.bf16.mxu0 0
      %1175 = vmatmul.mubr.bf16.gmra.mrb[0].mxu0 %v1079
      %v1176 = vpop.f32.mrb[0].mxu0
      %v1177 = vadd.f32 0.0, %v1176
      %v1178 = vpop.f32.mrb[0].mxu0
      %v1179 = vpop.f32.mrb[0].mxu0
      %v1180 = vadd.f32 0.0, %v1179
      %v1181 = vpop.f32.mrb[0].mxu0
      %1182 = vmatprep.mubr.bf16.mxu0 0
      %1183 = vmatmul.mubr.bf16.gmra.mrb[0].mxu0 %v1080
      %v1184 = vpop.f32.mrb[0].mxu0
      %v1185 = vadd.f32 0.0, %v1184
      %v1186 = vpop.f32.mrb[0].mxu0
      %v1187 = vpop.f32.mrb[0].mxu0
      %v1188 = vadd.f32 0.0, %v1187
      %v1189 = vpop.f32.mrb[0].mxu0
      %1190 = vmatprep.mubr.bf16.mxu0 0
      %1191 = vmatmul.mubr.bf16.gmra.mrb[0].mxu0 %v1081
      %v1192 = vpop.f32.mrb[0].mxu0
      %v1193 = vadd.f32 0.0, %v1192
      %v1194 = vpop.f32.mrb[0].mxu0
      %v1195 = vpop.f32.mrb[0].mxu0
      %v1196 = vadd.f32 0.0, %v1195
      %v1197 = vpop.f32.mrb[0].mxu0
      %1198 = vdwg.mxu0
      %v1199 = vadd.f32 %v1026, %v1169
      %v1200 = vadd.f32 %v1027, %v1172
      %v1201 = vadd.f32 %v1028, %v1177
      %v1202 = vadd.f32 %v1029, %v1180
      %v1203 = vadd.f32 %v1030, %v1185
      %v1204 = vadd.f32 %v1031, %v1188
      %v1205 = vadd.f32 %v1032, %v1193
      %v1206 = vadd.f32 %v1033, %v1196
      %v1207 = vld [vmem:[%s863] sm:$0xf]
      %v1208 = vld [vmem:[%s863 + $0x4] sm:$0x1]
      %v1209 = vld [vmem:[%s863 + $0x8] sm:$0xf]
      %v1210 = vld [vmem:[%s863 + $0xc] sm:$0x1]
      %v1211 = vld [vmem:[%s863 + $0x10] sm:$0xf]
      %v1212 = vld [vmem:[%s863 + $0x14] sm:$0x1]
      %v1213 = vld [vmem:[%s863 + $0x18] sm:$0xf]
      %v1214 = vld [vmem:[%s863 + $0x1c] sm:$0x1]
      %v1215 = vld [vmem:[%s863 + $0x20] sm:$0xf]
      %v1216 = vld [vmem:[%s863 + $0x24] sm:$0x1]
      %v1217 = vld [vmem:[%s863 + $0x28] sm:$0xf]
      %v1218 = vld [vmem:[%s863 + $0x2c] sm:$0x1]
      %v1219 = vld [vmem:[%s863 + $0x30] sm:$0xf]
      %v1220 = vld [vmem:[%s863 + $0x34] sm:$0x1]
      %v1221 = vld [vmem:[%s863 + $0x38] sm:$0xf]
      %v1222 = vld [vmem:[%s863 + $0x3c] sm:$0x1]
      %v1224 = vshrl.u32 %v1207, 16
      %v1226 = vrot.slane %v1224, 4
      %v1227 = vshll.u32 %v1207, 16
      %v1229 = vrot.slane %v1227, 5
      %v1230 = vor.u32 %v1226, %v1229
      %v1231 = vrot.slane %v1230, 4
      %v1233 = vshll.u32 %v1208, 16
      %v1235 = vrot.slane %v1233, 5
      %v1236 = vsel %vm594, %v1231, %v1235
      %v1238 = vshrl.u32 %v1209, 16
      %v1240 = vrot.slane %v1238, 4
      %v1241 = vshll.u32 %v1209, 16
      %v1243 = vrot.slane %v1241, 5
      %v1244 = vor.u32 %v1240, %v1243
      %v1245 = vrot.slane %v1244, 4
      %v1247 = vshll.u32 %v1210, 16
      %v1249 = vrot.slane %v1247, 5
      %v1250 = vsel %vm594, %v1245, %v1249
      %v1252 = vshrl.u32 %v1211, 16
      %v1254 = vrot.slane %v1252, 4
      %v1255 = vshll.u32 %v1211, 16
      %v1257 = vrot.slane %v1255, 5
      %v1258 = vor.u32 %v1254, %v1257
      %v1259 = vrot.slane %v1258, 4
      %v1261 = vshll.u32 %v1212, 16
      %v1263 = vrot.slane %v1261, 5
      %v1264 = vsel %vm594, %v1259, %v1263
      %v1266 = vshrl.u32 %v1213, 16
      %v1268 = vrot.slane %v1266, 4
      %v1269 = vshll.u32 %v1213, 16
      %v1271 = vrot.slane %v1269, 5
      %v1272 = vor.u32 %v1268, %v1271
      %v1273 = vrot.slane %v1272, 4
      %v1275 = vshll.u32 %v1214, 16
      %v1277 = vrot.slane %v1275, 5
      %v1278 = vsel %vm594, %v1273, %v1277
      %v1280 = vshrl.u32 %v1215, 16
      %v1282 = vrot.slane %v1280, 4
      %v1283 = vshll.u32 %v1215, 16
      %v1285 = vrot.slane %v1283, 5
      %v1286 = vor.u32 %v1282, %v1285
      %v1287 = vrot.slane %v1286, 4
      %v1289 = vshll.u32 %v1216, 16
      %v1291 = vrot.slane %v1289, 5
      %v1292 = vsel %vm594, %v1287, %v1291
      %v1294 = vshrl.u32 %v1217, 16
      %v1296 = vrot.slane %v1294, 4
      %v1297 = vshll.u32 %v1217, 16
      %v1299 = vrot.slane %v1297, 5
      %v1300 = vor.u32 %v1296, %v1299
      %v1301 = vrot.slane %v1300, 4
      %v1303 = vshll.u32 %v1218, 16
      %v1305 = vrot.slane %v1303, 5
      %v1306 = vsel %vm594, %v1301, %v1305
      %v1308 = vshrl.u32 %v1219, 16
      %v1310 = vrot.slane %v1308, 4
      %v1311 = vshll.u32 %v1219, 16
      %v1313 = vrot.slane %v1311, 5
      %v1314 = vor.u32 %v1310, %v1313
      %v1315 = vrot.slane %v1314, 4
      %v1317 = vshll.u32 %v1220, 16
      %v1319 = vrot.slane %v1317, 5
      %v1320 = vsel %vm594, %v1315, %v1319
      %v1322 = vshrl.u32 %v1221, 16
      %v1324 = vrot.slane %v1322, 4
      %v1325 = vshll.u32 %v1221, 16
      %v1327 = vrot.slane %v1325, 5
      %v1328 = vor.u32 %v1324, %v1327
      %v1329 = vrot.slane %v1328, 4
      %v1331 = vshll.u32 %v1222, 16
      %v1333 = vrot.slane %v1331, 5
      %v1334 = vsel %vm594, %v1329, %v1333
      %s1335 = scalar_lea.vmem %s1, 320
      %v1336 = vld [vmem:[%s1335] sm:$0xf]
      %v1337 = vld [vmem:[%s1335 + $0x4] sm:$0xf]
      %v1338 = vld [vmem:[%s1335 + $0x8] sm:$0xf]
      %v1339 = vld [vmem:[%s1335 + $0xc] sm:$0xf]
      %v1340 = vld [vmem:[%s1335 + $0x10] sm:$0xf]
      %v1341 = vld [vmem:[%s1335 + $0x14] sm:$0xf]
      %v1342 = vld [vmem:[%s1335 + $0x18] sm:$0xf]
      %v1343 = vld [vmem:[%s1335 + $0x1c] sm:$0xf]
      %v1344 = vld [vmem:[%s1335 + $0x20] sm:$0xf]
      %v1345 = vld [vmem:[%s1335 + $0x24] sm:$0xf]
      %v1346 = vld [vmem:[%s1335 + $0x28] sm:$0xf]
      %v1347 = vld [vmem:[%s1335 + $0x2c] sm:$0xf]
      %v1348 = vld [vmem:[%s1335 + $0x30] sm:$0xf]
      %v1349 = vld [vmem:[%s1335 + $0x34] sm:$0xf]
      %v1350 = vld [vmem:[%s1335 + $0x38] sm:$0xf]
      %v1351 = vld [vmem:[%s1335 + $0x3c] sm:$0xf]
      %v1352 = vunpack.c.l.b16 %v1236
      %v1353 = vunpack.c.l.b16 %v1250
      %v1354 = vunpack.c.l.b16 %v1264
      %v1355 = vunpack.c.l.b16 %v1278
      %v1356 = vunpack.c.l.b16 %v1292
      %v1357 = vunpack.c.l.b16 %v1306
      %v1358 = vunpack.c.l.b16 %v1320
      %v1359 = vunpack.c.l.b16 %v1334
      %v1360 = vpack.c.b16 %v1353, %v1352
      %v1361 = vpack.c.b16 %v1355, %v1354
      %v1362 = vpack.c.b16 %v1357, %v1356
      %v1363 = vpack.c.b16 %v1359, %v1358
      %v1384 = vunpack.c.l.b16 %v1336
      %v1385 = vunpack.c.l.b16 %v1337
      %v1386 = vunpack.c.l.b16 %v1338
      %v1387 = vunpack.c.l.b16 %v1339
      %v1388 = vunpack.c.l.b16 %v1340
      %v1389 = vunpack.c.l.b16 %v1341
      %v1390 = vunpack.c.l.b16 %v1342
      %v1391 = vunpack.c.l.b16 %v1343
      %v1392 = vunpack.c.l.b16 %v1344
      %v1393 = vunpack.c.l.b16 %v1345
      %v1394 = vunpack.c.l.b16 %v1346
      %v1395 = vunpack.c.l.b16 %v1347
      %v1396 = vunpack.c.l.b16 %v1348
      %v1397 = vunpack.c.l.b16 %v1349
      %v1398 = vunpack.c.l.b16 %v1350
      %v1399 = vunpack.c.l.b16 %v1351
      %v1400 = vpack.c.b16 %v1385, %v1384
      %v1401 = vpack.c.b16 %v1387, %v1386
      %v1402 = vpack.c.b16 %v1389, %v1388
      %v1403 = vpack.c.b16 %v1391, %v1390
      %v1404 = vpack.c.b16 %v1393, %v1392
      %v1405 = vpack.c.b16 %v1395, %v1394
      %v1406 = vpack.c.b16 %v1397, %v1396
      %v1407 = vpack.c.b16 %v1399, %v1398
      %1416 = vmatprep.subr.bf16.mxu0 0
      %1417 = vmatpush1.bf16.msra.mxu0 %v1400
      %1418 = vmatprep.subr.bf16.mxu0 0
      %1419 = vmatpush1.bf16.msra.mxu0 %v1401
      %1420 = vmatprep.subr.bf16.mxu0 0
      %1421 = vmatpush1.bf16.msra.mxu0 %v1402
      %1422 = vmatprep.subr.bf16.mxu0 0
      %1423 = vmatpush1.bf16.msra.mxu0 %v1403
      %1424 = vmatprep.subr.bf16.mxu0 0
      %1425 = vmatpush1.bf16.msra.mxu0 %v1404
      %1426 = vmatprep.subr.bf16.mxu0 0
      %1427 = vmatpush1.bf16.msra.mxu0 %v1405
      %1428 = vmatprep.subr.bf16.mxu0 0
      %1429 = vmatpush1.bf16.msra.mxu0 %v1406
      %1430 = vmatprep.subr.bf16.mxu0 0
      %1431 = vmatpush1.bf16.msra.mxu0 %v1407
      %1432 = vmatprep.subr.bf16.mxu0 0
      %1433 = vmatpush1.bf16.msra.mxu0 0
      %1434 = vmatprep.subr.bf16.mxu0 0
      %1435 = vmatpush1.bf16.msra.mxu0 0
      %1436 = vmatprep.subr.bf16.mxu0 0
      %1437 = vmatpush1.bf16.msra.mxu0 0
      %1438 = vmatprep.subr.bf16.mxu0 0
      %1439 = vmatpush1.bf16.msra.mxu0 0
      %1440 = vmatprep.subr.bf16.mxu0 0
      %1441 = vmatpush1.bf16.msra.mxu0 0
      %1442 = vmatprep.subr.bf16.mxu0 0
      %1443 = vmatpush1.bf16.msra.mxu0 0
      %1444 = vmatprep.subr.bf16.mxu0 0
      %1445 = vmatpush1.bf16.msra.mxu0 0
      %1446 = vmatprep.subr.bf16.mxu0 0
      %1447 = vmatpush1.bf16.msra.mxu0 0
      %1448 = vmatprep.mubr.bf16.mxu0 0
      %1449 = vmatmul.mubr.bf16.gmra.mrb[0].mxu0 %v1360
      %v1450 = vpop.f32.mrb[0].mxu0
      %v1451 = vadd.f32 0.0, %v1450
      %v1452 = vpop.f32.mrb[0].mxu0
      %v1453 = vpop.f32.mrb[0].mxu0
      %v1454 = vadd.f32 0.0, %v1453
      %v1455 = vpop.f32.mrb[0].mxu0
      %1456 = vmatprep.mubr.bf16.mxu0 0
      %1457 = vmatmul.mubr.bf16.gmra.mrb[0].mxu0 %v1361
      %v1458 = vpop.f32.mrb[0].mxu0
      %v1459 = vadd.f32 0.0, %v1458
      %v1460 = vpop.f32.mrb[0].mxu0
      %v1461 = vpop.f32.mrb[0].mxu0
      %v1462 = vadd.f32 0.0, %v1461
      %v1463 = vpop.f32.mrb[0].mxu0
      %1464 = vmatprep.mubr.bf16.mxu0 0
      %1465 = vmatmul.mubr.bf16.gmra.mrb[0].mxu0 %v1362
      %v1466 = vpop.f32.mrb[0].mxu0
      %v1467 = vadd.f32 0.0, %v1466
      %v1468 = vpop.f32.mrb[0].mxu0
      %v1469 = vpop.f32.mrb[0].mxu0
      %v1470 = vadd.f32 0.0, %v1469
      %v1471 = vpop.f32.mrb[0].mxu0
      %1472 = vmatprep.mubr.bf16.mxu0 0
      %1473 = vmatmul.mubr.bf16.gmra.mrb[0].mxu0 %v1363
      %v1474 = vpop.f32.mrb[0].mxu0
      %v1475 = vadd.f32 0.0, %v1474
      %v1476 = vpop.f32.mrb[0].mxu0
      %v1477 = vpop.f32.mrb[0].mxu0
      %v1478 = vadd.f32 0.0, %v1477
      %v1479 = vpop.f32.mrb[0].mxu0
      %1480 = vdwg.mxu0
      %v1481 = vadd.f32 %v1199, %v1451
      %v1482 = vadd.f32 %v1200, %v1454
      %v1483 = vadd.f32 %v1201, %v1459
      %v1484 = vadd.f32 %v1202, %v1462
      %v1485 = vadd.f32 %v1203, %v1467
      %v1486 = vadd.f32 %v1204, %v1470
      %v1487 = vadd.f32 %v1205, %v1475
      %v1488 = vadd.f32 %v1206, %v1478
      %s1489 = sadd.s32 %s246, 1
      %s1490 = smul.u32 %s1489, 2
      %s1491 = smul.addr %s1490, 4
      %s1492 = scalar_lea.vmem %s226, %s1491
      %v1493 = vld [vmem:[%s1492] sm:$0xf]
      %v1494 = vld [vmem:[%s1492 + $0x8] sm:$0xf]
      %v1495 = vld [vmem:[%s1492 + $0x10] sm:$0xf]
      %v1496 = vld [vmem:[%s1492 + $0x18] sm:$0xf]
      %v1497 = vld [vmem:[%s1492 + $0x20] sm:$0xf]
      %v1498 = vld [vmem:[%s1492 + $0x28] sm:$0xf]
      %v1499 = vld [vmem:[%s1492 + $0x30] sm:$0xf]
      %v1500 = vld [vmem:[%s1492 + $0x38] sm:$0xf]
      %s1501 = scalar_lea.vmem %s1, 384
      %v1502 = vld [vmem:[%s1501] sm:$0xf]
      %v1503 = vld [vmem:[%s1501 + $0x4] sm:$0xf]
      %v1504 = vld [vmem:[%s1501 + $0x8] sm:$0xf]
      %v1505 = vld [vmem:[%s1501 + $0xc] sm:$0xf]
      %v1506 = vld [vmem:[%s1501 + $0x10] sm:$0xf]
      %v1507 = vld [vmem:[%s1501 + $0x14] sm:$0xf]
      %v1508 = vld [vmem:[%s1501 + $0x18] sm:$0xf]
      %v1509 = vld [vmem:[%s1501 + $0x1c] sm:$0xf]
      %v1510 = vld [vmem:[%s1501 + $0x20] sm:$0xf]
      %v1511 = vld [vmem:[%s1501 + $0x24] sm:$0xf]
      %v1512 = vld [vmem:[%s1501 + $0x28] sm:$0xf]
      %v1513 = vld [vmem:[%s1501 + $0x2c] sm:$0xf]
      %v1514 = vld [vmem:[%s1501 + $0x30] sm:$0xf]
      %v1515 = vld [vmem:[%s1501 + $0x34] sm:$0xf]
      %v1516 = vld [vmem:[%s1501 + $0x38] sm:$0xf]
      %v1517 = vld [vmem:[%s1501 + $0x3c] sm:$0xf]
      %v1526 = vunpack.c.l.b16 %v1493
      %v1527 = vunpack.c.l.b16 %v1494
      %v1528 = vunpack.c.l.b16 %v1495
      %v1529 = vunpack.c.l.b16 %v1496
      %v1530 = vunpack.c.l.b16 %v1497
      %v1531 = vunpack.c.l.b16 %v1498
      %v1532 = vunpack.c.l.b16 %v1499
      %v1533 = vunpack.c.l.b16 %v1500
      %v1534 = vpack.c.b16 %v1527, %v1526
      %v1535 = vpack.c.b16 %v1529, %v1528
      %v1536 = vpack.c.b16 %v1531, %v1530
      %v1537 = vpack.c.b16 %v1533, %v1532
      %v1558 = vunpack.c.l.b16 %v1502
      %v1559 = vunpack.c.l.b16 %v1503
      %v1560 = vunpack.c.l.b16 %v1504
      %v1561 = vunpack.c.l.b16 %v1505
      %v1562 = vunpack.c.l.b16 %v1506
      %v1563 = vunpack.c.l.b16 %v1507
      %v1564 = vunpack.c.l.b16 %v1508
      %v1565 = vunpack.c.l.b16 %v1509
      %v1566 = vunpack.c.l.b16 %v1510
      %v1567 = vunpack.c.l.b16 %v1511
      %v1568 = vunpack.c.l.b16 %v1512
      %v1569 = vunpack.c.l.b16 %v1513
      %v1570 = vunpack.c.l.b16 %v1514
      %v1571 = vunpack.c.l.b16 %v1515
      %v1572 = vunpack.c.l.b16 %v1516
      %v1573 = vunpack.c.l.b16 %v1517
      %v1574 = vpack.c.b16 %v1559, %v1558
      %v1575 = vpack.c.b16 %v1561, %v1560
      %v1576 = vpack.c.b16 %v1563, %v1562
      %v1577 = vpack.c.b16 %v1565, %v1564
      %v1578 = vpack.c.b16 %v1567, %v1566
      %v1579 = vpack.c.b16 %v1569, %v1568
      %v1580 = vpack.c.b16 %v1571, %v1570
      %v1581 = vpack.c.b16 %v1573, %v1572
      %1590 = vmatprep.subr.bf16.mxu0 0
      %1591 = vmatpush1.bf16.msra.mxu0 %v1574
      %1592 = vmatprep.subr.bf16.mxu0 0
      %1593 = vmatpush1.bf16.msra.mxu0 %v1575
      %1594 = vmatprep.subr.bf16.mxu0 0
      %1595 = vmatpush1.bf16.msra.mxu0 %v1576
      %1596 = vmatprep.subr.bf16.mxu0 0
      %1597 = vmatpush1.bf16.msra.mxu0 %v1577
      %1598 = vmatprep.subr.bf16.mxu0 0
      %1599 = vmatpush1.bf16.msra.mxu0 %v1578
      %1600 = vmatprep.subr.bf16.mxu0 0
      %1601 = vmatpush1.bf16.msra.mxu0 %v1579
      %1602 = vmatprep.subr.bf16.mxu0 0
      %1603 = vmatpush1.bf16.msra.mxu0 %v1580
      %1604 = vmatprep.subr.bf16.mxu0 0
      %1605 = vmatpush1.bf16.msra.mxu0 %v1581
      %1606 = vmatprep.subr.bf16.mxu0 0
      %1607 = vmatpush1.bf16.msra.mxu0 0
      %1608 = vmatprep.subr.bf16.mxu0 0
      %1609 = vmatpush1.bf16.msra.mxu0 0
      %1610 = vmatprep.subr.bf16.mxu0 0
      %1611 = vmatpush1.bf16.msra.mxu0 0
      %1612 = vmatprep.subr.bf16.mxu0 0
      %1613 = vmatpush1.bf16.msra.mxu0 0
      %1614 = vmatprep.subr.bf16.mxu0 0
      %1615 = vmatpush1.bf16.msra.mxu0 0
      %1616 = vmatprep.subr.bf16.mxu0 0
      %1617 = vmatpush1.bf16.msra.mxu0 0
      %1618 = vmatprep.subr.bf16.mxu0 0
      %1619 = vmatpush1.bf16.msra.mxu0 0
      %1620 = vmatprep.subr.bf16.mxu0 0
      %1621 = vmatpush1.bf16.msra.mxu0 0
      %1622 = vmatprep.mubr.bf16.mxu0 0
      %1623 = vmatmul.mubr.bf16.gmra.mrb[0].mxu0 %v1534
      %v1624 = vpop.f32.mrb[0].mxu0
      %v1625 = vadd.f32 0.0, %v1624
      %v1626 = vpop.f32.mrb[0].mxu0
      %v1627 = vpop.f32.mrb[0].mxu0
      %v1628 = vadd.f32 0.0, %v1627
      %v1629 = vpop.f32.mrb[0].mxu0
      %1630 = vmatprep.mubr.bf16.mxu0 0
      %1631 = vmatmul.mubr.bf16.gmra.mrb[0].mxu0 %v1535
      %v1632 = vpop.f32.mrb[0].mxu0
      %v1633 = vadd.f32 0.0, %v1632
      %v1634 = vpop.f32.mrb[0].mxu0
      %v1635 = vpop.f32.mrb[0].mxu0
      %v1636 = vadd.f32 0.0, %v1635
      %v1637 = vpop.f32.mrb[0].mxu0
      %1638 = vmatprep.mubr.bf16.mxu0 0
      %1639 = vmatmul.mubr.bf16.gmra.mrb[0].mxu0 %v1536
      %v1640 = vpop.f32.mrb[0].mxu0
      %v1641 = vadd.f32 0.0, %v1640
      %v1642 = vpop.f32.mrb[0].mxu0
      %v1643 = vpop.f32.mrb[0].mxu0
      %v1644 = vadd.f32 0.0, %v1643
      %v1645 = vpop.f32.mrb[0].mxu0
      %1646 = vmatprep.mubr.bf16.mxu0 0
      %1647 = vmatmul.mubr.bf16.gmra.mrb[0].mxu0 %v1537
      %v1648 = vpop.f32.mrb[0].mxu0
      %v1649 = vadd.f32 0.0, %v1648
      %v1650 = vpop.f32.mrb[0].mxu0
      %v1651 = vpop.f32.mrb[0].mxu0
      %v1652 = vadd.f32 0.0, %v1651
      %v1653 = vpop.f32.mrb[0].mxu0
      %1654 = vdwg.mxu0
      %v1655 = vadd.f32 %v1481, %v1625
      %v1656 = vadd.f32 %v1482, %v1628
      %v1657 = vadd.f32 %v1483, %v1633
      %v1658 = vadd.f32 %v1484, %v1636
      %v1659 = vadd.f32 %v1485, %v1641
      %v1660 = vadd.f32 %v1486, %v1644
      %v1661 = vadd.f32 %v1487, %v1649
      %v1662 = vadd.f32 %v1488, %v1652
      %s1663 = sadd.s32 %s1490, 18
      %s1664 = smul.addr %s1663, 4
      %s1665 = scalar_lea.vmem %s226, %s1664
      %v1666 = vld [vmem:[%s1665] sm:$0xf]
      %v1667 = vld [vmem:[%s1665 + $0x8] sm:$0xf]
      %v1668 = vld [vmem:[%s1665 + $0x10] sm:$0xf]
      %v1669 = vld [vmem:[%s1665 + $0x18] sm:$0xf]
      %v1670 = vld [vmem:[%s1665 + $0x20] sm:$0xf]
      %v1671 = vld [vmem:[%s1665 + $0x28] sm:$0xf]
      %v1672 = vld [vmem:[%s1665 + $0x30] sm:$0xf]
      %v1673 = vld [vmem:[%s1665 + $0x38] sm:$0xf]
      %s1674 = scalar_lea.vmem %s1, 448
      %v1675 = vld [vmem:[%s1674] sm:$0xf]
      %v1676 = vld [vmem:[%s1674 + $0x4] sm:$0xf]
      %v1677 = vld [vmem:[%s1674 + $0x8] sm:$0xf]
      %v1678 = vld [vmem:[%s1674 + $0xc] sm:$0xf]
      %v1679 = vld [vmem:[%s1674 + $0x10] sm:$0xf]
      %v1680 = vld [vmem:[%s1674 + $0x14] sm:$0xf]
      %v1681 = vld [vmem:[%s1674 + $0x18] sm:$0xf]
      %v1682 = vld [vmem:[%s1674 + $0x1c] sm:$0xf]
      %v1683 = vld [vmem:[%s1674 + $0x20] sm:$0xf]
      %v1684 = vld [vmem:[%s1674 + $0x24] sm:$0xf]
      %v1685 = vld [vmem:[%s1674 + $0x28] sm:$0xf]
      %v1686 = vld [vmem:[%s1674 + $0x2c] sm:$0xf]
      %v1687 = vld [vmem:[%s1674 + $0x30] sm:$0xf]
      %v1688 = vld [vmem:[%s1674 + $0x34] sm:$0xf]
      %v1689 = vld [vmem:[%s1674 + $0x38] sm:$0xf]
      %v1690 = vld [vmem:[%s1674 + $0x3c] sm:$0xf]
      %v1699 = vunpack.c.l.b16 %v1666
      %v1700 = vunpack.c.l.b16 %v1667
      %v1701 = vunpack.c.l.b16 %v1668
      %v1702 = vunpack.c.l.b16 %v1669
      %v1703 = vunpack.c.l.b16 %v1670
      %v1704 = vunpack.c.l.b16 %v1671
      %v1705 = vunpack.c.l.b16 %v1672
      %v1706 = vunpack.c.l.b16 %v1673
      %v1707 = vpack.c.b16 %v1700, %v1699
      %v1708 = vpack.c.b16 %v1702, %v1701
      %v1709 = vpack.c.b16 %v1704, %v1703
      %v1710 = vpack.c.b16 %v1706, %v1705
      %v1731 = vunpack.c.l.b16 %v1675
      %v1732 = vunpack.c.l.b16 %v1676
      %v1733 = vunpack.c.l.b16 %v1677
      %v1734 = vunpack.c.l.b16 %v1678
      %v1735 = vunpack.c.l.b16 %v1679
      %v1736 = vunpack.c.l.b16 %v1680
      %v1737 = vunpack.c.l.b16 %v1681
      %v1738 = vunpack.c.l.b16 %v1682
      %v1739 = vunpack.c.l.b16 %v1683
      %v1740 = vunpack.c.l.b16 %v1684
      %v1741 = vunpack.c.l.b16 %v1685
      %v1742 = vunpack.c.l.b16 %v1686
      %v1743 = vunpack.c.l.b16 %v1687
      %v1744 = vunpack.c.l.b16 %v1688
      %v1745 = vunpack.c.l.b16 %v1689
      %v1746 = vunpack.c.l.b16 %v1690
      %v1747 = vpack.c.b16 %v1732, %v1731
      %v1748 = vpack.c.b16 %v1734, %v1733
      %v1749 = vpack.c.b16 %v1736, %v1735
      %v1750 = vpack.c.b16 %v1738, %v1737
      %v1751 = vpack.c.b16 %v1740, %v1739
      %v1752 = vpack.c.b16 %v1742, %v1741
      %v1753 = vpack.c.b16 %v1744, %v1743
      %v1754 = vpack.c.b16 %v1746, %v1745
      %1763 = vmatprep.subr.bf16.mxu0 0
      %1764 = vmatpush1.bf16.msra.mxu0 %v1747
      %1765 = vmatprep.subr.bf16.mxu0 0
      %1766 = vmatpush1.bf16.msra.mxu0 %v1748
      %1767 = vmatprep.subr.bf16.mxu0 0
      %1768 = vmatpush1.bf16.msra.mxu0 %v1749
      %1769 = vmatprep.subr.bf16.mxu0 0
      %1770 = vmatpush1.bf16.msra.mxu0 %v1750
      %1771 = vmatprep.subr.bf16.mxu0 0
      %1772 = vmatpush1.bf16.msra.mxu0 %v1751
      %1773 = vmatprep.subr.bf16.mxu0 0
      %1774 = vmatpush1.bf16.msra.mxu0 %v1752
      %1775 = vmatprep.subr.bf16.mxu0 0
      %1776 = vmatpush1.bf16.msra.mxu0 %v1753
      %1777 = vmatprep.subr.bf16.mxu0 0
      %1778 = vmatpush1.bf16.msra.mxu0 %v1754
      %1779 = vmatprep.subr.bf16.mxu0 0
      %1780 = vmatpush1.bf16.msra.mxu0 0
      %1781 = vmatprep.subr.bf16.mxu0 0
      %1782 = vmatpush1.bf16.msra.mxu0 0
      %1783 = vmatprep.subr.bf16.mxu0 0
      %1784 = vmatpush1.bf16.msra.mxu0 0
      %1785 = vmatprep.subr.bf16.mxu0 0
      %1786 = vmatpush1.bf16.msra.mxu0 0
      %1787 = vmatprep.subr.bf16.mxu0 0
      %1788 = vmatpush1.bf16.msra.mxu0 0
      %1789 = vmatprep.subr.bf16.mxu0 0
      %1790 = vmatpush1.bf16.msra.mxu0 0
      %1791 = vmatprep.subr.bf16.mxu0 0
      %1792 = vmatpush1.bf16.msra.mxu0 0
      %1793 = vmatprep.subr.bf16.mxu0 0
      %1794 = vmatpush1.bf16.msra.mxu0 0
      %1795 = vmatprep.mubr.bf16.mxu0 0
      %1796 = vmatmul.mubr.bf16.gmra.mrb[0].mxu0 %v1707
      %v1797 = vpop.f32.mrb[0].mxu0
      %v1798 = vadd.f32 0.0, %v1797
      %v1799 = vpop.f32.mrb[0].mxu0
      %v1800 = vpop.f32.mrb[0].mxu0
      %v1801 = vadd.f32 0.0, %v1800
      %v1802 = vpop.f32.mrb[0].mxu0
      %1803 = vmatprep.mubr.bf16.mxu0 0
      %1804 = vmatmul.mubr.bf16.gmra.mrb[0].mxu0 %v1708
      %v1805 = vpop.f32.mrb[0].mxu0
      %v1806 = vadd.f32 0.0, %v1805
      %v1807 = vpop.f32.mrb[0].mxu0
      %v1808 = vpop.f32.mrb[0].mxu0
      %v1809 = vadd.f32 0.0, %v1808
      %v1810 = vpop.f32.mrb[0].mxu0
      %1811 = vmatprep.mubr.bf16.mxu0 0
      %1812 = vmatmul.mubr.bf16.gmra.mrb[0].mxu0 %v1709
      %v1813 = vpop.f32.mrb[0].mxu0
      %v1814 = vadd.f32 0.0, %v1813
      %v1815 = vpop.f32.mrb[0].mxu0
      %v1816 = vpop.f32.mrb[0].mxu0
      %v1817 = vadd.f32 0.0, %v1816
      %v1818 = vpop.f32.mrb[0].mxu0
      %1819 = vmatprep.mubr.bf16.mxu0 0
      %1820 = vmatmul.mubr.bf16.gmra.mrb[0].mxu0 %v1710
      %v1821 = vpop.f32.mrb[0].mxu0
      %v1822 = vadd.f32 0.0, %v1821
      %v1823 = vpop.f32.mrb[0].mxu0
      %v1824 = vpop.f32.mrb[0].mxu0
      %v1825 = vadd.f32 0.0, %v1824
      %v1826 = vpop.f32.mrb[0].mxu0
      %1827 = vdwg.mxu0
      %v1828 = vadd.f32 %v1655, %v1798
      %v1829 = vadd.f32 %v1656, %v1801
      %v1830 = vadd.f32 %v1657, %v1806
      %v1831 = vadd.f32 %v1658, %v1809
      %v1832 = vadd.f32 %v1659, %v1814
      %v1833 = vadd.f32 %v1660, %v1817
      %v1834 = vadd.f32 %v1661, %v1822
      %v1835 = vadd.f32 %v1662, %v1825
      %v1836 = vld [vmem:[%s1492] sm:$0xf]
      %v1837 = vld [vmem:[%s1492 + $0x4] sm:$0x1]
      %v1838 = vld [vmem:[%s1492 + $0x8] sm:$0xf]
      %v1839 = vld [vmem:[%s1492 + $0xc] sm:$0x1]
      %v1840 = vld [vmem:[%s1492 + $0x10] sm:$0xf]
      %v1841 = vld [vmem:[%s1492 + $0x14] sm:$0x1]
      %v1842 = vld [vmem:[%s1492 + $0x18] sm:$0xf]
      %v1843 = vld [vmem:[%s1492 + $0x1c] sm:$0x1]
      %v1844 = vld [vmem:[%s1492 + $0x20] sm:$0xf]
      %v1845 = vld [vmem:[%s1492 + $0x24] sm:$0x1]
      %v1846 = vld [vmem:[%s1492 + $0x28] sm:$0xf]
      %v1847 = vld [vmem:[%s1492 + $0x2c] sm:$0x1]
      %v1848 = vld [vmem:[%s1492 + $0x30] sm:$0xf]
      %v1849 = vld [vmem:[%s1492 + $0x34] sm:$0x1]
      %v1850 = vld [vmem:[%s1492 + $0x38] sm:$0xf]
      %v1851 = vld [vmem:[%s1492 + $0x3c] sm:$0x1]
      %v1853 = vshrl.u32 %v1836, 16
      %v1855 = vrot.slane %v1853, 4
      %v1856 = vshll.u32 %v1836, 16
      %v1858 = vrot.slane %v1856, 5
      %v1859 = vor.u32 %v1855, %v1858
      %v1860 = vrot.slane %v1859, 4
      %v1862 = vshll.u32 %v1837, 16
      %v1864 = vrot.slane %v1862, 5
      %v1865 = vsel %vm594, %v1860, %v1864
      %v1867 = vshrl.u32 %v1838, 16
      %v1869 = vrot.slane %v1867, 4
      %v1870 = vshll.u32 %v1838, 16
      %v1872 = vrot.slane %v1870, 5
      %v1873 = vor.u32 %v1869, %v1872
      %v1874 = vrot.slane %v1873, 4
      %v1876 = vshll.u32 %v1839, 16
      %v1878 = vrot.slane %v1876, 5
      %v1879 = vsel %vm594, %v1874, %v1878
      %v1881 = vshrl.u32 %v1840, 16
      %v1883 = vrot.slane %v1881, 4
      %v1884 = vshll.u32 %v1840, 16
      %v1886 = vrot.slane %v1884, 5
      %v1887 = vor.u32 %v1883, %v1886
      %v1888 = vrot.slane %v1887, 4
      %v1890 = vshll.u32 %v1841, 16
      %v1892 = vrot.slane %v1890, 5
      %v1893 = vsel %vm594, %v1888, %v1892
      %v1895 = vshrl.u32 %v1842, 16
      %v1897 = vrot.slane %v1895, 4
      %v1898 = vshll.u32 %v1842, 16
      %v1900 = vrot.slane %v1898, 5
      %v1901 = vor.u32 %v1897, %v1900
      %v1902 = vrot.slane %v1901, 4
      %v1904 = vshll.u32 %v1843, 16
      %v1906 = vrot.slane %v1904, 5
      %v1907 = vsel %vm594, %v1902, %v1906
      %v1909 = vshrl.u32 %v1844, 16
      %v1911 = vrot.slane %v1909, 4
      %v1912 = vshll.u32 %v1844, 16
      %v1914 = vrot.slane %v1912, 5
      %v1915 = vor.u32 %v1911, %v1914
      %v1916 = vrot.slane %v1915, 4
      %v1918 = vshll.u32 %v1845, 16
      %v1920 = vrot.slane %v1918, 5
      %v1921 = vsel %vm594, %v1916, %v1920
      %v1923 = vshrl.u32 %v1846, 16
      %v1925 = vrot.slane %v1923, 4
      %v1926 = vshll.u32 %v1846, 16
      %v1928 = vrot.slane %v1926, 5
      %v1929 = vor.u32 %v1925, %v1928
      %v1930 = vrot.slane %v1929, 4
      %v1932 = vshll.u32 %v1847, 16
      %v1934 = vrot.slane %v1932, 5
      %v1935 = vsel %vm594, %v1930, %v1934
      %v1937 = vshrl.u32 %v1848, 16
      %v1939 = vrot.slane %v1937, 4
      %v1940 = vshll.u32 %v1848, 16
      %v1942 = vrot.slane %v1940, 5
      %v1943 = vor.u32 %v1939, %v1942
      %v1944 = vrot.slane %v1943, 4
      %v1946 = vshll.u32 %v1849, 16
      %v1948 = vrot.slane %v1946, 5
      %v1949 = vsel %vm594, %v1944, %v1948
      %v1951 = vshrl.u32 %v1850, 16
      %v1953 = vrot.slane %v1951, 4
      %v1954 = vshll.u32 %v1850, 16
      %v1956 = vrot.slane %v1954, 5
      %v1957 = vor.u32 %v1953, %v1956
      %v1958 = vrot.slane %v1957, 4
      %v1960 = vshll.u32 %v1851, 16
      %v1962 = vrot.slane %v1960, 5
      %v1963 = vsel %vm594, %v1958, %v1962
      %s1964 = scalar_lea.vmem %s1, 512
      %v1965 = vld [vmem:[%s1964] sm:$0xf]
      %v1966 = vld [vmem:[%s1964 + $0x4] sm:$0xf]
      %v1967 = vld [vmem:[%s1964 + $0x8] sm:$0xf]
      %v1968 = vld [vmem:[%s1964 + $0xc] sm:$0xf]
      %v1969 = vld [vmem:[%s1964 + $0x10] sm:$0xf]
      %v1970 = vld [vmem:[%s1964 + $0x14] sm:$0xf]
      %v1971 = vld [vmem:[%s1964 + $0x18] sm:$0xf]
      %v1972 = vld [vmem:[%s1964 + $0x1c] sm:$0xf]
      %v1973 = vld [vmem:[%s1964 + $0x20] sm:$0xf]
      %v1974 = vld [vmem:[%s1964 + $0x24] sm:$0xf]
      %v1975 = vld [vmem:[%s1964 + $0x28] sm:$0xf]
      %v1976 = vld [vmem:[%s1964 + $0x2c] sm:$0xf]
      %v1977 = vld [vmem:[%s1964 + $0x30] sm:$0xf]
      %v1978 = vld [vmem:[%s1964 + $0x34] sm:$0xf]
      %v1979 = vld [vmem:[%s1964 + $0x38] sm:$0xf]
      %v1980 = vld [vmem:[%s1964 + $0x3c] sm:$0xf]
      %v1981 = vunpack.c.l.b16 %v1865
      %v1982 = vunpack.c.l.b16 %v1879
      %v1983 = vunpack.c.l.b16 %v1893
      %v1984 = vunpack.c.l.b16 %v1907
      %v1985 = vunpack.c.l.b16 %v1921
      %v1986 = vunpack.c.l.b16 %v1935
      %v1987 = vunpack.c.l.b16 %v1949
      %v1988 = vunpack.c.l.b16 %v1963
      %v1989 = vpack.c.b16 %v1982, %v1981
      %v1990 = vpack.c.b16 %v1984, %v1983
      %v1991 = vpack.c.b16 %v1986, %v1985
      %v1992 = vpack.c.b16 %v1988, %v1987
      %v2013 = vunpack.c.l.b16 %v1965
      %v2014 = vunpack.c.l.b16 %v1966
      %v2015 = vunpack.c.l.b16 %v1967
      %v2016 = vunpack.c.l.b16 %v1968
      %v2017 = vunpack.c.l.b16 %v1969
      %v2018 = vunpack.c.l.b16 %v1970
      %v2019 = vunpack.c.l.b16 %v1971
      %v2020 = vunpack.c.l.b16 %v1972
      %v2021 = vunpack.c.l.b16 %v1973
      %v2022 = vunpack.c.l.b16 %v1974
      %v2023 = vunpack.c.l.b16 %v1975
      %v2024 = vunpack.c.l.b16 %v1976
      %v2025 = vunpack.c.l.b16 %v1977
      %v2026 = vunpack.c.l.b16 %v1978
      %v2027 = vunpack.c.l.b16 %v1979
      %v2028 = vunpack.c.l.b16 %v1980
      %v2029 = vpack.c.b16 %v2014, %v2013
      %v2030 = vpack.c.b16 %v2016, %v2015
      %v2031 = vpack.c.b16 %v2018, %v2017
      %v2032 = vpack.c.b16 %v2020, %v2019
      %v2033 = vpack.c.b16 %v2022, %v2021
      %v2034 = vpack.c.b16 %v2024, %v2023
      %v2035 = vpack.c.b16 %v2026, %v2025
      %v2036 = vpack.c.b16 %v2028, %v2027
      %2045 = vmatprep.subr.bf16.mxu0 0
      %2046 = vmatpush1.bf16.msra.mxu0 %v2029
      %2047 = vmatprep.subr.bf16.mxu0 0
      %2048 = vmatpush1.bf16.msra.mxu0 %v2030
      %2049 = vmatprep.subr.bf16.mxu0 0
      %2050 = vmatpush1.bf16.msra.mxu0 %v2031
      %2051 = vmatprep.subr.bf16.mxu0 0
      %2052 = vmatpush1.bf16.msra.mxu0 %v2032
      %2053 = vmatprep.subr.bf16.mxu0 0
      %2054 = vmatpush1.bf16.msra.mxu0 %v2033
      %2055 = vmatprep.subr.bf16.mxu0 0
      %2056 = vmatpush1.bf16.msra.mxu0 %v2034
      %2057 = vmatprep.subr.bf16.mxu0 0
      %2058 = vmatpush1.bf16.msra.mxu0 %v2035
      %2059 = vmatprep.subr.bf16.mxu0 0
      %2060 = vmatpush1.bf16.msra.mxu0 %v2036
      %2061 = vmatprep.subr.bf16.mxu0 0
      %2062 = vmatpush1.bf16.msra.mxu0 0
      %2063 = vmatprep.subr.bf16.mxu0 0
      %2064 = vmatpush1.bf16.msra.mxu0 0
      %2065 = vmatprep.subr.bf16.mxu0 0
      %2066 = vmatpush1.bf16.msra.mxu0 0
      %2067 = vmatprep.subr.bf16.mxu0 0
      %2068 = vmatpush1.bf16.msra.mxu0 0
      %2069 = vmatprep.subr.bf16.mxu0 0
      %2070 = vmatpush1.bf16.msra.mxu0 0
      %2071 = vmatprep.subr.bf16.mxu0 0
      %2072 = vmatpush1.bf16.msra.mxu0 0
      %2073 = vmatprep.subr.bf16.mxu0 0
      %2074 = vmatpush1.bf16.msra.mxu0 0
      %2075 = vmatprep.subr.bf16.mxu0 0
      %2076 = vmatpush1.bf16.msra.mxu0 0
      %2077 = vmatprep.mubr.bf16.mxu0 0
      %2078 = vmatmul.mubr.bf16.gmra.mrb[0].mxu0 %v1989
      %v2079 = vpop.f32.mrb[0].mxu0
      %v2080 = vadd.f32 0.0, %v2079
      %v2081 = vpop.f32.mrb[0].mxu0
      %v2082 = vpop.f32.mrb[0].mxu0
      %v2083 = vadd.f32 0.0, %v2082
      %v2084 = vpop.f32.mrb[0].mxu0
      %2085 = vmatprep.mubr.bf16.mxu0 0
      %2086 = vmatmul.mubr.bf16.gmra.mrb[0].mxu0 %v1990
      %v2087 = vpop.f32.mrb[0].mxu0
      %v2088 = vadd.f32 0.0, %v2087
      %v2089 = vpop.f32.mrb[0].mxu0
      %v2090 = vpop.f32.mrb[0].mxu0
      %v2091 = vadd.f32 0.0, %v2090
      %v2092 = vpop.f32.mrb[0].mxu0
      %2093 = vmatprep.mubr.bf16.mxu0 0
      %2094 = vmatmul.mubr.bf16.gmra.mrb[0].mxu0 %v1991
      %v2095 = vpop.f32.mrb[0].mxu0
      %v2096 = vadd.f32 0.0, %v2095
      %v2097 = vpop.f32.mrb[0].mxu0
      %v2098 = vpop.f32.mrb[0].mxu0
      %v2099 = vadd.f32 0.0, %v2098
      %v2100 = vpop.f32.mrb[0].mxu0
      %2101 = vmatprep.mubr.bf16.mxu0 0
      %2102 = vmatmul.mubr.bf16.gmra.mrb[0].mxu0 %v1992
      %v2103 = vpop.f32.mrb[0].mxu0
      %v2104 = vadd.f32 0.0, %v2103
      %v2105 = vpop.f32.mrb[0].mxu0
      %v2106 = vpop.f32.mrb[0].mxu0
      %v2107 = vadd.f32 0.0, %v2106
      %v2108 = vpop.f32.mrb[0].mxu0
      %2109 = vdwg.mxu0
      %v2110 = vadd.f32 %v1828, %v2080
      %v2111 = vadd.f32 %v1829, %v2083
      %v2112 = vadd.f32 %v1830, %v2088
      %v2113 = vadd.f32 %v1831, %v2091
      %v2114 = vadd.f32 %v1832, %v2096
      %v2115 = vadd.f32 %v1833, %v2099
      %v2116 = vadd.f32 %v1834, %v2104
      %v2117 = vadd.f32 %v1835, %v2107
      %v2118 = vld [vmem:[%s2] sm:$0x1]
      %v2120 = vlaneseq
      %v2121 = vshrl.u32 %v2120, 7
      %v2122 = vsub.s32 0, %v2121
      %v2123 = vrot.slane %v2118, %v2122
      %v2125 = vadd.f32 %v2110, %v2123
      %v2126 = vadd.f32 %v2111, %v2123
      %v2127 = vadd.f32 %v2112, %v2123
      %v2128 = vadd.f32 %v2113, %v2123
      %v2129 = vadd.f32 %v2114, %v2123
      %v2130 = vadd.f32 %v2115, %v2123
      %v2131 = vadd.f32 %v2116, %v2123
      %v2132 = vadd.f32 %v2117, %v2123
      %v2133 = vadd.f32 %v2125, %v2126
      %v2134 = vadd.f32 %v2133, %v2127
      %v2135 = vadd.f32 %v2134, %v2128
      %v2136 = vadd.f32 %v2135, %v2129
      %v2137 = vadd.f32 %v2136, %v2130
      %v2138 = vadd.f32 %v2137, %v2131
      %v2139 = vadd.f32 %v2138, %v2132
      %v2140 = vrot.slane %v2139, 4
      %v2141 = vadd.f32 %v2139, %v2140
      %v2142 = vrot.slane %v2141, 2
      %v2143 = vadd.f32 %v2141, %v2142
      %v2144 = vrot.slane %v2143, 1
      %v2145 = vadd.f32 %v2143, %v2144
      %2146 = vst [vmem:[%s244] sm:$0x1] %v2145
      %v2147 = vmul.f32 %v2125, %v2125
      %v2148 = vmul.f32 %v2126, %v2126
      %v2149 = vmul.f32 %v2127, %v2127
      %v2150 = vmul.f32 %v2128, %v2128
      %v2151 = vmul.f32 %v2129, %v2129
      %v2152 = vmul.f32 %v2130, %v2130
      %v2153 = vmul.f32 %v2131, %v2131
      %v2154 = vmul.f32 %v2132, %v2132
      %v2155 = vadd.f32 %v2147, %v2148
      %v2156 = vadd.f32 %v2155, %v2149
      %v2157 = vadd.f32 %v2156, %v2150
      %v2158 = vadd.f32 %v2157, %v2151
      %v2159 = vadd.f32 %v2158, %v2152
      %v2160 = vadd.f32 %v2159, %v2153
      %v2161 = vadd.f32 %v2160, %v2154
      %v2162 = vrot.slane %v2161, 4
      %v2163 = vadd.f32 %v2161, %v2162
      %v2164 = vrot.slane %v2163, 2
      %v2165 = vadd.f32 %v2163, %v2164
      %v2166 = vrot.slane %v2165, 1
      %v2167 = vadd.f32 %v2165, %v2166
      %2168 = vst [vmem:[%s244 + $0x1] sm:$0x1] %v2167
      %v2169 = vpack.c.bf16 %v2125, %v2125
      %v2170 = vpack.c.bf16 %v2126, %v2126
      %v2171 = vpack.c.bf16 %v2127, %v2127
      %v2172 = vpack.c.bf16 %v2128, %v2128
      %v2173 = vpack.c.bf16 %v2129, %v2129
      %v2174 = vpack.c.bf16 %v2130, %v2130
      %v2175 = vpack.c.bf16 %v2131, %v2131
      %v2176 = vpack.c.bf16 %v2132, %v2132
      %2177 = vst [vmem:[%s236] sm:$0xf] %v2169
      %2178 = vst [vmem:[%s236 + $0x4] sm:$0xf] %v2170
      %2179 = vst [vmem:[%s236 + $0x8] sm:$0xf] %v2171
      %2180 = vst [vmem:[%s236 + $0xc] sm:$0xf] %v2172
      %2181 = vst [vmem:[%s236 + $0x10] sm:$0xf] %v2173
      %2182 = vst [vmem:[%s236 + $0x14] sm:$0xf] %v2174
      %2183 = vst [vmem:[%s236 + $0x18] sm:$0xf] %v2175
      %2184 = vst [vmem:[%s236 + $0x1c] sm:$0xf] %v2176
      %s2185 = smul.u32 8, %s21
      %p2186 = scmp.lt.s32.totalorder %s20, 1
      %s2187 = scalar_select %p2186, %s20, 1
      %p2188 = scmp.lt.s32.totalorder %s2185, 7
      %s2189 = scalar_select %p2188, %s2185, 7
      %s2190 = smul.addr %s2187, 8
      %s2191 = sadd.s32 %s2189, %s2190
      %s2192 = smul.addr %s2191, 4
      %s2193 = scalar_lea.vmem %s3, %s2192
      %p2194 = scmp.lt.s32.totalorder %s20, 1
      %s2195 = scalar_select %p2194, %s20, 1
      %p2196 = scmp.lt.s32.totalorder %s21, 0
      %s2197 = scalar_select %p2196, %s21, 0
      %s2198 = sadd.s32 %s2197, %s2195
      %s2199 = smul.addr %s2198, 2
      %s2200 = scalar_lea.vmem %s4, %s2199
      // Predicated region
      $region33: #{resblock_forward.5} parent=31 // pred_check
        %p2201 = pneg %p116
      $region34: #{resblock_forward.5} parent=31 // pred_check_branch
        %2203 = sbr.rel (%p2201) target = $region36
      $region35: #{resblock_forward.5} parent=31 // pred_region
        %s2204 = smul.u32 8, %s21
      $region36: #{resblock_forward.5} parent=31 // pred_fallthru
        _
      // Predicated region
      $region37: #{resblock_forward.5} parent=31 // pred_check
        %p2205 = pneg %p144
      $region38: #{resblock_forward.5} parent=31 // pred_check_branch
        %2207 = sbr.rel (%p2205) target = $region40
      $region39: #{resblock_forward.5} parent=31 // pred_region
        _
      $region40: #{resblock_forward.5} parent=31 // pred_fallthru
        _
    $region32: #{resblock_forward.5} parent=5 // pred_fallthru
      _
    %p2208 = scmp.le.s32.totalorder 2, %s11
    // Predicated region
    $region41: #{resblock_forward.5} parent=5 // pred_check
      %p2209 = pneg %p2208
    $region42: #{resblock_forward.5} parent=5 // pred_check_branch
      %2211 = sbr.rel (%p2209) target = $region44
    $region43: #{resblock_forward.5} parent=5 // pred_region
      %s2212 = ssub.s32 %s11, 2
      // Predicated region
      $region45: #{resblock_forward.5} parent=43 // pred_check
        %p2213 = pneg %p122
      $region46: #{resblock_forward.5} parent=43 // pred_check_branch
        %2215 = sbr.rel (%p2213) target = $region48
      $region47: #{resblock_forward.5} parent=43 // pred_region
        %s2216 = smul.u32 8, %s23
        %p2217 = scmp.lt.s32.totalorder %s22, 1
        %s2218 = scalar_select %p2217, %s22, 1
        %p2219 = scmp.lt.s32.totalorder %s2216, 7
        %s2220 = scalar_select %p2219, %s2216, 7
        %s2221 = smul.addr %s2218, 8
        %s2222 = sadd.s32 %s2220, %s2221
        %s2223 = smul.addr %s2222, 4
        %s2224 = scalar_lea.vmem %s3, %s2223
      $region48: #{resblock_forward.5} parent=43 // pred_fallthru
        _
      // Predicated region
      $region49: #{resblock_forward.5} parent=43 // pred_check
        %p2225 = pneg %p150
      $region50: #{resblock_forward.5} parent=43 // pred_check_branch
        %2227 = sbr.rel (%p2225) target = $region52
      $region51: #{resblock_forward.5} parent=43 // pred_region
        %p2228 = scmp.lt.s32.totalorder %s22, 1
        %s2229 = scalar_select %p2228, %s22, 1
        %p2230 = scmp.lt.s32.totalorder %s23, 0
        %s2231 = scalar_select %p2230, %s23, 0
        %s2232 = sadd.s32 %s2231, %s2229
        %s2233 = smul.addr %s2232, 2
        %s2234 = scalar_lea.vmem %s4, %s2233
      $region52: #{resblock_forward.5} parent=43 // pred_fallthru
        _
    $region44: #{resblock_forward.5} parent=5 // pred_fallthru
      _
  $region6: #{resblock_forward.5} parent=0 // loop_footer
    %s15 = sadd.s32 1, %s11
  $region7: #{resblock_forward.5} parent=0 // loop_footer_branch
    %10 = sbr.rel target = $region3
  $region8: #{resblock_forward.5} parent=0 // loop_exit
    _

// kernel: resblock_forward.7
$region0: #{resblock_forward.7}
  #allocation0 [shape = 'u32[]', space=smem, size = 0x4, offset = 0x4, fixed_abs, tag = 'smem constant byte address 0x4 - core index']
  #allocation1 [shape = 'u32[144,128]{1,0:T(1,128)}', space=vmem, size = 0x12000, scoped, tag = 'internal scratch']
  %s0 = inlined_call_operand.vmem [shape: bf16[2,10,10,128], index: 0, kind: input, shape index: {}]
  %s1 = inlined_call_operand.vmem [shape: bf16[9,128,128], index: 1, kind: input, shape index: {}]
  %s2 = inlined_call_operand.vmem [shape: f32[1,128], index: 2, kind: input, shape index: {}]
  %s3 = inlined_call_operand.vmem [shape: bf16[2,8,8,128], index: 3, kind: output, shape index: {0}]
  %s4 = inlined_call_operand.vmem [shape: f32[2,1,2,128], index: 4, kind: output, shape index: {1}]
  %5 = xla_tuple %s3, %s4
  %s6 = sld [smem:[#allocation0]]
  $region53: #{resblock_forward.7} parent=0
    _
  %s8 = ssub.s32 1, %s6
  %s9 = scalar_select 0, %s8, %s6
  loop: start=0, step=1, limit=4
  $region2: #{resblock_forward.7} parent=0 // loop_pre_header
    _
  $region3: #{resblock_forward.7} parent=0 // loop_header
    %s11 = sphi 0, %s15
    %p12 = scmp.ge.s32.totalorder %s11, 4
    %s18 = sphi 0, %s30
    %s19 = sphi 0, %s26
    %s20 = sphi 0, %s18
    %s21 = sphi 0, %s19
    %s22 = sphi 0, %s20
    %s23 = sphi 0, %s21
    %s33 = sphi 0, %s35
    %s36 = sphi 0, %s33
    %s37 = sphi 0, %s36
    %s53 = sphi 0, %s37
    %s57 = sphi 0, %s57
    %s59 = sphi 0, %s57
    %s60 = sphi 0, %s59
    %s74 = sphi 0, %s60
    %s78 = sphi 0, %s78
    %s80 = sphi 0, %s78
    %s81 = sphi 0, %s80
    %s95 = sphi 0, %s81
    %s103 = sphi 0, %s105
    %s106 = sphi 0, %s103
    %s107 = sphi 0, %s106
    %s123 = sphi 0, %s107
    %s131 = sphi 0, %s133
    %s134 = sphi 0, %s131
    %s135 = sphi 0, %s134
    %s151 = sphi 0, %s135
  $region4: #{resblock_forward.7} parent=0 // loop_header_branch
    %14 = sbr.rel (%p12) target = $region8
  $region5: #{resblock_forward.7} parent=0 // loop_body
    %s16 = ssub.s32 %s11, 1
    %s17 = ssub.s32 %s11, 2
    %s24 = sadd.s32 1, %s19
    %p25 = scmp.ge.s32.totalorder %s24, 1
    %s26 = scalar_select %p25, 0, %s24
    %s27 = sadd.s32 1, %s18
    %s28 = scalar_select %p25, %s27, %s18
    %p29 = scmp.ge.s32.totalorder %s28, 2
    %s30 = scalar_select %p29, 0, %s28
    %s31 = ssub.s32 %s18, %s30
    %p32 = scmp.eq.s32.totalorder %s31, 0
    %s34 = sadd.s32 %s33, 1
    %s35 = scalar_select %p32, %s33, %s34
    %p38 = pneg %p32
    %p39 = scmp.eq.s32.totalorder %s11, 1
    %p40 = por %p38, %p39
    %p41 = scmp.ne.s32.totalorder %s33, %s36
    %p42 = scmp.eq.s32.totalorder %s11, 0
    %p43 = por %p41, %p42
    %p44 = scmp.ne.s32.totalorder %s33, %s36
    %p45 = scmp.eq.s32.totalorder %s16, 1
    %p46 = por %p44, %p45
    %p47 = scmp.ne.s32.totalorder %s36, %s37
    %p48 = scmp.eq.s32.totalorder %s16, 0
    %p49 = por %p47, %p48
    %p50 = scmp.ne.s32.totalorder %s36, %s37
    %p51 = scmp.eq.s32.totalorder %s17, 1
    %p52 = por %p50, %p51
    %p54 = scmp.ne.s32.totalorder %s37, %s53
    %p55 = scmp.eq.s32.totalorder %s17, 0
    %p56 = por %p54, %p55
    %s58 = sadd.s32 %s57, 1
    %p61 = scmp.eq.s32.totalorder %s11, 1
    %p62 = scmp.ne.s32.totalorder %s57, %s59
    %p63 = scmp.eq.s32.totalorder %s11, 0
    %p64 = por %p62, %p63
    %p65 = scmp.ne.s32.totalorder %s57, %s59
    %p66 = scmp.eq.s32.totalorder %s16, 1
    %p67 = por %p65, %p66
    %p68 = scmp.ne.s32.totalorder %s59, %s60
    %p69 = scmp.eq.s32.totalorder %s16, 0
    %p70 = por %p68, %p69
    %p71 = scmp.ne.s32.totalorder %s59, %s60
    %p72 = scmp.eq.s32.totalorder %s17, 1
    %p73 = por %p71, %p72
    %p75 = scmp.ne.s32.totalorder %s60, %s74
    %p76 = scmp.eq.s32.totalorder %s17, 0
    %p77 = por %p75, %p76
    %s79 = sadd.s32 %s78, 1
    %p82 = scmp.eq.s32.totalorder %s11, 1
    %p83 = scmp.ne.s32.totalorder %s78, %s80
    %p84 = scmp.eq.s32.totalorder %s11, 0
    %p85 = por %p83, %p84
    %p86 = scmp.ne.s32.totalorder %s78, %s80
    %p87 = scmp.eq.s32.totalorder %s16, 1
    %p88 = por %p86, %p87
    %p89 = scmp.ne.s32.totalorder %s80, %s81
    %p90 = scmp.eq.s32.totalorder %s16, 0
    %p91 = por %p89, %p90
    %p92 = scmp.ne.s32.totalorder %s80, %s81
    %p93 = scmp.eq.s32.totalorder %s17, 1
    %p94 = por %p92, %p93
    %p96 = scmp.ne.s32.totalorder %s81, %s95
    %p97 = scmp.eq.s32.totalorder %s17, 0
    %p98 = por %p96, %p97
    %s99 = ssub.s32 %s18, %s30
    %s100 = ssub.s32 %s19, %s26
    %s101 = sor.u32 %s99, %s100
    %p102 = scmp.eq.s32.totalorder %s101, 0
    %s104 = sadd.s32 %s103, 1
    %s105 = scalar_select %p102, %s103, %s104
    %p108 = pneg %p102
    %p109 = scmp.eq.s32.totalorder %s11, 1
    %p110 = por %p108, %p109
    %p111 = scmp.ne.s32.totalorder %s103, %s106
    %p112 = scmp.eq.s32.totalorder %s11, 0
    %p113 = por %p111, %p112
    %p114 = scmp.ne.s32.totalorder %s103, %s106
    %p115 = scmp.eq.s32.totalorder %s16, 1
    %p116 = por %p114, %p115
    %p117 = scmp.ne.s32.totalorder %s106, %s107
    %p118 = scmp.eq.s32.totalorder %s16, 0
    %p119 = por %p117, %p118
    %p120 = scmp.ne.s32.totalorder %s106, %s107
    %p121 = scmp.eq.s32.totalorder %s17, 1
    %p122 = por %p120, %p121
    %p124 = scmp.ne.s32.totalorder %s107, %s123
    %p125 = scmp.eq.s32.totalorder %s17, 0
    %p126 = por %p124, %p125
    %s127 = ssub.s32 %s18, %s30
    %s128 = ssub.s32 %s19, %s26
    %s129 = sor.u32 %s127, %s128
    %p130 = scmp.eq.s32.totalorder %s129, 0
    %s132 = sadd.s32 %s131, 1
    %s133 = scalar_select %p130, %s131, %s132
    %p136 = pneg %p130
    %p137 = scmp.eq.s32.totalorder %s11, 1
    %p138 = por %p136, %p137
    %p139 = scmp.ne.s32.totalorder %s131, %s134
    %p140 = scmp.eq.s32.totalorder %s11, 0
    %p141 = por %p139, %p140
    %p142 = scmp.ne.s32.totalorder %s131, %s134
    %p143 = scmp.eq.s32.totalorder %s16, 1
    %p144 = por %p142, %p143
    %p145 = scmp.ne.s32.totalorder %s134, %s135
    %p146 = scmp.eq.s32.totalorder %s16, 0
    %p147 = por %p145, %p146
    %p148 = scmp.ne.s32.totalorder %s134, %s135
    %p149 = scmp.eq.s32.totalorder %s17, 1
    %p150 = por %p148, %p149
    %p152 = scmp.ne.s32.totalorder %s135, %s151
    %p153 = scmp.eq.s32.totalorder %s17, 0
    %p154 = por %p152, %p153
    %p155 = scmp.le.s32.totalorder 1, %s11
    %p156 = scmp.lt.s32.totalorder %s11, 3
    %p157 = pnand %p155, %p156
    %p158 = pneg %p157
    // Predicated region
    $region9: #{resblock_forward.7} parent=5 // pred_check
      _
    $region10: #{resblock_forward.7} parent=5 // pred_check_branch
      %160 = sbr.rel (%p157) target = $region12
    $region11: #{resblock_forward.7} parent=5 // pred_region
      %s161 = ssub.s32 %s11, 1
      // Predicated region
      $region13: #{resblock_forward.7} parent=11 // pred_check
        %p162 = pneg %p70
      $region14: #{resblock_forward.7} parent=11 // pred_check_branch
        %164 = sbr.rel (%p162) target = $region16
      $region15: #{resblock_forward.7} parent=11 // pred_region
        _
      $region16: #{resblock_forward.7} parent=11 // pred_fallthru
        _
      // Predicated region
      $region17: #{resblock_forward.7} parent=11 // pred_check
        %p165 = pneg %p91
      $region18: #{resblock_forward.7} parent=11 // pred_check_branch
        %167 = sbr.rel (%p165) target = $region20
      $region19: #{resblock_forward.7} parent=11 // pred_region
        _
      $region20: #{resblock_forward.7} parent=11 // pred_fallthru
        _
    $region12: #{resblock_forward.7} parent=5 // pred_fallthru
      _
    %p168 = scmp.lt.s32.totalorder %s11, 2
    // Predicated region
    $region21: #{resblock_forward.7} parent=5 // pred_check
      %p169 = pneg %p168
    $region22: #{resblock_forward.7} parent=5 // pred_check_branch
      %171 = sbr.rel (%p169) target = $region24
    $region23: #{resblock_forward.7} parent=5 // pred_region
      // Predicated region
      $region25: #{resblock_forward.7} parent=23 // pred_check
        %p172 = pneg %p43
      $region26: #{resblock_forward.7} parent=23 // pred_check_branch
        %174 = sbr.rel (%p172) target = $region28
      $region27: #{resblock_forward.7} parent=23 // pred_region
        %p175 = scmp.lt.s32.totalorder %s18, 1
        %s176 = scalar_select %p175, %s18, 1
        %s177 = smul.addr %s176, 20
        %s178 = smul.addr %s177, 4
        %s179 = scalar_lea.vmem %s0, %s178
      $region28: #{resblock_forward.7} parent=23 // pred_fallthru
        _
    $region24: #{resblock_forward.7} parent=5 // pred_fallthru
      _
    %p180 = scmp.le.s32.totalorder 1, %s11
    %p181 = scmp.lt.s32.totalorder %s11, 3
    %p182 = pnand %p180, %p181
    %p183 = pneg %p182
    // Predicated region
    $region29: #{resblock_forward.7} parent=5 // pred_check
      _
    $region30: #{resblock_forward.7} parent=5 // pred_check_branch
      %185 = sbr.rel (%p182) target = $region32
    $region31: #{resblock_forward.7} parent=5 // pred_region
      %s186 = ssub.s32 %s11, 1
      %p187 = scmp.lt.s32.totalorder %s20, 1
      %s188 = scalar_select %p187, %s20, 1
      %s189 = smul.addr %s188, 20
      %s190 = smul.addr %s189, 4
      %s191 = scalar_lea.vmem %s0, %s190
      %p192 = pneg %p49
      %p193 = pneg %p46
      %p194 = pneg %p70
      %p195 = pneg %p67
      %p196 = pneg %p91
      %p197 = pneg %p88
      %p198 = pneg %p119
      %p199 = pneg %p116
      %s200 = smul.u32 8, %s21
      %p201 = scmp.lt.s32.totalorder %s20, 1
      %s202 = scalar_select %p201, %s20, 1
      %p203 = scmp.lt.s32.totalorder %s200, 7
      %s204 = scalar_select %p203, %s200, 7
      %s205 = smul.addr %s202, 8
      %s206 = sadd.s32 %s204, %s205
      %s207 = smul.addr %s206, 4
      %s208 = scalar_lea.vmem %s3, %s207
      %p209 = pneg %p147
      %p210 = pneg %p144
      %p211 = scmp.lt.s32.totalorder %s20, 1
      %s212 = scalar_select %p211, %s20, 1
      %p213 = scmp.lt.s32.totalorder %s21, 0
      %s214 = scalar_select %p213, %s21, 0
      %s215 = sadd.s32 %s214, %s212
      %s216 = smul.addr %s215, 2
      %s217 = scalar_lea.vmem %s4, %s216
      %p218 = scmp.lt.s32.totalorder %s20, 1
      %s219 = scalar_select %p218, %s20, 1
      %s220 = smul.addr %s219, 20
      %s221 = smul.addr %s220, 4
      %s222 = scalar_lea.vmem %s0, %s221
      %s223 = smul.u32 8, %s21
      %p224 = scmp.lt.s32.totalorder %s20, 1
      %s225 = scalar_select %p224, %s20, 1
      %p226 = scmp.lt.s32.totalorder %s223, 7
      %s227 = scalar_select %p226, %s223, 7
      %s228 = smul.addr %s225, 8
      %s229 = sadd.s32 %s227, %s228
      %s230 = smul.addr %s229, 4
      %s231 = scalar_lea.vmem %s3, %s230
      %s232 = smul.u32 8, %s21
      %p233 = scmp.lt.s32.totalorder %s20, 1
      %s234 = scalar_select %p233, %s20, 1
      %p235 = scmp.lt.s32.totalorder %s21, 0
      %s236 = scalar_select %p235, %s21, 0
      %s237 = sadd.s32 %s236, %s234
      %s238 = smul.addr %s237, 2
      %s239 = scalar_lea.vmem %s4, %s238
      %s241 = smul.u32 %s21, 8
      %s242 = smul.u32 %s241, 2
      %s243 = smul.addr %s242, 4
      %s244 = scalar_lea.vmem %s222, %s243
      %v245 = vld [vmem:[%s244] sm:$0xf]
      %v246 = vld [vmem:[%s244 + $0x8] sm:$0xf]
      %v247 = vld [vmem:[%s244 + $0x10] sm:$0xf]
      %v248 = vld [vmem:[%s244 + $0x18] sm:$0xf]
      %v249 = vld [vmem:[%s244 + $0x20] sm:$0xf]
      %v250 = vld [vmem:[%s244 + $0x28] sm:$0xf]
      %v251 = vld [vmem:[%s244 + $0x30] sm:$0xf]
      %v252 = vld [vmem:[%s244 + $0x38] sm:$0xf]
      %v253 = vld [vmem:[%s1] sm:$0xf]
      %v254 = vld [vmem:[%s1 + $0x4] sm:$0xf]
      %v255 = vld [vmem:[%s1 + $0x8] sm:$0xf]
      %v256 = vld [vmem:[%s1 + $0xc] sm:$0xf]
      %v257 = vld [vmem:[%s1 + $0x10] sm:$0xf]
      %v258 = vld [vmem:[%s1 + $0x14] sm:$0xf]
      %v259 = vld [vmem:[%s1 + $0x18] sm:$0xf]
      %v260 = vld [vmem:[%s1 + $0x1c] sm:$0xf]
      %v261 = vld [vmem:[%s1 + $0x20] sm:$0xf]
      %v262 = vld [vmem:[%s1 + $0x24] sm:$0xf]
      %v263 = vld [vmem:[%s1 + $0x28] sm:$0xf]
      %v264 = vld [vmem:[%s1 + $0x2c] sm:$0xf]
      %v265 = vld [vmem:[%s1 + $0x30] sm:$0xf]
      %v266 = vld [vmem:[%s1 + $0x34] sm:$0xf]
      %v267 = vld [vmem:[%s1 + $0x38] sm:$0xf]
      %v268 = vld [vmem:[%s1 + $0x3c] sm:$0xf]
      %v269 = vld [vmem:[%s244 + $0x4] sm:$0x1]
      %v270 = vld [vmem:[%s244 + $0xc] sm:$0x1]
      %v271 = vld [vmem:[%s244 + $0x14] sm:$0x1]
      %v272 = vld [vmem:[%s244 + $0x1c] sm:$0x1]
      %v273 = vld [vmem:[%s244 + $0x24] sm:$0x1]
      %v274 = vld [vmem:[%s244 + $0x2c] sm:$0x1]
      %v275 = vld [vmem:[%s244 + $0x34] sm:$0x1]
      %v276 = vld [vmem:[%s244 + $0x3c] sm:$0x1]
      %vm277 = vsmask.f32 3328
      %vm278 = vsmask.f32 7440
      %vm279 = vmor %vm277, %vm278
      %v281 = vshrl.u32 %v245, 16
      %v283 = vrot.slane %v281, 4
      %v284 = vshll.u32 %v245, 16
      %v286 = vrot.slane %v284, 5
      %v287 = vor.u32 %v283, %v286
      %v288 = vrot.slane %v287, 4
      %v290 = vshll.u32 %v269, 16
      %v292 = vrot.slane %v290, 5
      %v293 = vsel %vm279, %v288, %v292
      %v295 = vshrl.u32 %v246, 16
      %v297 = vrot.slane %v295, 4
      %v298 = vshll.u32 %v246, 16
      %v300 = vrot.slane %v298, 5
      %v301 = vor.u32 %v297, %v300
      %v302 = vrot.slane %v301, 4
      %v304 = vshll.u32 %v270, 16
      %v306 = vrot.slane %v304, 5
      %v307 = vsel %vm279, %v302, %v306
      %v309 = vshrl.u32 %v247, 16
      %v311 = vrot.slane %v309, 4
      %v312 = vshll.u32 %v247, 16
      %v314 = vrot.slane %v312, 5
      %v315 = vor.u32 %v311, %v314
      %v316 = vrot.slane %v315, 4
      %v318 = vshll.u32 %v271, 16
      %v320 = vrot.slane %v318, 5
      %v321 = vsel %vm279, %v316, %v320
      %v323 = vshrl.u32 %v248, 16
      %v325 = vrot.slane %v323, 4
      %v326 = vshll.u32 %v248, 16
      %v328 = vrot.slane %v326, 5
      %v329 = vor.u32 %v325, %v328
      %v330 = vrot.slane %v329, 4
      %v332 = vshll.u32 %v272, 16
      %v334 = vrot.slane %v332, 5
      %v335 = vsel %vm279, %v330, %v334
      %v337 = vshrl.u32 %v249, 16
      %v339 = vrot.slane %v337, 4
      %v340 = vshll.u32 %v249, 16
      %v342 = vrot.slane %v340, 5
      %v343 = vor.u32 %v339, %v342
      %v344 = vrot.slane %v343, 4
      %v346 = vshll.u32 %v273, 16
      %v348 = vrot.slane %v346, 5
      %v349 = vsel %vm279, %v344, %v348
      %v351 = vshrl.u32 %v250, 16
      %v353 = vrot.slane %v351, 4
      %v354 = vshll.u32 %v250, 16
      %v356 = vrot.slane %v354, 5
      %v357 = vor.u32 %v353, %v356
      %v358 = vrot.slane %v357, 4
      %v360 = vshll.u32 %v274, 16
      %v362 = vrot.slane %v360, 5
      %v363 = vsel %vm279, %v358, %v362
      %v365 = vshrl.u32 %v251, 16
      %v367 = vrot.slane %v365, 4
      %v368 = vshll.u32 %v251, 16
      %v370 = vrot.slane %v368, 5
      %v371 = vor.u32 %v367, %v370
      %v372 = vrot.slane %v371, 4
      %v374 = vshll.u32 %v275, 16
      %v376 = vrot.slane %v374, 5
      %v377 = vsel %vm279, %v372, %v376
      %v379 = vshrl.u32 %v252, 16
      %v381 = vrot.slane %v379, 4
      %v382 = vshll.u32 %v252, 16
      %v384 = vrot.slane %v382, 5
      %v385 = vor.u32 %v381, %v384
      %v386 = vrot.slane %v385, 4
      %v388 = vshll.u32 %v276, 16
      %v390 = vrot.slane %v388, 5
      %v391 = vsel %vm279, %v386, %v390
      %s392 = scalar_lea.vmem %s1, 64
      %v393 = vld [vmem:[%s392] sm:$0xf]
      %v394 = vld [vmem:[%s392 + $0x4] sm:$0xf]
      %v395 = vld [vmem:[%s392 + $0x8] sm:$0xf]
      %v396 = vld [vmem:[%s392 + $0xc] sm:$0xf]
      %v397 = vld [vmem:[%s392 + $0x10] sm:$0xf]
      %v398 = vld [vmem:[%s392 + $0x14] sm:$0xf]
      %v399 = vld [vmem:[%s392 + $0x18] sm:$0xf]
      %v400 = vld [vmem:[%s392 + $0x1c] sm:$0xf]
      %v401 = vld [vmem:[%s392 + $0x20] sm:$0xf]
      %v402 = vld [vmem:[%s392 + $0x24] sm:$0xf]
      %v403 = vld [vmem:[%s392 + $0x28] sm:$0xf]
      %v404 = vld [vmem:[%s392 + $0x2c] sm:$0xf]
      %v405 = vld [vmem:[%s392 + $0x30] sm:$0xf]
      %v406 = vld [vmem:[%s392 + $0x34] sm:$0xf]
      %v407 = vld [vmem:[%s392 + $0x38] sm:$0xf]
      %v408 = vld [vmem:[%s392 + $0x3c] sm:$0xf]
      %v409 = vunpack.c.l.b16 %v293
      %v410 = vunpack.c.l.b16 %v307
      %v411 = vunpack.c.l.b16 %v321
      %v412 = vunpack.c.l.b16 %v335
      %v413 = vunpack.c.l.b16 %v349
      %v414 = vunpack.c.l.b16 %v363
      %v415 = vunpack.c.l.b16 %v377
      %v416 = vunpack.c.l.b16 %v391
      %v417 = vpack.c.b16 %v410, %v409
      %v418 = vpack.c.b16 %v412, %v411
      %v419 = vpack.c.b16 %v414, %v413
      %v420 = vpack.c.b16 %v416, %v415
      %v441 = vunpack.c.l.b16 %v393
      %v442 = vunpack.c.l.b16 %v394
      %v443 = vunpack.c.l.b16 %v395
      %v444 = vunpack.c.l.b16 %v396
      %v445 = vunpack.c.l.b16 %v397
      %v446 = vunpack.c.l.b16 %v398
      %v447 = vunpack.c.l.b16 %v399
      %v448 = vunpack.c.l.b16 %v400
      %v449 = vunpack.c.l.b16 %v401
      %v450 = vunpack.c.l.b16 %v402
      %v451 = vunpack.c.l.b16 %v403
      %v452 = vunpack.c.l.b16 %v404
      %v453 = vunpack.c.l.b16 %v405
      %v454 = vunpack.c.l.b16 %v406
      %v455 = vunpack.c.l.b16 %v407
      %v456 = vunpack.c.l.b16 %v408
      %v457 = vpack.c.b16 %v442, %v441
      %v458 = vpack.c.b16 %v444, %v443
      %v459 = vpack.c.b16 %v446, %v445
      %v460 = vpack.c.b16 %v448, %v447
      %v461 = vpack.c.b16 %v450, %v449
      %v462 = vpack.c.b16 %v452, %v451
      %v463 = vpack.c.b16 %v454, %v453
      %v464 = vpack.c.b16 %v456, %v455
      %473 = vmatprep.subr.bf16.mxu0 0
      %474 = vmatpush1.bf16.msra.mxu0 %v457
      %475 = vmatprep.subr.bf16.mxu0 0
      %476 = vmatpush1.bf16.msra.mxu0 %v458
      %477 = vmatprep.subr.bf16.mxu0 0
      %478 = vmatpush1.bf16.msra.mxu0 %v459
      %479 = vmatprep.subr.bf16.mxu0 0
      %480 = vmatpush1.bf16.msra.mxu0 %v460
      %481 = vmatprep.subr.bf16.mxu0 0
      %482 = vmatpush1.bf16.msra.mxu0 %v461
      %483 = vmatprep.subr.bf16.mxu0 0
      %484 = vmatpush1.bf16.msra.mxu0 %v462
      %485 = vmatprep.subr.bf16.mxu0 0
      %486 = vmatpush1.bf16.msra.mxu0 %v463
      %487 = vmatprep.subr.bf16.mxu0 0
      %488 = vmatpush1.bf16.msra.mxu0 %v464
      %489 = vmatprep.subr.bf16.mxu0 0
      %490 = vmatpush1.bf16.msra.mxu0 0
      %491 = vmatprep.subr.bf16.mxu0 0
      %492 = vmatpush1.bf16.msra.mxu0 0
      %493 = vmatprep.subr.bf16.mxu0 0
      %494 = vmatpush1.bf16.msra.mxu0 0
      %495 = vmatprep.subr.bf16.mxu0 0
      %496 = vmatpush1.bf16.msra.mxu0 0
      %497 = vmatprep.subr.bf16.mxu0 0
      %498 = vmatpush1.bf16.msra.mxu0 0
      %499 = vmatprep.subr.bf16.mxu0 0
      %500 = vmatpush1.bf16.msra.mxu0 0
      %501 = vmatprep.subr.bf16.mxu0 0
      %502 = vmatpush1.bf16.msra.mxu0 0
      %503 = vmatprep.subr.bf16.mxu0 0
      %504 = vmatpush1.bf16.msra.mxu0 0
      %505 = vmatprep.mubr.bf16.mxu0 0
      %506 = vmatmul.mubr.bf16.gmra.mrb[0].mxu0 %v417
      %v507 = vpop.f32.mrb[0].mxu0
      %v508 = vadd.f32 0.0, %v507
      %v509 = vpop.f32.mrb[0].mxu0
      %v510 = vpop.f32.mrb[0].mxu0
      %v511 = vadd.f32 0.0, %v510
      %v512 = vpop.f32.mrb[0].mxu0
      %513 = vmatprep.mubr.bf16.mxu0 0
      %514 = vmatmul.mubr.bf16.gmra.mrb[0].mxu0 %v418
      %v515 = vpop.f32.mrb[0].mxu0
      %v516 = vadd.f32 0.0, %v515
      %v517 = vpop.f32.mrb[0].mxu0
      %v518 = vpop.f32.mrb[0].mxu0
      %v519 = vadd.f32 0.0, %v518
      %v520 = vpop.f32.mrb[0].mxu0
      %521 = vmatprep.mubr.bf16.mxu0 0
      %522 = vmatmul.mubr.bf16.gmra.mrb[0].mxu0 %v419
      %v523 = vpop.f32.mrb[0].mxu0
      %v524 = vadd.f32 0.0, %v523
      %v525 = vpop.f32.mrb[0].mxu0
      %v526 = vpop.f32.mrb[0].mxu0
      %v527 = vadd.f32 0.0, %v526
      %v528 = vpop.f32.mrb[0].mxu0
      %529 = vmatprep.mubr.bf16.mxu0 0
      %530 = vmatmul.mubr.bf16.gmra.mrb[0].mxu0 %v420
      %v531 = vpop.f32.mrb[0].mxu0
      %v532 = vadd.f32 0.0, %v531
      %v533 = vpop.f32.mrb[0].mxu0
      %v534 = vpop.f32.mrb[0].mxu0
      %v535 = vadd.f32 0.0, %v534
      %v536 = vpop.f32.mrb[0].mxu0
      %537 = vdwg.mxu0
      %v546 = vunpack.c.l.b16 %v245
      %v547 = vunpack.c.l.b16 %v246
      %v548 = vunpack.c.l.b16 %v247
      %v549 = vunpack.c.l.b16 %v248
      %v550 = vunpack.c.l.b16 %v249
      %v551 = vunpack.c.l.b16 %v250
      %v552 = vunpack.c.l.b16 %v251
      %v553 = vunpack.c.l.b16 %v252
      %v554 = vpack.c.b16 %v547, %v546
      %v555 = vpack.c.b16 %v549, %v548
      %v556 = vpack.c.b16 %v551, %v550
      %v557 = vpack.c.b16 %v553, %v552
      %v578 = vunpack.c.l.b16 %v253
      %v579 = vunpack.c.l.b16 %v254
      %v580 = vunpack.c.l.b16 %v255
      %v581 = vunpack.c.l.b16 %v256
      %v582 = vunpack.c.l.b16 %v257
      %v583 = vunpack.c.l.b16 %v258
      %v584 = vunpack.c.l.b16 %v259
      %v585 = vunpack.c.l.b16 %v260
      %v586 = vunpack.c.l.b16 %v261
      %v587 = vunpack.c.l.b16 %v262
      %v588 = vunpack.c.l.b16 %v263
      %v589 = vunpack.c.l.b16 %v264
      %v590 = vunpack.c.l.b16 %v265
      %v591 = vunpack.c.l.b16 %v266
      %v592 = vunpack.c.l.b16 %v267
      %v593 = vunpack.c.l.b16 %v268
      %v594 = vpack.c.b16 %v579, %v578
      %v595 = vpack.c.b16 %v581, %v580
      %v596 = vpack.c.b16 %v583, %v582
      %v597 = vpack.c.b16 %v585, %v584
      %v598 = vpack.c.b16 %v587, %v586
      %v599 = vpack.c.b16 %v589, %v588
      %v600 = vpack.c.b16 %v591, %v590
      %v601 = vpack.c.b16 %v593, %v592
      %610 = vmatprep.subr.bf16.mxu0 0
      %611 = vmatpush1.bf16.msra.mxu0 %v594
      %612 = vmatprep.subr.bf16.mxu0 0
      %613 = vmatpush1.bf16.msra.mxu0 %v595
      %614 = vmatprep.subr.bf16.mxu0 0
      %615 = vmatpush1.bf16.msra.mxu0 %v596
      %616 = vmatprep.subr.bf16.mxu0 0
      %617 = vmatpush1.bf16.msra.mxu0 %v597
      %618 = vmatprep.subr.bf16.mxu0 0
      %619 = vmatpush1.bf16.msra.mxu0 %v598
      %620 = vmatprep.subr.bf16.mxu0 0
      %621 = vmatpush1.bf16.msra.mxu0 %v599
      %622 = vmatprep.subr.bf16.mxu0 0
      %623 = vmatpush1.bf16.msra.mxu0 %v600
      %624 = vmatprep.subr.bf16.mxu0 0
      %625 = vmatpush1.bf16.msra.mxu0 %v601
      %626 = vmatprep.subr.bf16.mxu0 0
      %627 = vmatpush1.bf16.msra.mxu0 0
      %628 = vmatprep.subr.bf16.mxu0 0
      %629 = vmatpush1.bf16.msra.mxu0 0
      %630 = vmatprep.subr.bf16.mxu0 0
      %631 = vmatpush1.bf16.msra.mxu0 0
      %632 = vmatprep.subr.bf16.mxu0 0
      %633 = vmatpush1.bf16.msra.mxu0 0
      %634 = vmatprep.subr.bf16.mxu0 0
      %635 = vmatpush1.bf16.msra.mxu0 0
      %636 = vmatprep.subr.bf16.mxu0 0
      %637 = vmatpush1.bf16.msra.mxu0 0
      %638 = vmatprep.subr.bf16.mxu0 0
      %639 = vmatpush1.bf16.msra.mxu0 0
      %640 = vmatprep.subr.bf16.mxu0 0
      %641 = vmatpush1.bf16.msra.mxu0 0
      %642 = vmatprep.mubr.bf16.mxu0 0
      %643 = vmatmul.mubr.bf16.gmra.mrb[0].mxu0 %v554
      %v644 = vpop.f32.mrb[0].mxu0
      %v645 = vadd.f32 %v508, %v644
      %v646 = vpop.f32.mrb[0].mxu0
      %v647 = vpop.f32.mrb[0].mxu0
      %v648 = vadd.f32 %v511, %v647
      %v649 = vpop.f32.mrb[0].mxu0
      %650 = vmatprep.mubr.bf16.mxu0 0
      %651 = vmatmul.mubr.bf16.gmra.mrb[0].mxu0 %v555
      %v652 = vpop.f32.mrb[0].mxu0
      %v653 = vadd.f32 %v516, %v652
      %v654 = vpop.f32.mrb[0].mxu0
      %v655 = vpop.f32.mrb[0].mxu0
      %v656 = vadd.f32 %v519, %v655
      %v657 = vpop.f32.mrb[0].mxu0
      %658 = vmatprep.mubr.bf16.mxu0 0
      %659 = vmatmul.mubr.bf16.gmra.mrb[0].mxu0 %v556
      %v660 = vpop.f32.mrb[0].mxu0
      %v661 = vadd.f32 %v524, %v660
      %v662 = vpop.f32.mrb[0].mxu0
      %v663 = vpop.f32.mrb[0].mxu0
      %v664 = vadd.f32 %v527, %v663
      %v665 = vpop.f32.mrb[0].mxu0
      %666 = vmatprep.mubr.bf16.mxu0 0
      %667 = vmatmul.mubr.bf16.gmra.mrb[0].mxu0 %v557
      %v668 = vpop.f32.mrb[0].mxu0
      %v669 = vadd.f32 %v532, %v668
      %v670 = vpop.f32.mrb[0].mxu0
      %v671 = vpop.f32.mrb[0].mxu0
      %v672 = vadd.f32 %v535, %v671
      %v673 = vpop.f32.mrb[0].mxu0
      %674 = vdwg.mxu0
      %v675 = vld [vmem:[%s244] sm:$0xe]
      %v676 = vld [vmem:[%s244 + $0x8] sm:$0xe]
      %v677 = vld [vmem:[%s244 + $0x10] sm:$0xe]
      %v678 = vld [vmem:[%s244 + $0x18] sm:$0xe]
      %v679 = vld [vmem:[%s244 + $0x20] sm:$0xe]
      %v680 = vld [vmem:[%s244 + $0x28] sm:$0xe]
      %v681 = vld [vmem:[%s244 + $0x30] sm:$0xe]
      %v682 = vld [vmem:[%s244 + $0x38] sm:$0xe]
      %vm699 = vcmask 1042432
      %vm700 = vcmask 1046532
      %vm701 = vmor %vm699, %vm700
      %v702 = vrot.slane %v675, 5
      %v703 = vrot.slane %v702, 4
      %v704 = vrot.slane %v269, 5
      %v705 = vsel %vm701, %v703, %v704
      %v706 = vrot.slane %v676, 5
      %v707 = vrot.slane %v706, 4
      %v708 = vrot.slane %v270, 5
      %v709 = vsel %vm701, %v707, %v708
      %v710 = vrot.slane %v677, 5
      %v711 = vrot.slane %v710, 4
      %v712 = vrot.slane %v271, 5
      %v713 = vsel %vm701, %v711, %v712
      %v714 = vrot.slane %v678, 5
      %v715 = vrot.slane %v714, 4
      %v716 = vrot.slane %v272, 5
      %v717 = vsel %vm701, %v715, %v716
      %v718 = vrot.slane %v679, 5
      %v719 = vrot.slane %v718, 4
      %v720 = vrot.slane %v273, 5
      %v721 = vsel %vm701, %v719, %v720
      %v722 = vrot.slane %v680, 5
      %v723 = vrot.slane %v722, 4
      %v724 = vrot.slane %v274, 5
      %v725 = vsel %vm701, %v723, %v724
      %v726 = vrot.slane %v681, 5
      %v727 = vrot.slane %v726, 4
      %v728 = vrot.slane %v275, 5
      %v729 = vsel %vm701, %v727, %v728
      %v730 = vrot.slane %v682, 5
      %v731 = vrot.slane %v730, 4
      %v732 = vrot.slane %v276, 5
      %v733 = vsel %vm701, %v731, %v732
      %s734 = scalar_lea.vmem %s1, 128
      %v735 = vld [vmem:[%s734] sm:$0xf]
      %v736 = vld [vmem:[%s734 + $0x4] sm:$0xf]
      %v737 = vld [vmem:[%s734 + $0x8] sm:$0xf]
      %v738 = vld [vmem:[%s734 + $0xc] sm:$0xf]
      %v739 = vld [vmem:[%s734 + $0x10] sm:$0xf]
      %v740 = vld [vmem:[%s734 + $0x14] sm:$0xf]
      %v741 = vld [vmem:[%s734 + $0x18] sm:$0xf]
      %v742 = vld [vmem:[%s734 + $0x1c] sm:$0xf]
      %v743 = vld [vmem:[%s734 + $0x20] sm:$0xf]
      %v744 = vld [vmem:[%s734 + $0x24] sm:$0xf]
      %v745 = vld [vmem:[%s734 + $0x28] sm:$0xf]
      %v746 = vld [vmem:[%s734 + $0x2c] sm:$0xf]
      %v747 = vld [vmem:[%s734 + $0x30] sm:$0xf]
      %v748 = vld [vmem:[%s734 + $0x34] sm:$0xf]
      %v749 = vld [vmem:[%s734 + $0x38] sm:$0xf]
      %v750 = vld [vmem:[%s734 + $0x3c] sm:$0xf]
      %v751 = vunpack.c.l.b16 %v705
      %v752 = vunpack.c.l.b16 %v709
      %v753 = vunpack.c.l.b16 %v713
      %v754 = vunpack.c.l.b16 %v717
      %v755 = vunpack.c.l.b16 %v721
      %v756 = vunpack.c.l.b16 %v725
      %v757 = vunpack.c.l.b16 %v729
      %v758 = vunpack.c.l.b16 %v733
      %v759 = vpack.c.b16 %v752, %v751
      %v760 = vpack.c.b16 %v754, %v753
      %v761 = vpack.c.b16 %v756, %v755
      %v762 = vpack.c.b16 %v758, %v757
      %v783 = vunpack.c.l.b16 %v735
      %v784 = vunpack.c.l.b16 %v736
      %v785 = vunpack.c.l.b16 %v737
      %v786 = vunpack.c.l.b16 %v738
      %v787 = vunpack.c.l.b16 %v739
      %v788 = vunpack.c.l.b16 %v740
      %v789 = vunpack.c.l.b16 %v741
      %v790 = vunpack.c.l.b16 %v742
      %v791 = vunpack.c.l.b16 %v743
      %v792 = vunpack.c.l.b16 %v744
      %v793 = vunpack.c.l.b16 %v745
      %v794 = vunpack.c.l.b16 %v746
      %v795 = vunpack.c.l.b16 %v747
      %v796 = vunpack.c.l.b16 %v748
      %v797 = vunpack.c.l.b16 %v749
      %v798 = vunpack.c.l.b16 %v750
      %v799 = vpack.c.b16 %v784, %v783
      %v800 = vpack.c.b16 %v786, %v785
      %v801 = vpack.c.b16 %v788, %v787
      %v802 = vpack.c.b16 %v790, %v789
      %v803 = vpack.c.b16 %v792, %v791
      %v804 = vpack.c.b16 %v794, %v793
      %v805 = vpack.c.b16 %v796, %v795
      %v806 = vpack.c.b16 %v798, %v797
      %815 = vmatprep.subr.bf16.mxu0 0
      %816 = vmatpush1.bf16.msra.mxu0 %v799
      %817 = vmatprep.subr.bf16.mxu0 0
      %818 = vmatpush1.bf16.msra.mxu0 %v800
      %819 = vmatprep.subr.bf16.mxu0 0
      %820 = vmatpush1.bf16.msra.mxu0 %v801
      %821 = vmatprep.subr.bf16.mxu0 0
      %822 = vmatpush1.bf16.msra.mxu0 %v802
      %823 = vmatprep.subr.bf16.mxu0 0
      %824 = vmatpush1.bf16.msra.mxu0 %v803
      %825 = vmatprep.subr.bf16.mxu0 0
      %826 = vmatpush1.bf16.msra.mxu0 %v804
      %827 = vmatprep.subr.bf16.mxu0 0
      %828 = vmatpush1.bf16.msra.mxu0 %v805
      %829 = vmatprep.subr.bf16.mxu0 0
      %830 = vmatpush1.bf16.msra.mxu0 %v806
      %831 = vmatprep.subr.bf16.mxu0 0
      %832 = vmatpush1.bf16.msra.mxu0 0
      %833 = vmatprep.subr.bf16.mxu0 0
      %834 = vmatpush1.bf16.msra.mxu0 0
      %835 = vmatprep.subr.bf16.mxu0 0
      %836 = vmatpush1.bf16.msra.mxu0 0
      %837 = vmatprep.subr.bf16.mxu0 0
      %838 = vmatpush1.bf16.msra.mxu0 0
      %839 = vmatprep.subr.bf16.mxu0 0
      %840 = vmatpush1.bf16.msra.mxu0 0
      %841 = vmatprep.subr.bf16.mxu0 0
      %842 = vmatpush1.bf16.msra.mxu0 0
      %843 = vmatprep.subr.bf16.mxu0 0
      %844 = vmatpush1.bf16.msra.mxu0 0
      %845 = vmatprep.subr.bf16.mxu0 0
      %846 = vmatpush1.bf16.msra.mxu0 0
      %847 = vmatprep.mubr.bf16.mxu0 0
      %848 = vmatmul.mubr.bf16.gmra.mrb[0].mxu0 %v759
      %v849 = vpop.f32.mrb[0].mxu0
      %v850 = vadd.f32 0.0, %v849
      %v851 = vpop.f32.mrb[0].mxu0
      %v852 = vpop.f32.mrb[0].mxu0
      %v853 = vadd.f32 0.0, %v852
      %v854 = vpop.f32.mrb[0].mxu0
      %855 = vmatprep.mubr.bf16.mxu0 0
      %856 = vmatmul.mubr.bf16.gmra.mrb[0].mxu0 %v760
      %v857 = vpop.f32.mrb[0].mxu0
      %v858 = vadd.f32 0.0, %v857
      %v859 = vpop.f32.mrb[0].mxu0
      %v860 = vpop.f32.mrb[0].mxu0
      %v861 = vadd.f32 0.0, %v860
      %v862 = vpop.f32.mrb[0].mxu0
      %863 = vmatprep.mubr.bf16.mxu0 0
      %864 = vmatmul.mubr.bf16.gmra.mrb[0].mxu0 %v761
      %v865 = vpop.f32.mrb[0].mxu0
      %v866 = vadd.f32 0.0, %v865
      %v867 = vpop.f32.mrb[0].mxu0
      %v868 = vpop.f32.mrb[0].mxu0
      %v869 = vadd.f32 0.0, %v868
      %v870 = vpop.f32.mrb[0].mxu0
      %871 = vmatprep.mubr.bf16.mxu0 0
      %872 = vmatmul.mubr.bf16.gmra.mrb[0].mxu0 %v762
      %v873 = vpop.f32.mrb[0].mxu0
      %v874 = vadd.f32 0.0, %v873
      %v875 = vpop.f32.mrb[0].mxu0
      %v876 = vpop.f32.mrb[0].mxu0
      %v877 = vadd.f32 0.0, %v876
      %v878 = vpop.f32.mrb[0].mxu0
      %879 = vdwg.mxu0
      %v880 = vadd.f32 %v645, %v850
      %v881 = vadd.f32 %v648, %v853
      %v882 = vadd.f32 %v653, %v858
      %v883 = vadd.f32 %v656, %v861
      %v884 = vadd.f32 %v661, %v866
      %v885 = vadd.f32 %v664, %v869
      %v886 = vadd.f32 %v669, %v874
      %v887 = vadd.f32 %v672, %v877
      %s888 = sadd.s32 %s241, 1
      %s889 = smul.u32 %s888, 2
      %s890 = smul.addr %s889, 4
      %s891 = scalar_lea.vmem %s222, %s890
      %v892 = vld [vmem:[%s891] sm:$0xf]
      %v893 = vld [vmem:[%s891 + $0x8] sm:$0xf]
      %v894 = vld [vmem:[%s891 + $0x10] sm:$0xf]
      %v895 = vld [vmem:[%s891 + $0x18] sm:$0xf]
      %v896 = vld [vmem:[%s891 + $0x20] sm:$0xf]
      %v897 = vld [vmem:[%s891 + $0x28] sm:$0xf]
      %v898 = vld [vmem:[%s891 + $0x30] sm:$0xf]
      %v899 = vld [vmem:[%s891 + $0x38] sm:$0xf]
      %s900 = scalar_lea.vmem %s1, 192
      %v901 = vld [vmem:[%s900] sm:$0xf]
      %v902 = vld [vmem:[%s900 + $0x4] sm:$0xf]
      %v903 = vld [vmem:[%s900 + $0x8] sm:$0xf]
      %v904 = vld [vmem:[%s900 + $0xc] sm:$0xf]
      %v905 = vld [vmem:[%s900 + $0x10] sm:$0xf]
      %v906 = vld [vmem:[%s900 + $0x14] sm:$0xf]
      %v907 = vld [vmem:[%s900 + $0x18] sm:$0xf]
      %v908 = vld [vmem:[%s900 + $0x1c] sm:$0xf]
      %v909 = vld [vmem:[%s900 + $0x20] sm:$0xf]
      %v910 = vld [vmem:[%s900 + $0x24] sm:$0xf]
      %v911 = vld [vmem:[%s900 + $0x28] sm:$0xf]
      %v912 = vld [vmem:[%s900 + $0x2c] sm:$0xf]
      %v913 = vld [vmem:[%s900 + $0x30] sm:$0xf]
      %v914 = vld [vmem:[%s900 + $0x34] sm:$0xf]
      %v915 = vld [vmem:[%s900 + $0x38] sm:$0xf]
      %v916 = vld [vmem:[%s900 + $0x3c] sm:$0xf]
      %v925 = vunpack.c.l.b16 %v892
      %v926 = vunpack.c.l.b16 %v893
      %v927 = vunpack.c.l.b16 %v894
      %v928 = vunpack.c.l.b16 %v895
      %v929 = vunpack.c.l.b16 %v896
      %v930 = vunpack.c.l.b16 %v897
      %v931 = vunpack.c.l.b16 %v898
      %v932 = vunpack.c.l.b16 %v899
      %v933 = vpack.c.b16 %v926, %v925
      %v934 = vpack.c.b16 %v928, %v927
      %v935 = vpack.c.b16 %v930, %v929
      %v936 = vpack.c.b16 %v932, %v931
      %v957 = vunpack.c.l.b16 %v901
      %v958 = vunpack.c.l.b16 %v902
      %v959 = vunpack.c.l.b16 %v903
      %v960 = vunpack.c.l.b16 %v904
      %v961 = vunpack.c.l.b16 %v905
      %v962 = vunpack.c.l.b16 %v906
      %v963 = vunpack.c.l.b16 %v907
      %v964 = vunpack.c.l.b16 %v908
      %v965 = vunpack.c.l.b16 %v909
      %v966 = vunpack.c.l.b16 %v910
      %v967 = vunpack.c.l.b16 %v911
      %v968 = vunpack.c.l.b16 %v912
      %v969 = vunpack.c.l.b16 %v913
      %v970 = vunpack.c.l.b16 %v914
      %v971 = vunpack.c.l.b16 %v915
      %v972 = vunpack.c.l.b16 %v916
      %v973 = vpack.c.b16 %v958, %v957
      %v974 = vpack.c.b16 %v960, %v959
      %v975 = vpack.c.b16 %v962, %v961
      %v976 = vpack.c.b16 %v964, %v963
      %v977 = vpack.c.b16 %v966, %v965
      %v978 = vpack.c.b16 %v968, %v967
      %v979 = vpack.c.b16 %v970, %v969
      %v980 = vpack.c.b16 %v972, %v971
      %989 = vmatprep.subr.bf16.mxu0 0
      %990 = vmatpush1.bf16.msra.mxu0 %v973
      %991 = vmatprep.subr.bf16.mxu0 0
      %992 = vmatpush1.bf16.msra.mxu0 %v974
      %993 = vmatprep.subr.bf16.mxu0 0
      %994 = vmatpush1.bf16.msra.mxu0 %v975
      %995 = vmatprep.subr.bf16.mxu0 0
      %996 = vmatpush1.bf16.msra.mxu0 %v976
      %997 = vmatprep.subr.bf16.mxu0 0
      %998 = vmatpush1.bf16.msra.mxu0 %v977
      %999 = vmatprep.subr.bf16.mxu0 0
      %1000 = vmatpush1.bf16.msra.mxu0 %v978
      %1001 = vmatprep.subr.bf16.mxu0 0
      %1002 = vmatpush1.bf16.msra.mxu0 %v979
      %1003 = vmatprep.subr.bf16.mxu0 0
      %1004 = vmatpush1.bf16.msra.mxu0 %v980
      %1005 = vmatprep.subr.bf16.mxu0 0
      %1006 = vmatpush1.bf16.msra.mxu0 0
      %1007 = vmatprep.subr.bf16.mxu0 0
      %1008 = vmatpush1.bf16.msra.mxu0 0
      %1009 = vmatprep.subr.bf16.mxu0 0
      %1010 = vmatpush1.bf16.msra.mxu0 0
      %1011 = vmatprep.subr.bf16.mxu0 0
      %1012 = vmatpush1.bf16.msra.mxu0 0
      %1013 = vmatprep.subr.bf16.mxu0 0
      %1014 = vmatpush1.bf16.msra.mxu0 0
      %1015 = vmatprep.subr.bf16.mxu0 0
      %1016 = vmatpush1.bf16.msra.mxu0 0
      %1017 = vmatprep.subr.bf16.mxu0 0
      %1018 = vmatpush1.bf16.msra.mxu0 0
      %1019 = vmatprep.subr.bf16.mxu0 0
      %1020 = vmatpush1.bf16.msra.mxu0 0
      %1021 = vmatprep.mubr.bf16.mxu0 0
      %1022 = vmatmul.mubr.bf16.gmra.mrb[0].mxu0 %v933
      %v1023 = vpop.f32.mrb[0].mxu0
      %v1024 = vadd.f32 0.0, %v1023
      %v1025 = vpop.f32.mrb[0].mxu0
      %v1026 = vpop.f32.mrb[0].mxu0
      %v1027 = vadd.f32 0.0, %v1026
      %v1028 = vpop.f32.mrb[0].mxu0
      %1029 = vmatprep.mubr.bf16.mxu0 0
      %1030 = vmatmul.mubr.bf16.gmra.mrb[0].mxu0 %v934
      %v1031 = vpop.f32.mrb[0].mxu0
      %v1032 = vadd.f32 0.0, %v1031
      %v1033 = vpop.f32.mrb[0].mxu0
      %v1034 = vpop.f32.mrb[0].mxu0
      %v1035 = vadd.f32 0.0, %v1034
      %v1036 = vpop.f32.mrb[0].mxu0
      %1037 = vmatprep.mubr.bf16.mxu0 0
      %1038 = vmatmul.mubr.bf16.gmra.mrb[0].mxu0 %v935
      %v1039 = vpop.f32.mrb[0].mxu0
      %v1040 = vadd.f32 0.0, %v1039
      %v1041 = vpop.f32.mrb[0].mxu0
      %v1042 = vpop.f32.mrb[0].mxu0
      %v1043 = vadd.f32 0.0, %v1042
      %v1044 = vpop.f32.mrb[0].mxu0
      %1045 = vmatprep.mubr.bf16.mxu0 0
      %1046 = vmatmul.mubr.bf16.gmra.mrb[0].mxu0 %v936
      %v1047 = vpop.f32.mrb[0].mxu0
      %v1048 = vadd.f32 0.0, %v1047
      %v1049 = vpop.f32.mrb[0].mxu0
      %v1050 = vpop.f32.mrb[0].mxu0
      %v1051 = vadd.f32 0.0, %v1050
      %v1052 = vpop.f32.mrb[0].mxu0
      %1053 = vdwg.mxu0
      %v1054 = vadd.f32 %v880, %v1024
      %v1055 = vadd.f32 %v881, %v1027
      %v1056 = vadd.f32 %v882, %v1032
      %v1057 = vadd.f32 %v883, %v1035
      %v1058 = vadd.f32 %v884, %v1040
      %v1059 = vadd.f32 %v885, %v1043
      %v1060 = vadd.f32 %v886, %v1048
      %v1061 = vadd.f32 %v887, %v1051
      %v1062 = vld [vmem:[%s891] sm:$0xf]
      %v1063 = vld [vmem:[%s891 + $0x4] sm:$0x1]
      %v1064 = vld [vmem:[%s891 + $0x8] sm:$0xf]
      %v1065 = vld [vmem:[%s891 + $0xc] sm:$0x1]
      %v1066 = vld [vmem:[%s891 + $0x10] sm:$0xf]
      %v1067 = vld [vmem:[%s891 + $0x14] sm:$0x1]
      %v1068 = vld [vmem:[%s891 + $0x18] sm:$0xf]
      %v1069 = vld [vmem:[%s891 + $0x1c] sm:$0x1]
      %v1070 = vld [vmem:[%s891 + $0x20] sm:$0xf]
      %v1071 = vld [vmem:[%s891 + $0x24] sm:$0x1]
      %v1072 = vld [vmem:[%s891 + $0x28] sm:$0xf]
      %v1073 = vld [vmem:[%s891 + $0x2c] sm:$0x1]
      %v1074 = vld [vmem:[%s891 + $0x30] sm:$0xf]
      %v1075 = vld [vmem:[%s891 + $0x34] sm:$0x1]
      %v1076 = vld [vmem:[%s891 + $0x38] sm:$0xf]
      %v1077 = vld [vmem:[%s891 + $0x3c] sm:$0x1]
      %v1079 = vshrl.u32 %v1062, 16
      %v1081 = vrot.slane %v1079, 4
      %v1082 = vshll.u32 %v1062, 16
      %v1084 = vrot.slane %v1082, 5
      %v1085 = vor.u32 %v1081, %v1084
      %v1086 = vrot.slane %v1085, 4
      %v1088 = vshll.u32 %v1063, 16
      %v1090 = vrot.slane %v1088, 5
      %v1091 = vsel %vm279, %v1086, %v1090
      %v1093 = vshrl.u32 %v1064, 16
      %v1095 = vrot.slane %v1093, 4
      %v1096 = vshll.u32 %v1064, 16
      %v1098 = vrot.slane %v1096, 5
      %v1099 = vor.u32 %v1095, %v1098
      %v1100 = vrot.slane %v1099, 4
      %v1102 = vshll.u32 %v1065, 16
      %v1104 = vrot.slane %v1102, 5
      %v1105 = vsel %vm279, %v1100, %v1104
      %v1107 = vshrl.u32 %v1066, 16
      %v1109 = vrot.slane %v1107, 4
      %v1110 = vshll.u32 %v1066, 16
      %v1112 = vrot.slane %v1110, 5
      %v1113 = vor.u32 %v1109, %v1112
      %v1114 = vrot.slane %v1113, 4
      %v1116 = vshll.u32 %v1067, 16
      %v1118 = vrot.slane %v1116, 5
      %v1119 = vsel %vm279, %v1114, %v1118
      %v1121 = vshrl.u32 %v1068, 16
      %v1123 = vrot.slane %v1121, 4
      %v1124 = vshll.u32 %v1068, 16
      %v1126 = vrot.slane %v1124, 5
      %v1127 = vor.u32 %v1123, %v1126
      %v1128 = vrot.slane %v1127, 4
      %v1130 = vshll.u32 %v1069, 16
      %v1132 = vrot.slane %v1130, 5
      %v1133 = vsel %vm279, %v1128, %v1132
      %v1135 = vshrl.u32 %v1070, 16
      %v1137 = vrot.slane %v1135, 4
      %v1138 = vshll.u32 %v1070, 16
      %v1140 = vrot.slane %v1138, 5
      %v1141 = vor.u32 %v1137, %v1140
      %v1142 = vrot.slane %v1141, 4
      %v1144 = vshll.u32 %v1071, 16
      %v1146 = vrot.slane %v1144, 5
      %v1147 = vsel %vm279, %v1142, %v1146
      %v1149 = vshrl.u32 %v1072, 16
      %v1151 = vrot.slane %v1149, 4
      %v1152 = vshll.u32 %v1072, 16
      %v1154 = vrot.slane %v1152, 5
      %v1155 = vor.u32 %v1151, %v1154
      %v1156 = vrot.slane %v1155, 4
      %v1158 = vshll.u32 %v1073, 16
      %v1160 = vrot.slane %v1158, 5
      %v1161 = vsel %vm279, %v1156, %v1160
      %v1163 = vshrl.u32 %v1074, 16
      %v1165 = vrot.slane %v1163, 4
      %v1166 = vshll.u32 %v1074, 16
      %v1168 = vrot.slane %v1166, 5
      %v1169 = vor.u32 %v1165, %v1168
      %v1170 = vrot.slane %v1169, 4
      %v1172 = vshll.u32 %v1075, 16
      %v1174 = vrot.slane %v1172, 5
      %v1175 = vsel %vm279, %v1170, %v1174
      %v1177 = vshrl.u32 %v1076, 16
      %v1179 = vrot.slane %v1177, 4
      %v1180 = vshll.u32 %v1076, 16
      %v1182 = vrot.slane %v1180, 5
      %v1183 = vor.u32 %v1179, %v1182
      %v1184 = vrot.slane %v1183, 4
      %v1186 = vshll.u32 %v1077, 16
      %v1188 = vrot.slane %v1186, 5
      %v1189 = vsel %vm279, %v1184, %v1188
      %s1190 = scalar_lea.vmem %s1, 256
      %v1191 = vld [vmem:[%s1190] sm:$0xf]
      %v1192 = vld [vmem:[%s1190 + $0x4] sm:$0xf]
      %v1193 = vld [vmem:[%s1190 + $0x8] sm:$0xf]
      %v1194 = vld [vmem:[%s1190 + $0xc] sm:$0xf]
      %v1195 = vld [vmem:[%s1190 + $0x10] sm:$0xf]
      %v1196 = vld [vmem:[%s1190 + $0x14] sm:$0xf]
      %v1197 = vld [vmem:[%s1190 + $0x18] sm:$0xf]
      %v1198 = vld [vmem:[%s1190 + $0x1c] sm:$0xf]
      %v1199 = vld [vmem:[%s1190 + $0x20] sm:$0xf]
      %v1200 = vld [vmem:[%s1190 + $0x24] sm:$0xf]
      %v1201 = vld [vmem:[%s1190 + $0x28] sm:$0xf]
      %v1202 = vld [vmem:[%s1190 + $0x2c] sm:$0xf]
      %v1203 = vld [vmem:[%s1190 + $0x30] sm:$0xf]
      %v1204 = vld [vmem:[%s1190 + $0x34] sm:$0xf]
      %v1205 = vld [vmem:[%s1190 + $0x38] sm:$0xf]
      %v1206 = vld [vmem:[%s1190 + $0x3c] sm:$0xf]
      %v1207 = vunpack.c.l.b16 %v1091
      %v1208 = vunpack.c.l.b16 %v1105
      %v1209 = vunpack.c.l.b16 %v1119
      %v1210 = vunpack.c.l.b16 %v1133
      %v1211 = vunpack.c.l.b16 %v1147
      %v1212 = vunpack.c.l.b16 %v1161
      %v1213 = vunpack.c.l.b16 %v1175
      %v1214 = vunpack.c.l.b16 %v1189
      %v1215 = vpack.c.b16 %v1208, %v1207
      %v1216 = vpack.c.b16 %v1210, %v1209
      %v1217 = vpack.c.b16 %v1212, %v1211
      %v1218 = vpack.c.b16 %v1214, %v1213
      %v1239 = vunpack.c.l.b16 %v1191
      %v1240 = vunpack.c.l.b16 %v1192
      %v1241 = vunpack.c.l.b16 %v1193
      %v1242 = vunpack.c.l.b16 %v1194
      %v1243 = vunpack.c.l.b16 %v1195
      %v1244 = vunpack.c.l.b16 %v1196
      %v1245 = vunpack.c.l.b16 %v1197
      %v1246 = vunpack.c.l.b16 %v1198
      %v1247 = vunpack.c.l.b16 %v1199
      %v1248 = vunpack.c.l.b16 %v1200
      %v1249 = vunpack.c.l.b16 %v1201
      %v1250 = vunpack.c.l.b16 %v1202
      %v1251 = vunpack.c.l.b16 %v1203
      %v1252 = vunpack.c.l.b16 %v1204
      %v1253 = vunpack.c.l.b16 %v1205
      %v1254 = vunpack.c.l.b16 %v1206
      %v1255 = vpack.c.b16 %v1240, %v1239
      %v1256 = vpack.c.b16 %v1242, %v1241
      %v1257 = vpack.c.b16 %v1244, %v1243
      %v1258 = vpack.c.b16 %v1246, %v1245
      %v1259 = vpack.c.b16 %v1248, %v1247
      %v1260 = vpack.c.b16 %v1250, %v1249
      %v1261 = vpack.c.b16 %v1252, %v1251
      %v1262 = vpack.c.b16 %v1254, %v1253
      %1271 = vmatprep.subr.bf16.mxu0 0
      %1272 = vmatpush1.bf16.msra.mxu0 %v1255
      %1273 = vmatprep.subr.bf16.mxu0 0
      %1274 = vmatpush1.bf16.msra.mxu0 %v1256
      %1275 = vmatprep.subr.bf16.mxu0 0
      %1276 = vmatpush1.bf16.msra.mxu0 %v1257
      %1277 = vmatprep.subr.bf16.mxu0 0
      %1278 = vmatpush1.bf16.msra.mxu0 %v1258
      %1279 = vmatprep.subr.bf16.mxu0 0
      %1280 = vmatpush1.bf16.msra.mxu0 %v1259
      %1281 = vmatprep.subr.bf16.mxu0 0
      %1282 = vmatpush1.bf16.msra.mxu0 %v1260
      %1283 = vmatprep.subr.bf16.mxu0 0
      %1284 = vmatpush1.bf16.msra.mxu0 %v1261
      %1285 = vmatprep.subr.bf16.mxu0 0
      %1286 = vmatpush1.bf16.msra.mxu0 %v1262
      %1287 = vmatprep.subr.bf16.mxu0 0
      %1288 = vmatpush1.bf16.msra.mxu0 0
      %1289 = vmatprep.subr.bf16.mxu0 0
      %1290 = vmatpush1.bf16.msra.mxu0 0
      %1291 = vmatprep.subr.bf16.mxu0 0
      %1292 = vmatpush1.bf16.msra.mxu0 0
      %1293 = vmatprep.subr.bf16.mxu0 0
      %1294 = vmatpush1.bf16.msra.mxu0 0
      %1295 = vmatprep.subr.bf16.mxu0 0
      %1296 = vmatpush1.bf16.msra.mxu0 0
      %1297 = vmatprep.subr.bf16.mxu0 0
      %1298 = vmatpush1.bf16.msra.mxu0 0
      %1299 = vmatprep.subr.bf16.mxu0 0
      %1300 = vmatpush1.bf16.msra.mxu0 0
      %1301 = vmatprep.subr.bf16.mxu0 0
      %1302 = vmatpush1.bf16.msra.mxu0 0
      %1303 = vmatprep.mubr.bf16.mxu0 0
      %1304 = vmatmul.mubr.bf16.gmra.mrb[0].mxu0 %v1215
      %v1305 = vpop.f32.mrb[0].mxu0
      %v1306 = vadd.f32 0.0, %v1305
      %v1307 = vpop.f32.mrb[0].mxu0
      %v1308 = vpop.f32.mrb[0].mxu0
      %v1309 = vadd.f32 0.0, %v1308
      %v1310 = vpop.f32.mrb[0].mxu0
      %1311 = vmatprep.mubr.bf16.mxu0 0
      %1312 = vmatmul.mubr.bf16.gmra.mrb[0].mxu0 %v1216
      %v1313 = vpop.f32.mrb[0].mxu0
      %v1314 = vadd.f32 0.0, %v1313
      %v1315 = vpop.f32.mrb[0].mxu0
      %v1316 = vpop.f32.mrb[0].mxu0
      %v1317 = vadd.f32 0.0, %v1316
      %v1318 = vpop.f32.mrb[0].mxu0
      %1319 = vmatprep.mubr.bf16.mxu0 0
      %1320 = vmatmul.mubr.bf16.gmra.mrb[0].mxu0 %v1217
      %v1321 = vpop.f32.mrb[0].mxu0
      %v1322 = vadd.f32 0.0, %v1321
      %v1323 = vpop.f32.mrb[0].mxu0
      %v1324 = vpop.f32.mrb[0].mxu0
      %v1325 = vadd.f32 0.0, %v1324
      %v1326 = vpop.f32.mrb[0].mxu0
      %1327 = vmatprep.mubr.bf16.mxu0 0
      %1328 = vmatmul.mubr.bf16.gmra.mrb[0].mxu0 %v1218
      %v1329 = vpop.f32.mrb[0].mxu0
      %v1330 = vadd.f32 0.0, %v1329
      %v1331 = vpop.f32.mrb[0].mxu0
      %v1332 = vpop.f32.mrb[0].mxu0
      %v1333 = vadd.f32 0.0, %v1332
      %v1334 = vpop.f32.mrb[0].mxu0
      %1335 = vdwg.mxu0
      %v1336 = vadd.f32 %v1054, %v1306
      %v1337 = vadd.f32 %v1055, %v1309
      %v1338 = vadd.f32 %v1056, %v1314
      %v1339 = vadd.f32 %v1057, %v1317
      %v1340 = vadd.f32 %v1058, %v1322
      %v1341 = vadd.f32 %v1059, %v1325
      %v1342 = vadd.f32 %v1060, %v1330
      %v1343 = vadd.f32 %v1061, %v1333
      %v1344 = vld [vmem:[%s891] sm:$0xe]
      %v1345 = vld [vmem:[%s891 + $0x8] sm:$0xe]
      %v1346 = vld [vmem:[%s891 + $0x10] sm:$0xe]
      %v1347 = vld [vmem:[%s891 + $0x18] sm:$0xe]
      %v1348 = vld [vmem:[%s891 + $0x20] sm:$0xe]
      %v1349 = vld [vmem:[%s891 + $0x28] sm:$0xe]
      %v1350 = vld [vmem:[%s891 + $0x30] sm:$0xe]
      %v1351 = vld [vmem:[%s891 + $0x38] sm:$0xe]
      %v1368 = vrot.slane %v1344, 5
      %v1369 = vrot.slane %v1368, 4
      %v1370 = vrot.slane %v1063, 5
      %v1371 = vsel %vm701, %v1369, %v1370
      %v1372 = vrot.slane %v1345, 5
      %v1373 = vrot.slane %v1372, 4
      %v1374 = vrot.slane %v1065, 5
      %v1375 = vsel %vm701, %v1373, %v1374
      %v1376 = vrot.slane %v1346, 5
      %v1377 = vrot.slane %v1376, 4
      %v1378 = vrot.slane %v1067, 5
      %v1379 = vsel %vm701, %v1377, %v1378
      %v1380 = vrot.slane %v1347, 5
      %v1381 = vrot.slane %v1380, 4
      %v1382 = vrot.slane %v1069, 5
      %v1383 = vsel %vm701, %v1381, %v1382
      %v1384 = vrot.slane %v1348, 5
      %v1385 = vrot.slane %v1384, 4
      %v1386 = vrot.slane %v1071, 5
      %v1387 = vsel %vm701, %v1385, %v1386
      %v1388 = vrot.slane %v1349, 5
      %v1389 = vrot.slane %v1388, 4
      %v1390 = vrot.slane %v1073, 5
      %v1391 = vsel %vm701, %v1389, %v1390
      %v1392 = vrot.slane %v1350, 5
      %v1393 = vrot.slane %v1392, 4
      %v1394 = vrot.slane %v1075, 5
      %v1395 = vsel %vm701, %v1393, %v1394
      %v1396 = vrot.slane %v1351, 5
      %v1397 = vrot.slane %v1396, 4
      %v1398 = vrot.slane %v1077, 5
      %v1399 = vsel %vm701, %v1397, %v1398
      %s1400 = scalar_lea.vmem %s1, 320
      %v1401 = vld [vmem:[%s1400] sm:$0xf]
      %v1402 = vld [vmem:[%s1400 + $0x4] sm:$0xf]
      %v1403 = vld [vmem:[%s1400 + $0x8] sm:$0xf]
      %v1404 = vld [vmem:[%s1400 + $0xc] sm:$0xf]
      %v1405 = vld [vmem:[%s1400 + $0x10] sm:$0xf]
      %v1406 = vld [vmem:[%s1400 + $0x14] sm:$0xf]
      %v1407 = vld [vmem:[%s1400 + $0x18] sm:$0xf]
      %v1408 = vld [vmem:[%s1400 + $0x1c] sm:$0xf]
      %v1409 = vld [vmem:[%s1400 + $0x20] sm:$0xf]
      %v1410 = vld [vmem:[%s1400 + $0x24] sm:$0xf]
      %v1411 = vld [vmem:[%s1400 + $0x28] sm:$0xf]
      %v1412 = vld [vmem:[%s1400 + $0x2c] sm:$0xf]
      %v1413 = vld [vmem:[%s1400 + $0x30] sm:$0xf]
      %v1414 = vld [vmem:[%s1400 + $0x34] sm:$0xf]
      %v1415 = vld [vmem:[%s1400 + $0x38] sm:$0xf]
      %v1416 = vld [vmem:[%s1400 + $0x3c] sm:$0xf]
      %v1417 = vunpack.c.l.b16 %v1371
      %v1418 = vunpack.c.l.b16 %v1375
      %v1419 = vunpack.c.l.b16 %v1379
      %v1420 = vunpack.c.l.b16 %v1383
      %v1421 = vunpack.c.l.b16 %v1387
      %v1422 = vunpack.c.l.b16 %v1391
      %v1423 = vunpack.c.l.b16 %v1395
      %v1424 = vunpack.c.l.b16 %v1399
      %v1425 = vpack.c.b16 %v1418, %v1417
      %v1426 = vpack.c.b16 %v1420, %v1419
      %v1427 = vpack.c.b16 %v1422, %v1421
      %v1428 = vpack.c.b16 %v1424, %v1423
      %v1449 = vunpack.c.l.b16 %v1401
      %v1450 = vunpack.c.l.b16 %v1402
      %v1451 = vunpack.c.l.b16 %v1403
      %v1452 = vunpack.c.l.b16 %v1404
      %v1453 = vunpack.c.l.b16 %v1405
      %v1454 = vunpack.c.l.b16 %v1406
      %v1455 = vunpack.c.l.b16 %v1407
      %v1456 = vunpack.c.l.b16 %v1408
      %v1457 = vunpack.c.l.b16 %v1409
      %v1458 = vunpack.c.l.b16 %v1410
      %v1459 = vunpack.c.l.b16 %v1411
      %v1460 = vunpack.c.l.b16 %v1412
      %v1461 = vunpack.c.l.b16 %v1413
      %v1462 = vunpack.c.l.b16 %v1414
      %v1463 = vunpack.c.l.b16 %v1415
      %v1464 = vunpack.c.l.b16 %v1416
      %v1465 = vpack.c.b16 %v1450, %v1449
      %v1466 = vpack.c.b16 %v1452, %v1451
      %v1467 = vpack.c.b16 %v1454, %v1453
      %v1468 = vpack.c.b16 %v1456, %v1455
      %v1469 = vpack.c.b16 %v1458, %v1457
      %v1470 = vpack.c.b16 %v1460, %v1459
      %v1471 = vpack.c.b16 %v1462, %v1461
      %v1472 = vpack.c.b16 %v1464, %v1463
      %1481 = vmatprep.subr.bf16.mxu0 0
      %1482 = vmatpush1.bf16.msra.mxu0 %v1465
      %1483 = vmatprep.subr.bf16.mxu0 0
      %1484 = vmatpush1.bf16.msra.mxu0 %v1466
      %1485 = vmatprep.subr.bf16.mxu0 0
      %1486 = vmatpush1.bf16.msra.mxu0 %v1467
      %1487 = vmatprep.subr.bf16.mxu0 0
      %1488 = vmatpush1.bf16.msra.mxu0 %v1468
      %1489 = vmatprep.subr.bf16.mxu0 0
      %1490 = vmatpush1.bf16.msra.mxu0 %v1469
      %1491 = vmatprep.subr.bf16.mxu0 0
      %1492 = vmatpush1.bf16.msra.mxu0 %v1470
      %1493 = vmatprep.subr.bf16.mxu0 0
      %1494 = vmatpush1.bf16.msra.mxu0 %v1471
      %1495 = vmatprep.subr.bf16.mxu0 0
      %1496 = vmatpush1.bf16.msra.mxu0 %v1472
      %1497 = vmatprep.subr.bf16.mxu0 0
      %1498 = vmatpush1.bf16.msra.mxu0 0
      %1499 = vmatprep.subr.bf16.mxu0 0
      %1500 = vmatpush1.bf16.msra.mxu0 0
      %1501 = vmatprep.subr.bf16.mxu0 0
      %1502 = vmatpush1.bf16.msra.mxu0 0
      %1503 = vmatprep.subr.bf16.mxu0 0
      %1504 = vmatpush1.bf16.msra.mxu0 0
      %1505 = vmatprep.subr.bf16.mxu0 0
      %1506 = vmatpush1.bf16.msra.mxu0 0
      %1507 = vmatprep.subr.bf16.mxu0 0
      %1508 = vmatpush1.bf16.msra.mxu0 0
      %1509 = vmatprep.subr.bf16.mxu0 0
      %1510 = vmatpush1.bf16.msra.mxu0 0
      %1511 = vmatprep.subr.bf16.mxu0 0
      %1512 = vmatpush1.bf16.msra.mxu0 0
      %1513 = vmatprep.mubr.bf16.mxu0 0
      %1514 = vmatmul.mubr.bf16.gmra.mrb[0].mxu0 %v1425
      %v1515 = vpop.f32.mrb[0].mxu0
      %v1516 = vadd.f32 0.0, %v1515
      %v1517 = vpop.f32.mrb[0].mxu0
      %v1518 = vpop.f32.mrb[0].mxu0
      %v1519 = vadd.f32 0.0, %v1518
      %v1520 = vpop.f32.mrb[0].mxu0
      %1521 = vmatprep.mubr.bf16.mxu0 0
      %1522 = vmatmul.mubr.bf16.gmra.mrb[0].mxu0 %v1426
      %v1523 = vpop.f32.mrb[0].mxu0
      %v1524 = vadd.f32 0.0, %v1523
      %v1525 = vpop.f32.mrb[0].mxu0
      %v1526 = vpop.f32.mrb[0].mxu0
      %v1527 = vadd.f32 0.0, %v1526
      %v1528 = vpop.f32.mrb[0].mxu0
      %1529 = vmatprep.mubr.bf16.mxu0 0
      %1530 = vmatmul.mubr.bf16.gmra.mrb[0].mxu0 %v1427
      %v1531 = vpop.f32.mrb[0].mxu0
      %v1532 = vadd.f32 0.0, %v1531
      %v1533 = vpop.f32.mrb[0].mxu0
      %v1534 = vpop.f32.mrb[0].mxu0
      %v1535 = vadd.f32 0.0, %v1534
      %v1536 = vpop.f32.mrb[0].mxu0
      %1537 = vmatprep.mubr.bf16.mxu0 0
      %1538 = vmatmul.mubr.bf16.gmra.mrb[0].mxu0 %v1428
      %v1539 = vpop.f32.mrb[0].mxu0
      %v1540 = vadd.f32 0.0, %v1539
      %v1541 = vpop.f32.mrb[0].mxu0
      %v1542 = vpop.f32.mrb[0].mxu0
      %v1543 = vadd.f32 0.0, %v1542
      %v1544 = vpop.f32.mrb[0].mxu0
      %1545 = vdwg.mxu0
      %v1546 = vadd.f32 %v1336, %v1516
      %v1547 = vadd.f32 %v1337, %v1519
      %v1548 = vadd.f32 %v1338, %v1524
      %v1549 = vadd.f32 %v1339, %v1527
      %v1550 = vadd.f32 %v1340, %v1532
      %v1551 = vadd.f32 %v1341, %v1535
      %v1552 = vadd.f32 %v1342, %v1540
      %v1553 = vadd.f32 %v1343, %v1543
      %s1554 = sadd.s32 %s241, 2
      %s1555 = smul.u32 %s1554, 2
      %s1556 = smul.addr %s1555, 4
      %s1557 = scalar_lea.vmem %s222, %s1556
      %v1558 = vld [vmem:[%s1557] sm:$0xf]
      %v1559 = vld [vmem:[%s1557 + $0x8] sm:$0xf]
      %v1560 = vld [vmem:[%s1557 + $0x10] sm:$0xf]
      %v1561 = vld [vmem:[%s1557 + $0x18] sm:$0xf]
      %v1562 = vld [vmem:[%s1557 + $0x20] sm:$0xf]
      %v1563 = vld [vmem:[%s1557 + $0x28] sm:$0xf]
      %v1564 = vld [vmem:[%s1557 + $0x30] sm:$0xf]
      %v1565 = vld [vmem:[%s1557 + $0x38] sm:$0xf]
      %s1566 = scalar_lea.vmem %s1, 384
      %v1567 = vld [vmem:[%s1566] sm:$0xf]
      %v1568 = vld [vmem:[%s1566 + $0x4] sm:$0xf]
      %v1569 = vld [vmem:[%s1566 + $0x8] sm:$0xf]
      %v1570 = vld [vmem:[%s1566 + $0xc] sm:$0xf]
      %v1571 = vld [vmem:[%s1566 + $0x10] sm:$0xf]
      %v1572 = vld [vmem:[%s1566 + $0x14] sm:$0xf]
      %v1573 = vld [vmem:[%s1566 + $0x18] sm:$0xf]
      %v1574 = vld [vmem:[%s1566 + $0x1c] sm:$0xf]
      %v1575 = vld [vmem:[%s1566 + $0x20] sm:$0xf]
      %v1576 = vld [vmem:[%s1566 + $0x24] sm:$0xf]
      %v1577 = vld [vmem:[%s1566 + $0x28] sm:$0xf]
      %v1578 = vld [vmem:[%s1566 + $0x2c] sm:$0xf]
      %v1579 = vld [vmem:[%s1566 + $0x30] sm:$0xf]
      %v1580 = vld [vmem:[%s1566 + $0x34] sm:$0xf]
      %v1581 = vld [vmem:[%s1566 + $0x38] sm:$0xf]
      %v1582 = vld [vmem:[%s1566 + $0x3c] sm:$0xf]
      %v1591 = vunpack.c.l.b16 %v1558
      %v1592 = vunpack.c.l.b16 %v1559
      %v1593 = vunpack.c.l.b16 %v1560
      %v1594 = vunpack.c.l.b16 %v1561
      %v1595 = vunpack.c.l.b16 %v1562
      %v1596 = vunpack.c.l.b16 %v1563
      %v1597 = vunpack.c.l.b16 %v1564
      %v1598 = vunpack.c.l.b16 %v1565
      %v1599 = vpack.c.b16 %v1592, %v1591
      %v1600 = vpack.c.b16 %v1594, %v1593
      %v1601 = vpack.c.b16 %v1596, %v1595
      %v1602 = vpack.c.b16 %v1598, %v1597
      %v1623 = vunpack.c.l.b16 %v1567
      %v1624 = vunpack.c.l.b16 %v1568
      %v1625 = vunpack.c.l.b16 %v1569
      %v1626 = vunpack.c.l.b16 %v1570
      %v1627 = vunpack.c.l.b16 %v1571
      %v1628 = vunpack.c.l.b16 %v1572
      %v1629 = vunpack.c.l.b16 %v1573
      %v1630 = vunpack.c.l.b16 %v1574
      %v1631 = vunpack.c.l.b16 %v1575
      %v1632 = vunpack.c.l.b16 %v1576
      %v1633 = vunpack.c.l.b16 %v1577
      %v1634 = vunpack.c.l.b16 %v1578
      %v1635 = vunpack.c.l.b16 %v1579
      %v1636 = vunpack.c.l.b16 %v1580
      %v1637 = vunpack.c.l.b16 %v1581
      %v1638 = vunpack.c.l.b16 %v1582
      %v1639 = vpack.c.b16 %v1624, %v1623
      %v1640 = vpack.c.b16 %v1626, %v1625
      %v1641 = vpack.c.b16 %v1628, %v1627
      %v1642 = vpack.c.b16 %v1630, %v1629
      %v1643 = vpack.c.b16 %v1632, %v1631
      %v1644 = vpack.c.b16 %v1634, %v1633
      %v1645 = vpack.c.b16 %v1636, %v1635
      %v1646 = vpack.c.b16 %v1638, %v1637
      %1655 = vmatprep.subr.bf16.mxu0 0
      %1656 = vmatpush1.bf16.msra.mxu0 %v1639
      %1657 = vmatprep.subr.bf16.mxu0 0
      %1658 = vmatpush1.bf16.msra.mxu0 %v1640
      %1659 = vmatprep.subr.bf16.mxu0 0
      %1660 = vmatpush1.bf16.msra.mxu0 %v1641
      %1661 = vmatprep.subr.bf16.mxu0 0
      %1662 = vmatpush1.bf16.msra.mxu0 %v1642
      %1663 = vmatprep.subr.bf16.mxu0 0
      %1664 = vmatpush1.bf16.msra.mxu0 %v1643
      %1665 = vmatprep.subr.bf16.mxu0 0
      %1666 = vmatpush1.bf16.msra.mxu0 %v1644
      %1667 = vmatprep.subr.bf16.mxu0 0
      %1668 = vmatpush1.bf16.msra.mxu0 %v1645
      %1669 = vmatprep.subr.bf16.mxu0 0
      %1670 = vmatpush1.bf16.msra.mxu0 %v1646
      %1671 = vmatprep.subr.bf16.mxu0 0
      %1672 = vmatpush1.bf16.msra.mxu0 0
      %1673 = vmatprep.subr.bf16.mxu0 0
      %1674 = vmatpush1.bf16.msra.mxu0 0
      %1675 = vmatprep.subr.bf16.mxu0 0
      %1676 = vmatpush1.bf16.msra.mxu0 0
      %1677 = vmatprep.subr.bf16.mxu0 0
      %1678 = vmatpush1.bf16.msra.mxu0 0
      %1679 = vmatprep.subr.bf16.mxu0 0
      %1680 = vmatpush1.bf16.msra.mxu0 0
      %1681 = vmatprep.subr.bf16.mxu0 0
      %1682 = vmatpush1.bf16.msra.mxu0 0
      %1683 = vmatprep.subr.bf16.mxu0 0
      %1684 = vmatpush1.bf16.msra.mxu0 0
      %1685 = vmatprep.subr.bf16.mxu0 0
      %1686 = vmatpush1.bf16.msra.mxu0 0
      %1687 = vmatprep.mubr.bf16.mxu0 0
      %1688 = vmatmul.mubr.bf16.gmra.mrb[0].mxu0 %v1599
      %v1689 = vpop.f32.mrb[0].mxu0
      %v1690 = vadd.f32 0.0, %v1689
      %v1691 = vpop.f32.mrb[0].mxu0
      %v1692 = vpop.f32.mrb[0].mxu0
      %v1693 = vadd.f32 0.0, %v1692
      %v1694 = vpop.f32.mrb[0].mxu0
      %1695 = vmatprep.mubr.bf16.mxu0 0
      %1696 = vmatmul.mubr.bf16.gmra.mrb[0].mxu0 %v1600
      %v1697 = vpop.f32.mrb[0].mxu0
      %v1698 = vadd.f32 0.0, %v1697
      %v1699 = vpop.f32.mrb[0].mxu0
      %v1700 = vpop.f32.mrb[0].mxu0
      %v1701 = vadd.f32 0.0, %v1700
      %v1702 = vpop.f32.mrb[0].mxu0
      %1703 = vmatprep.mubr.bf16.mxu0 0
      %1704 = vmatmul.mubr.bf16.gmra.mrb[0].mxu0 %v1601
      %v1705 = vpop.f32.mrb[0].mxu0
      %v1706 = vadd.f32 0.0, %v1705
      %v1707 = vpop.f32.mrb[0].mxu0
      %v1708 = vpop.f32.mrb[0].mxu0
      %v1709 = vadd.f32 0.0, %v1708
      %v1710 = vpop.f32.mrb[0].mxu0
      %1711 = vmatprep.mubr.bf16.mxu0 0
      %1712 = vmatmul.mubr.bf16.gmra.mrb[0].mxu0 %v1602
      %v1713 = vpop.f32.mrb[0].mxu0
      %v1714 = vadd.f32 0.0, %v1713
      %v1715 = vpop.f32.mrb[0].mxu0
      %v1716 = vpop.f32.mrb[0].mxu0
      %v1717 = vadd.f32 0.0, %v1716
      %v1718 = vpop.f32.mrb[0].mxu0
      %1719 = vdwg.mxu0
      %v1720 = vadd.f32 %v1546, %v1690
      %v1721 = vadd.f32 %v1547, %v1693
      %v1722 = vadd.f32 %v1548, %v1698
      %v1723 = vadd.f32 %v1549, %v1701
      %v1724 = vadd.f32 %v1550, %v1706
      %v1725 = vadd.f32 %v1551, %v1709
      %v1726 = vadd.f32 %v1552, %v1714
      %v1727 = vadd.f32 %v1553, %v1717
      %v1728 = vld [vmem:[%s1557] sm:$0xf]
      %v1729 = vld [vmem:[%s1557 + $0x4] sm:$0x1]
      %v1730 = vld [vmem:[%s1557 + $0x8] sm:$0xf]
      %v1731 = vld [vmem:[%s1557 + $0xc] sm:$0x1]
      %v1732 = vld [vmem:[%s1557 + $0x10] sm:$0xf]
      %v1733 = vld [vmem:[%s1557 + $0x14] sm:$0x1]
      %v1734 = vld [vmem:[%s1557 + $0x18] sm:$0xf]
      %v1735 = vld [vmem:[%s1557 + $0x1c] sm:$0x1]
      %v1736 = vld [vmem:[%s1557 + $0x20] sm:$0xf]
      %v1737 = vld [vmem:[%s1557 + $0x24] sm:$0x1]
      %v1738 = vld [vmem:[%s1557 + $0x28] sm:$0xf]
      %v1739 = vld [vmem:[%s1557 + $0x2c] sm:$0x1]
      %v1740 = vld [vmem:[%s1557 + $0x30] sm:$0xf]
      %v1741 = vld [vmem:[%s1557 + $0x34] sm:$0x1]
      %v1742 = vld [vmem:[%s1557 + $0x38] sm:$0xf]
      %v1743 = vld [vmem:[%s1557 + $0x3c] sm:$0x1]
      %v1745 = vshrl.u32 %v1728, 16
      %v1747 = vrot.slane %v1745, 4
      %v1748 = vshll.u32 %v1728, 16
      %v1750 = vrot.slane %v1748, 5
      %v1751 = vor.u32 %v1747, %v1750
      %v1752 = vrot.slane %v1751, 4
      %v1754 = vshll.u32 %v1729, 16
      %v1756 = vrot.slane %v1754, 5
      %v1757 = vsel %vm279, %v1752, %v1756
      %v1759 = vshrl.u32 %v1730, 16
      %v1761 = vrot.slane %v1759, 4
      %v1762 = vshll.u32 %v1730, 16
      %v1764 = vrot.slane %v1762, 5
      %v1765 = vor.u32 %v1761, %v1764
      %v1766 = vrot.slane %v1765, 4
      %v1768 = vshll.u32 %v1731, 16
      %v1770 = vrot.slane %v1768, 5
      %v1771 = vsel %vm279, %v1766, %v1770
      %v1773 = vshrl.u32 %v1732, 16
      %v1775 = vrot.slane %v1773, 4
      %v1776 = vshll.u32 %v1732, 16
      %v1778 = vrot.slane %v1776, 5
      %v1779 = vor.u32 %v1775, %v1778
      %v1780 = vrot.slane %v1779, 4
      %v1782 = vshll.u32 %v1733, 16
      %v1784 = vrot.slane %v1782, 5
      %v1785 = vsel %vm279, %v1780, %v1784
      %v1787 = vshrl.u32 %v1734, 16
      %v1789 = vrot.slane %v1787, 4
      %v1790 = vshll.u32 %v1734, 16
      %v1792 = vrot.slane %v1790, 5
      %v1793 = vor.u32 %v1789, %v1792
      %v1794 = vrot.slane %v1793, 4
      %v1796 = vshll.u32 %v1735, 16
      %v1798 = vrot.slane %v1796, 5
      %v1799 = vsel %vm279, %v1794, %v1798
      %v1801 = vshrl.u32 %v1736, 16
      %v1803 = vrot.slane %v1801, 4
      %v1804 = vshll.u32 %v1736, 16
      %v1806 = vrot.slane %v1804, 5
      %v1807 = vor.u32 %v1803, %v1806
      %v1808 = vrot.slane %v1807, 4
      %v1810 = vshll.u32 %v1737, 16
      %v1812 = vrot.slane %v1810, 5
      %v1813 = vsel %vm279, %v1808, %v1812
      %v1815 = vshrl.u32 %v1738, 16
      %v1817 = vrot.slane %v1815, 4
      %v1818 = vshll.u32 %v1738, 16
      %v1820 = vrot.slane %v1818, 5
      %v1821 = vor.u32 %v1817, %v1820
      %v1822 = vrot.slane %v1821, 4
      %v1824 = vshll.u32 %v1739, 16
      %v1826 = vrot.slane %v1824, 5
      %v1827 = vsel %vm279, %v1822, %v1826
      %v1829 = vshrl.u32 %v1740, 16
      %v1831 = vrot.slane %v1829, 4
      %v1832 = vshll.u32 %v1740, 16
      %v1834 = vrot.slane %v1832, 5
      %v1835 = vor.u32 %v1831, %v1834
      %v1836 = vrot.slane %v1835, 4
      %v1838 = vshll.u32 %v1741, 16
      %v1840 = vrot.slane %v1838, 5
      %v1841 = vsel %vm279, %v1836, %v1840
      %v1843 = vshrl.u32 %v1742, 16
      %v1845 = vrot.slane %v1843, 4
      %v1846 = vshll.u32 %v1742, 16
      %v1848 = vrot.slane %v1846, 5
      %v1849 = vor.u32 %v1845, %v1848
      %v1850 = vrot.slane %v1849, 4
      %v1852 = vshll.u32 %v1743, 16
      %v1854 = vrot.slane %v1852, 5
      %v1855 = vsel %vm279, %v1850, %v1854
      %s1856 = scalar_lea.vmem %s1, 448
      %v1857 = vld [vmem:[%s1856] sm:$0xf]
      %v1858 = vld [vmem:[%s1856 + $0x4] sm:$0xf]
      %v1859 = vld [vmem:[%s1856 + $0x8] sm:$0xf]
      %v1860 = vld [vmem:[%s1856 + $0xc] sm:$0xf]
      %v1861 = vld [vmem:[%s1856 + $0x10] sm:$0xf]
      %v1862 = vld [vmem:[%s1856 + $0x14] sm:$0xf]
      %v1863 = vld [vmem:[%s1856 + $0x18] sm:$0xf]
      %v1864 = vld [vmem:[%s1856 + $0x1c] sm:$0xf]
      %v1865 = vld [vmem:[%s1856 + $0x20] sm:$0xf]
      %v1866 = vld [vmem:[%s1856 + $0x24] sm:$0xf]
      %v1867 = vld [vmem:[%s1856 + $0x28] sm:$0xf]
      %v1868 = vld [vmem:[%s1856 + $0x2c] sm:$0xf]
      %v1869 = vld [vmem:[%s1856 + $0x30] sm:$0xf]
      %v1870 = vld [vmem:[%s1856 + $0x34] sm:$0xf]
      %v1871 = vld [vmem:[%s1856 + $0x38] sm:$0xf]
      %v1872 = vld [vmem:[%s1856 + $0x3c] sm:$0xf]
      %v1873 = vunpack.c.l.b16 %v1757
      %v1874 = vunpack.c.l.b16 %v1771
      %v1875 = vunpack.c.l.b16 %v1785
      %v1876 = vunpack.c.l.b16 %v1799
      %v1877 = vunpack.c.l.b16 %v1813
      %v1878 = vunpack.c.l.b16 %v1827
      %v1879 = vunpack.c.l.b16 %v1841
      %v1880 = vunpack.c.l.b16 %v1855
      %v1881 = vpack.c.b16 %v1874, %v1873
      %v1882 = vpack.c.b16 %v1876, %v1875
      %v1883 = vpack.c.b16 %v1878, %v1877
      %v1884 = vpack.c.b16 %v1880, %v1879
      %v1905 = vunpack.c.l.b16 %v1857
      %v1906 = vunpack.c.l.b16 %v1858
      %v1907 = vunpack.c.l.b16 %v1859
      %v1908 = vunpack.c.l.b16 %v1860
      %v1909 = vunpack.c.l.b16 %v1861
      %v1910 = vunpack.c.l.b16 %v1862
      %v1911 = vunpack.c.l.b16 %v1863
      %v1912 = vunpack.c.l.b16 %v1864
      %v1913 = vunpack.c.l.b16 %v1865
      %v1914 = vunpack.c.l.b16 %v1866
      %v1915 = vunpack.c.l.b16 %v1867
      %v1916 = vunpack.c.l.b16 %v1868
      %v1917 = vunpack.c.l.b16 %v1869
      %v1918 = vunpack.c.l.b16 %v1870
      %v1919 = vunpack.c.l.b16 %v1871
      %v1920 = vunpack.c.l.b16 %v1872
      %v1921 = vpack.c.b16 %v1906, %v1905
      %v1922 = vpack.c.b16 %v1908, %v1907
      %v1923 = vpack.c.b16 %v1910, %v1909
      %v1924 = vpack.c.b16 %v1912, %v1911
      %v1925 = vpack.c.b16 %v1914, %v1913
      %v1926 = vpack.c.b16 %v1916, %v1915
      %v1927 = vpack.c.b16 %v1918, %v1917
      %v1928 = vpack.c.b16 %v1920, %v1919
      %1937 = vmatprep.subr.bf16.mxu0 0
      %1938 = vmatpush1.bf16.msra.mxu0 %v1921
      %1939 = vmatprep.subr.bf16.mxu0 0
      %1940 = vmatpush1.bf16.msra.mxu0 %v1922
      %1941 = vmatprep.subr.bf16.mxu0 0
      %1942 = vmatpush1.bf16.msra.mxu0 %v1923
      %1943 = vmatprep.subr.bf16.mxu0 0
      %1944 = vmatpush1.bf16.msra.mxu0 %v1924
      %1945 = vmatprep.subr.bf16.mxu0 0
      %1946 = vmatpush1.bf16.msra.mxu0 %v1925
      %1947 = vmatprep.subr.bf16.mxu0 0
      %1948 = vmatpush1.bf16.msra.mxu0 %v1926
      %1949 = vmatprep.subr.bf16.mxu0 0
      %1950 = vmatpush1.bf16.msra.mxu0 %v1927
      %1951 = vmatprep.subr.bf16.mxu0 0
      %1952 = vmatpush1.bf16.msra.mxu0 %v1928
      %1953 = vmatprep.subr.bf16.mxu0 0
      %1954 = vmatpush1.bf16.msra.mxu0 0
      %1955 = vmatprep.subr.bf16.mxu0 0
      %1956 = vmatpush1.bf16.msra.mxu0 0
      %1957 = vmatprep.subr.bf16.mxu0 0
      %1958 = vmatpush1.bf16.msra.mxu0 0
      %1959 = vmatprep.subr.bf16.mxu0 0
      %1960 = vmatpush1.bf16.msra.mxu0 0
      %1961 = vmatprep.subr.bf16.mxu0 0
      %1962 = vmatpush1.bf16.msra.mxu0 0
      %1963 = vmatprep.subr.bf16.mxu0 0
      %1964 = vmatpush1.bf16.msra.mxu0 0
      %1965 = vmatprep.subr.bf16.mxu0 0
      %1966 = vmatpush1.bf16.msra.mxu0 0
      %1967 = vmatprep.subr.bf16.mxu0 0
      %1968 = vmatpush1.bf16.msra.mxu0 0
      %1969 = vmatprep.mubr.bf16.mxu0 0
      %1970 = vmatmul.mubr.bf16.gmra.mrb[0].mxu0 %v1881
      %v1971 = vpop.f32.mrb[0].mxu0
      %v1972 = vadd.f32 0.0, %v1971
      %v1973 = vpop.f32.mrb[0].mxu0
      %v1974 = vpop.f32.mrb[0].mxu0
      %v1975 = vadd.f32 0.0, %v1974
      %v1976 = vpop.f32.mrb[0].mxu0
      %1977 = vmatprep.mubr.bf16.mxu0 0
      %1978 = vmatmul.mubr.bf16.gmra.mrb[0].mxu0 %v1882
      %v1979 = vpop.f32.mrb[0].mxu0
      %v1980 = vadd.f32 0.0, %v1979
      %v1981 = vpop.f32.mrb[0].mxu0
      %v1982 = vpop.f32.mrb[0].mxu0
      %v1983 = vadd.f32 0.0, %v1982
      %v1984 = vpop.f32.mrb[0].mxu0
      %1985 = vmatprep.mubr.bf16.mxu0 0
      %1986 = vmatmul.mubr.bf16.gmra.mrb[0].mxu0 %v1883
      %v1987 = vpop.f32.mrb[0].mxu0
      %v1988 = vadd.f32 0.0, %v1987
      %v1989 = vpop.f32.mrb[0].mxu0
      %v1990 = vpop.f32.mrb[0].mxu0
      %v1991 = vadd.f32 0.0, %v1990
      %v1992 = vpop.f32.mrb[0].mxu0
      %1993 = vmatprep.mubr.bf16.mxu0 0
      %1994 = vmatmul.mubr.bf16.gmra.mrb[0].mxu0 %v1884
      %v1995 = vpop.f32.mrb[0].mxu0
      %v1996 = vadd.f32 0.0, %v1995
      %v1997 = vpop.f32.mrb[0].mxu0
      %v1998 = vpop.f32.mrb[0].mxu0
      %v1999 = vadd.f32 0.0, %v1998
      %v2000 = vpop.f32.mrb[0].mxu0
      %2001 = vdwg.mxu0
      %v2002 = vadd.f32 %v1720, %v1972
      %v2003 = vadd.f32 %v1721, %v1975
      %v2004 = vadd.f32 %v1722, %v1980
      %v2005 = vadd.f32 %v1723, %v1983
      %v2006 = vadd.f32 %v1724, %v1988
      %v2007 = vadd.f32 %v1725, %v1991
      %v2008 = vadd.f32 %v1726, %v1996
      %v2009 = vadd.f32 %v1727, %v1999
      %v2010 = vld [vmem:[%s1557] sm:$0xe]
      %v2011 = vld [vmem:[%s1557 + $0x8] sm:$0xe]
      %v2012 = vld [vmem:[%s1557 + $0x10] sm:$0xe]
      %v2013 = vld [vmem:[%s1557 + $0x18] sm:$0xe]
      %v2014 = vld [vmem:[%s1557 + $0x20] sm:$0xe]
      %v2015 = vld [vmem:[%s1557 + $0x28] sm:$0xe]
      %v2016 = vld [vmem:[%s1557 + $0x30] sm:$0xe]
      %v2017 = vld [vmem:[%s1557 + $0x38] sm:$0xe]
      %v2034 = vrot.slane %v2010, 5
      %v2035 = vrot.slane %v2034, 4
      %v2036 = vrot.slane %v1729, 5
      %v2037 = vsel %vm701, %v2035, %v2036
      %v2038 = vrot.slane %v2011, 5
      %v2039 = vrot.slane %v2038, 4
      %v2040 = vrot.slane %v1731, 5
      %v2041 = vsel %vm701, %v2039, %v2040
      %v2042 = vrot.slane %v2012, 5
      %v2043 = vrot.slane %v2042, 4
      %v2044 = vrot.slane %v1733, 5
      %v2045 = vsel %vm701, %v2043, %v2044
      %v2046 = vrot.slane %v2013, 5
      %v2047 = vrot.slane %v2046, 4
      %v2048 = vrot.slane %v1735, 5
      %v2049 = vsel %vm701, %v2047, %v2048
      %v2050 = vrot.slane %v2014, 5
      %v2051 = vrot.slane %v2050, 4
      %v2052 = vrot.slane %v1737, 5
      %v2053 = vsel %vm701, %v2051, %v2052
      %v2054 = vrot.slane %v2015, 5
      %v2055 = vrot.slane %v2054, 4
      %v2056 = vrot.slane %v1739, 5
      %v2057 = vsel %vm701, %v2055, %v2056
      %v2058 = vrot.slane %v2016, 5
      %v2059 = vrot.slane %v2058, 4
      %v2060 = vrot.slane %v1741, 5
      %v2061 = vsel %vm701, %v2059, %v2060
      %v2062 = vrot.slane %v2017, 5
      %v2063 = vrot.slane %v2062, 4
      %v2064 = vrot.slane %v1743, 5
      %v2065 = vsel %vm701, %v2063, %v2064
      %s2066 = scalar_lea.vmem %s1, 512
      %v2067 = vld [vmem:[%s2066] sm:$0xf]
      %v2068 = vld [vmem:[%s2066 + $0x4] sm:$0xf]
      %v2069 = vld [vmem:[%s2066 + $0x8] sm:$0xf]
      %v2070 = vld [vmem:[%s2066 + $0xc] sm:$0xf]
      %v2071 = vld [vmem:[%s2066 + $0x10] sm:$0xf]
      %v2072 = vld [vmem:[%s2066 + $0x14] sm:$0xf]
      %v2073 = vld [vmem:[%s2066 + $0x18] sm:$0xf]
      %v2074 = vld [vmem:[%s2066 + $0x1c] sm:$0xf]
      %v2075 = vld [vmem:[%s2066 + $0x20] sm:$0xf]
      %v2076 = vld [vmem:[%s2066 + $0x24] sm:$0xf]
      %v2077 = vld [vmem:[%s2066 + $0x28] sm:$0xf]
      %v2078 = vld [vmem:[%s2066 + $0x2c] sm:$0xf]
      %v2079 = vld [vmem:[%s2066 + $0x30] sm:$0xf]
      %v2080 = vld [vmem:[%s2066 + $0x34] sm:$0xf]
      %v2081 = vld [vmem:[%s2066 + $0x38] sm:$0xf]
      %v2082 = vld [vmem:[%s2066 + $0x3c] sm:$0xf]
      %v2083 = vunpack.c.l.b16 %v2037
      %v2084 = vunpack.c.l.b16 %v2041
      %v2085 = vunpack.c.l.b16 %v2045
      %v2086 = vunpack.c.l.b16 %v2049
      %v2087 = vunpack.c.l.b16 %v2053
      %v2088 = vunpack.c.l.b16 %v2057
      %v2089 = vunpack.c.l.b16 %v2061
      %v2090 = vunpack.c.l.b16 %v2065
      %v2091 = vpack.c.b16 %v2084, %v2083
      %v2092 = vpack.c.b16 %v2086, %v2085
      %v2093 = vpack.c.b16 %v2088, %v2087
      %v2094 = vpack.c.b16 %v2090, %v2089
      %v2115 = vunpack.c.l.b16 %v2067
      %v2116 = vunpack.c.l.b16 %v2068
      %v2117 = vunpack.c.l.b16 %v2069
      %v2118 = vunpack.c.l.b16 %v2070
      %v2119 = vunpack.c.l.b16 %v2071
      %v2120 = vunpack.c.l.b16 %v2072
      %v2121 = vunpack.c.l.b16 %v2073
      %v2122 = vunpack.c.l.b16 %v2074
      %v2123 = vunpack.c.l.b16 %v2075
      %v2124 = vunpack.c.l.b16 %v2076
      %v2125 = vunpack.c.l.b16 %v2077
      %v2126 = vunpack.c.l.b16 %v2078
      %v2127 = vunpack.c.l.b16 %v2079
      %v2128 = vunpack.c.l.b16 %v2080
      %v2129 = vunpack.c.l.b16 %v2081
      %v2130 = vunpack.c.l.b16 %v2082
      %v2131 = vpack.c.b16 %v2116, %v2115
      %v2132 = vpack.c.b16 %v2118, %v2117
      %v2133 = vpack.c.b16 %v2120, %v2119
      %v2134 = vpack.c.b16 %v2122, %v2121
      %v2135 = vpack.c.b16 %v2124, %v2123
      %v2136 = vpack.c.b16 %v2126, %v2125
      %v2137 = vpack.c.b16 %v2128, %v2127
      %v2138 = vpack.c.b16 %v2130, %v2129
      %2147 = vmatprep.subr.bf16.mxu0 0
      %2148 = vmatpush1.bf16.msra.mxu0 %v2131
      %2149 = vmatprep.subr.bf16.mxu0 0
      %2150 = vmatpush1.bf16.msra.mxu0 %v2132
      %2151 = vmatprep.subr.bf16.mxu0 0
      %2152 = vmatpush1.bf16.msra.mxu0 %v2133
      %2153 = vmatprep.subr.bf16.mxu0 0
      %2154 = vmatpush1.bf16.msra.mxu0 %v2134
      %2155 = vmatprep.subr.bf16.mxu0 0
      %2156 = vmatpush1.bf16.msra.mxu0 %v2135
      %2157 = vmatprep.subr.bf16.mxu0 0
      %2158 = vmatpush1.bf16.msra.mxu0 %v2136
      %2159 = vmatprep.subr.bf16.mxu0 0
      %2160 = vmatpush1.bf16.msra.mxu0 %v2137
      %2161 = vmatprep.subr.bf16.mxu0 0
      %2162 = vmatpush1.bf16.msra.mxu0 %v2138
      %2163 = vmatprep.subr.bf16.mxu0 0
      %2164 = vmatpush1.bf16.msra.mxu0 0
      %2165 = vmatprep.subr.bf16.mxu0 0
      %2166 = vmatpush1.bf16.msra.mxu0 0
      %2167 = vmatprep.subr.bf16.mxu0 0
      %2168 = vmatpush1.bf16.msra.mxu0 0
      %2169 = vmatprep.subr.bf16.mxu0 0
      %2170 = vmatpush1.bf16.msra.mxu0 0
      %2171 = vmatprep.subr.bf16.mxu0 0
      %2172 = vmatpush1.bf16.msra.mxu0 0
      %2173 = vmatprep.subr.bf16.mxu0 0
      %2174 = vmatpush1.bf16.msra.mxu0 0
      %2175 = vmatprep.subr.bf16.mxu0 0
      %2176 = vmatpush1.bf16.msra.mxu0 0
      %2177 = vmatprep.subr.bf16.mxu0 0
      %2178 = vmatpush1.bf16.msra.mxu0 0
      %2179 = vmatprep.mubr.bf16.mxu0 0
      %2180 = vmatmul.mubr.bf16.gmra.mrb[0].mxu0 %v2091
      %v2181 = vpop.f32.mrb[0].mxu0
      %v2182 = vadd.f32 0.0, %v2181
      %v2183 = vpop.f32.mrb[0].mxu0
      %v2184 = vpop.f32.mrb[0].mxu0
      %v2185 = vadd.f32 0.0, %v2184
      %v2186 = vpop.f32.mrb[0].mxu0
      %2187 = vmatprep.mubr.bf16.mxu0 0
      %2188 = vmatmul.mubr.bf16.gmra.mrb[0].mxu0 %v2092
      %v2189 = vpop.f32.mrb[0].mxu0
      %v2190 = vadd.f32 0.0, %v2189
      %v2191 = vpop.f32.mrb[0].mxu0
      %v2192 = vpop.f32.mrb[0].mxu0
      %v2193 = vadd.f32 0.0, %v2192
      %v2194 = vpop.f32.mrb[0].mxu0
      %2195 = vmatprep.mubr.bf16.mxu0 0
      %2196 = vmatmul.mubr.bf16.gmra.mrb[0].mxu0 %v2093
      %v2197 = vpop.f32.mrb[0].mxu0
      %v2198 = vadd.f32 0.0, %v2197
      %v2199 = vpop.f32.mrb[0].mxu0
      %v2200 = vpop.f32.mrb[0].mxu0
      %v2201 = vadd.f32 0.0, %v2200
      %v2202 = vpop.f32.mrb[0].mxu0
      %2203 = vmatprep.mubr.bf16.mxu0 0
      %2204 = vmatmul.mubr.bf16.gmra.mrb[0].mxu0 %v2094
      %v2205 = vpop.f32.mrb[0].mxu0
      %v2206 = vadd.f32 0.0, %v2205
      %v2207 = vpop.f32.mrb[0].mxu0
      %v2208 = vpop.f32.mrb[0].mxu0
      %v2209 = vadd.f32 0.0, %v2208
      %v2210 = vpop.f32.mrb[0].mxu0
      %2211 = vdwg.mxu0
      %v2212 = vadd.f32 %v2002, %v2182
      %v2213 = vadd.f32 %v2003, %v2185
      %v2214 = vadd.f32 %v2004, %v2190
      %v2215 = vadd.f32 %v2005, %v2193
      %v2216 = vadd.f32 %v2006, %v2198
      %v2217 = vadd.f32 %v2007, %v2201
      %v2218 = vadd.f32 %v2008, %v2206
      %v2219 = vadd.f32 %v2009, %v2209
      %v2220 = vld [vmem:[%s2] sm:$0x1]
      %v2222 = vlaneseq
      %v2223 = vshrl.u32 %v2222, 7
      %v2224 = vsub.s32 0, %v2223
      %v2225 = vrot.slane %v2220, %v2224
      %v2227 = vadd.f32 %v2212, %v2225
      %v2228 = vadd.f32 %v2213, %v2225
      %v2229 = vadd.f32 %v2214, %v2225
      %v2230 = vadd.f32 %v2215, %v2225
      %v2231 = vadd.f32 %v2216, %v2225
      %v2232 = vadd.f32 %v2217, %v2225
      %v2233 = vadd.f32 %v2218, %v2225
      %v2234 = vadd.f32 %v2219, %v2225
      %v2235 = vadd.f32 %v2227, %v2228
      %v2236 = vadd.f32 %v2235, %v2229
      %v2237 = vadd.f32 %v2236, %v2230
      %v2238 = vadd.f32 %v2237, %v2231
      %v2239 = vadd.f32 %v2238, %v2232
      %v2240 = vadd.f32 %v2239, %v2233
      %v2241 = vadd.f32 %v2240, %v2234
      %v2242 = vrot.slane %v2241, 4
      %v2243 = vadd.f32 %v2241, %v2242
      %v2244 = vrot.slane %v2243, 2
      %v2245 = vadd.f32 %v2243, %v2244
      %v2246 = vrot.slane %v2245, 1
      %v2247 = vadd.f32 %v2245, %v2246
      %2248 = vst [vmem:[%s239] sm:$0x1] %v2247
      %v2249 = vmul.f32 %v2227, %v2227
      %v2250 = vmul.f32 %v2228, %v2228
      %v2251 = vmul.f32 %v2229, %v2229
      %v2252 = vmul.f32 %v2230, %v2230
      %v2253 = vmul.f32 %v2231, %v2231
      %v2254 = vmul.f32 %v2232, %v2232
      %v2255 = vmul.f32 %v2233, %v2233
      %v2256 = vmul.f32 %v2234, %v2234
      %v2257 = vadd.f32 %v2249, %v2250
      %v2258 = vadd.f32 %v2257, %v2251
      %v2259 = vadd.f32 %v2258, %v2252
      %v2260 = vadd.f32 %v2259, %v2253
      %v2261 = vadd.f32 %v2260, %v2254
      %v2262 = vadd.f32 %v2261, %v2255
      %v2263 = vadd.f32 %v2262, %v2256
      %v2264 = vrot.slane %v2263, 4
      %v2265 = vadd.f32 %v2263, %v2264
      %v2266 = vrot.slane %v2265, 2
      %v2267 = vadd.f32 %v2265, %v2266
      %v2268 = vrot.slane %v2267, 1
      %v2269 = vadd.f32 %v2267, %v2268
      %2270 = vst [vmem:[%s239 + $0x1] sm:$0x1] %v2269
      %v2271 = vpack.c.bf16 %v2227, %v2227
      %v2272 = vpack.c.bf16 %v2228, %v2228
      %v2273 = vpack.c.bf16 %v2229, %v2229
      %v2274 = vpack.c.bf16 %v2230, %v2230
      %v2275 = vpack.c.bf16 %v2231, %v2231
      %v2276 = vpack.c.bf16 %v2232, %v2232
      %v2277 = vpack.c.bf16 %v2233, %v2233
      %v2278 = vpack.c.bf16 %v2234, %v2234
      %2279 = vst [vmem:[%s231] sm:$0xf] %v2271
      %2280 = vst [vmem:[%s231 + $0x4] sm:$0xf] %v2272
      %2281 = vst [vmem:[%s231 + $0x8] sm:$0xf] %v2273
      %2282 = vst [vmem:[%s231 + $0xc] sm:$0xf] %v2274
      %2283 = vst [vmem:[%s231 + $0x10] sm:$0xf] %v2275
      %2284 = vst [vmem:[%s231 + $0x14] sm:$0xf] %v2276
      %2285 = vst [vmem:[%s231 + $0x18] sm:$0xf] %v2277
      %2286 = vst [vmem:[%s231 + $0x1c] sm:$0xf] %v2278
      %s2287 = smul.u32 8, %s21
      %p2288 = scmp.lt.s32.totalorder %s20, 1
      %s2289 = scalar_select %p2288, %s20, 1
      %p2290 = scmp.lt.s32.totalorder %s2287, 7
      %s2291 = scalar_select %p2290, %s2287, 7
      %s2292 = smul.addr %s2289, 8
      %s2293 = sadd.s32 %s2291, %s2292
      %s2294 = smul.addr %s2293, 4
      %s2295 = scalar_lea.vmem %s3, %s2294
      %p2296 = scmp.lt.s32.totalorder %s20, 1
      %s2297 = scalar_select %p2296, %s20, 1
      %p2298 = scmp.lt.s32.totalorder %s21, 0
      %s2299 = scalar_select %p2298, %s21, 0
      %s2300 = sadd.s32 %s2299, %s2297
      %s2301 = smul.addr %s2300, 2
      %s2302 = scalar_lea.vmem %s4, %s2301
      // Predicated region
      $region33: #{resblock_forward.7} parent=31 // pred_check
        %p2303 = pneg %p116
      $region34: #{resblock_forward.7} parent=31 // pred_check_branch
        %2305 = sbr.rel (%p2303) target = $region36
      $region35: #{resblock_forward.7} parent=31 // pred_region
        %s2306 = smul.u32 8, %s21
      $region36: #{resblock_forward.7} parent=31 // pred_fallthru
        _
      // Predicated region
      $region37: #{resblock_forward.7} parent=31 // pred_check
        %p2307 = pneg %p144
      $region38: #{resblock_forward.7} parent=31 // pred_check_branch
        %2309 = sbr.rel (%p2307) target = $region40
      $region39: #{resblock_forward.7} parent=31 // pred_region
        _
      $region40: #{resblock_forward.7} parent=31 // pred_fallthru
        _
    $region32: #{resblock_forward.7} parent=5 // pred_fallthru
      _
    %p2310 = scmp.le.s32.totalorder 2, %s11
    // Predicated region
    $region41: #{resblock_forward.7} parent=5 // pred_check
      %p2311 = pneg %p2310
    $region42: #{resblock_forward.7} parent=5 // pred_check_branch
      %2313 = sbr.rel (%p2311) target = $region44
    $region43: #{resblock_forward.7} parent=5 // pred_region
      %s2314 = ssub.s32 %s11, 2
      // Predicated region
      $region45: #{resblock_forward.7} parent=43 // pred_check
        %p2315 = pneg %p122
      $region46: #{resblock_forward.7} parent=43 // pred_check_branch
        %2317 = sbr.rel (%p2315) target = $region48
      $region47: #{resblock_forward.7} parent=43 // pred_region
        %s2318 = smul.u32 8, %s23
        %p2319 = scmp.lt.s32.totalorder %s22, 1
        %s2320 = scalar_select %p2319, %s22, 1
        %p2321 = scmp.lt.s32.totalorder %s2318, 7
        %s2322 = scalar_select %p2321, %s2318, 7
        %s2323 = smul.addr %s2320, 8
        %s2324 = sadd.s32 %s2322, %s2323
        %s2325 = smul.addr %s2324, 4
        %s2326 = scalar_lea.vmem %s3, %s2325
      $region48: #{resblock_forward.7} parent=43 // pred_fallthru
        _
      // Predicated region
      $region49: #{resblock_forward.7} parent=43 // pred_check
        %p2327 = pneg %p150
      $region50: #{resblock_forward.7} parent=43 // pred_check_branch
        %2329 = sbr.rel (%p2327) target = $region52
      $region51: #{resblock_forward.7} parent=43 // pred_region
        %p2330 = scmp.lt.s32.totalorder %s22, 1
        %s2331 = scalar_select %p2330, %s22, 1
        %p2332 = scmp.lt.s32.totalorder %s23, 0
        %s2333 = scalar_select %p2332, %s23, 0
        %s2334 = sadd.s32 %s2333, %s2331
        %s2335 = smul.addr %s2334, 2
        %s2336 = scalar_lea.vmem %s4, %s2335
      $region52: #{resblock_forward.7} parent=43 // pred_fallthru
        _
    $region44: #{resblock_forward.7} parent=5 // pred_fallthru
      _
  $region6: #{resblock_forward.7} parent=0 // loop_footer
    %s15 = sadd.s32 1, %s11
  $region7: #{resblock_forward.7} parent=0 // loop_footer_branch
    %10 = sbr.rel target = $region3
  $region8: #{resblock_forward.7} parent=0 // loop_exit
    _

</llo_original>
